<compile_context>
chip_gen: v5e
topology: v5e:2x2
jax: 0.10.0
libtpu: 0.0.40
codegen_flags: <defaults>
</compile_context>

<pallas_src>
import functools
import math

import jax
import jax.numpy as jnp
from jax import lax
from jax.experimental import pallas as pl
from jax.experimental.pallas import tpu as pltpu


def _full_spec(shape):
    """Whole-array VMEM block for a grid=(1,) pallas_call."""
    return pl.BlockSpec(shape, lambda *_: (0,) * len(shape))


# ----------------------------------------------------------------------------
# Single fused kernel: TransformerBlock + 2-layer BiLSTM + flatten + fc1 + fc2
# ----------------------------------------------------------------------------
# LSTM gate packing (both directions in one 8H-wide matmul), column layout:
#   [ i_fwd | i_bwd | f_fwd | f_bwd | g_fwd | g_bwd | o_fwd | o_bwd ]
# The combined hidden/cell state is (B, 2H) = [ h_fwd | h_bwd ].

def _fused_kernel(x_ref, wqkv_ref, bqkv_ref, wo_ref, bo_ref,
                  ln1w_ref, ln1b_ref, ln2w_ref, ln2b_ref,
                  w1_ref, b1_ref, w2_ref, b2_ref,
                  wih1_ref, whh1_ref, bl1_ref,
                  wih2_ref, whh2_ref, bl2_ref,
                  fc1w_ref, fc1b_ref, fc2w_ref, fc2b_ref,
                  o_ref, *, B, S, E, H, num_heads, eps):
    Dh = E // num_heads
    scale = 1.0 / math.sqrt(Dh)

    # ------------------------------------------------------------------
    # TransformerBlock  (rows are batch-major: row = b*S + t)
    # ------------------------------------------------------------------
    x = x_ref[...]                                                   # (B*S, E)

    # nn.MultiheadAttention (self-attention), all heads in one QKV matmul.
    qkv = jnp.dot(x, wqkv_ref[...], preferred_element_type=jnp.float32)
    qkv = qkv + bqkv_ref[...]                                        # (B*S, 3E)
    q = qkv[:, 0:E]
    k = qkv[:, E:2 * E]
    v = qkv[:, 2 * E:3 * E]

    batch_rows = []
    for b in range(B):                       # static unroll: B*num_heads tiny heads
        r0 = b * S
        head_outs = []
        for h in range(num_heads):
            c0 = h * Dh
            qh = q[r0:r0 + S, c0:c0 + Dh]                            # (S, Dh)
            kh = k[r0:r0 + S, c0:c0 + Dh]
            vh = v[r0:r0 + S, c0:c0 + Dh]
            s = lax.dot_general(qh, kh, (((1,), (1,)), ((), ())),
                                preferred_element_type=jnp.float32) * scale
            s = s - jnp.max(s, axis=-1, keepdims=True)
            p = jnp.exp(s)
            p = p * pl.reciprocal(jnp.sum(p, axis=-1, keepdims=True), approx=True)
            head_outs.append(jnp.dot(p, vh, preferred_element_type=jnp.float32))
        batch_rows.append(jnp.concatenate(head_outs, axis=-1))       # (S, E)
    attn = jnp.concatenate(batch_rows, axis=0)                       # (B*S, E)

    attn = jnp.dot(attn, wo_ref[...], preferred_element_type=jnp.float32)
    attn = attn + bo_ref[...]

    def _layernorm(y, w, bb):
        mu = jnp.mean(y, axis=-1, keepdims=True)
        yc = y - mu
        var = jnp.mean(yc * yc, axis=-1, keepdims=True)
        return yc * lax.rsqrt(var + eps) * w + bb

    # dropout1 -> identity (inference)
    h1 = _layernorm(x + attn, ln1w_ref[...], ln1b_ref[...])

    ffn = jnp.dot(h1, w1_ref[...], preferred_element_type=jnp.float32) + b1_ref[...]
    ffn = jnp.maximum(ffn, 0.0)
    ffn = jnp.dot(ffn, w2_ref[...], preferred_element_type=jnp.float32) + b2_ref[...]

    # dropout2 -> identity (inference)
    h2 = _layernorm(h1 + ffn, ln2w_ref[...], ln2b_ref[...])          # (B*S, E)

    # ------------------------------------------------------------------
    # Batch-major -> time-major row reshuffle (static, B*S tiny rows),
    # replaces the previous wrapper-side transpose + extra kernel launch.
    # ------------------------------------------------------------------
    x_tm = jnp.concatenate(
        [h2[b * S + t: b * S + t + 1, :] for t in range(S) for b in range(B)],
        axis=0)                                                      # (S*B, E)

    # ------------------------------------------------------------------
    # 2-layer bidirectional LSTM (both directions fused per matmul)
    # ------------------------------------------------------------------
    H2 = 2 * H          # combined (fwd|bwd) hidden width
    G = 8 * H           # packed gate width

    col_g = lax.broadcasted_iota(jnp.int32, (B, G), 1)
    is_fwd_gate = (col_g % H2) < H          # fwd-direction gate columns
    col_h = lax.broadcasted_iota(jnp.int32, (B, H2), 1)
    is_fwd_out = col_h < H                  # fwd half of the combined state

    def run_layer(x_time_major, wih, whh, bias):
        # x_time_major: (S*B, Din), row = t*B + b.
        # Hoist all input-to-hidden work + bias out of the recurrent loop.
        zx = jnp.dot(x_time_major, wih,
                     preferred_element_type=jnp.float32) + bias      # (S*B, 8H)
        h = jnp.zeros((B, H2), jnp.float32)
        c = jnp.zeros((B, H2), jnp.float32)
        h_steps = []
        for t in range(S):                  # static unroll of the recurrence
            zf = zx[t * B:(t + 1) * B, :]               # fwd reads time t
            zb = zx[(S - 1 - t) * B:(S - t) * B, :]     # bwd reads time S-1-t
            z = jnp.where(is_fwd_gate, zf, zb) + jnp.dot(
                h, whh, preferred_element_type=jnp.float32)          # (B, 8H)
            i_g = jax.nn.sigmoid(z[:, 0:H2])
            f_g = jax.nn.sigmoid(z[:, H2:2 * H2])
            g_g = jnp.tanh(z[:, 2 * H2:3 * H2])
            o_g = jax.nn.sigmoid(z[:, 3 * H2:4 * H2])
            c = f_g * c + i_g * g_g
            h = o_g * jnp.tanh(c)
            h_steps.append(h)
        # out[t] = [h_fwd(t) | h_bwd(t)]; the bwd hidden for time t was
        # produced at loop step S-1-t.
        return [jnp.where(is_fwd_out, h_steps[t], h_steps[S - 1 - t])
                for t in range(S)]

    out1 = run_layer(x_tm, wih1_ref[...], whh1_ref[...], bl1_ref[...])
    x2_tm = jnp.concatenate(out1, axis=0)                            # (S*B, 2H)
    out2 = run_layer(x2_tm, wih2_ref[...], whh2_ref[...], bl2_ref[...])

    # torch.flatten(start_dim=1) on batch-major (B, S, 2H):
    # flat[b, t*2H + d] = out2[t][b, d]
    flat = jnp.concatenate(out2, axis=-1)                            # (B, S*2H)

    # fc1 -> dropout(0.4, identity) -> fc2
    y = jnp.dot(flat, fc1w_ref[...], preferred_element_type=jnp.float32) + fc1b_ref[...]
    y = jnp.dot(y, fc2w_ref[...], preferred_element_type=jnp.float32) + fc2b_ref[...]
    o_ref[...] = y.astype(o_ref.dtype)


def fused_forward(pp, x2, B, S, E, num_heads):
    ff = pp["w1"].shape[1]
    l1, l2 = pp["lstm"]                      # module fixes n_layers = 2
    H = l1["whh"].shape[0] // 2
    out_dim = pp["fc2_wt"].shape[1]
    kernel = functools.partial(_fused_kernel, B=B, S=S, E=E, H=H,
                               num_heads=num_heads, eps=1e-5)
    return pl.pallas_call(
        kernel,
        out_shape=jax.ShapeDtypeStruct((B, out_dim), jnp.float32),
        grid=(1,),
        in_specs=[
            _full_spec((B * S, E)),
            _full_spec((E, 3 * E)), _full_spec((1, 3 * E)),
            _full_spec((E, E)), _full_spec((1, E)),
            _full_spec((1, E)), _full_spec((1, E)),
            _full_spec((1, E)), _full_spec((1, E)),
            _full_spec((E, ff)), _full_spec((1, ff)),
            _full_spec((ff, E)), _full_spec((1, E)),
            _full_spec((E, 8 * H)), _full_spec((2 * H, 8 * H)), _full_spec((1, 8 * H)),
            _full_spec((2 * H, 8 * H)), _full_spec((2 * H, 8 * H)), _full_spec((1, 8 * H)),
            _full_spec((2 * H * S, 32)), _full_spec((1, 32)),
            _full_spec((32, out_dim)), _full_spec((1, out_dim)),
        ],
        out_specs=_full_spec((B, out_dim)),
        compiler_params=pltpu.CompilerParams(dimension_semantics=("arbitrary",)),
        cost_estimate=pl.CostEstimate(flops=750_000, transcendentals=5_000,
                                      bytes_accessed=300_000),
    )(x2,
      pp["wqkv"], pp["bqkv"], pp["wo"], pp["bo"],
      pp["ln1_w"], pp["ln1_b"], pp["ln2_w"], pp["ln2_b"],
      pp["w1"], pp["b1"], pp["w2"], pp["b2"],
      l1["wih"], l1["whh"], l1["b"],
      l2["wih"], l2["whh"], l2["b"],
      pp["fc1_wt"], pp["fc1_b"], pp["fc2_wt"], pp["fc2_b"])


# ----------------------------------------------------------------------------
# Parameters: PyTorch-layout init + one-time packing into kernel layout
# ----------------------------------------------------------------------------

def _normal(key, shape, scale=0.1):
    return scale * jax.random.normal(key, shape, dtype=jnp.float32)


def init_params(key, input_dim, hidden_dim, output_dim, num_heads, ff_dim,
                n_lstm_layers, n_hours):
    E, H = input_dim, hidden_dim
    keys = iter(jax.random.split(key, 64))
    p = {}
    # Transformer block (nn.MultiheadAttention + FFN + 2 LayerNorms)
    p["in_proj_w"] = _normal(next(keys), (3 * E, E))
    p["in_proj_b"] = _normal(next(keys), (3 * E,), 0.01)
    p["out_proj_w"] = _normal(next(keys), (E, E))
    p["out_proj_b"] = _normal(next(keys), (E,), 0.01)
    p["ffn1_w"] = _normal(next(keys), (ff_dim, E))
    p["ffn1_b"] = _normal(next(keys), (ff_dim,), 0.01)
    p["ffn2_w"] = _normal(next(keys), (E, ff_dim))
    p["ffn2_b"] = _normal(next(keys), (E,), 0.01)
    p["ln1_w"] = jnp.ones((E,), jnp.float32)
    p["ln1_b"] = jnp.zeros((E,), jnp.float32)
    p["ln2_w"] = jnp.ones((E,), jnp.float32)
    p["ln2_b"] = jnp.zeros((E,), jnp.float32)
    # Bidirectional LSTM (n_lstm_layers layers, 2 directions each), PyTorch layout
    p["lstm"] = []
    for layer in range(n_lstm_layers):
        din = E if layer == 0 else 2 * H
        layer_p = []
        for _direction in range(2):
            layer_p.append({
                "wih": _normal(next(keys), (4 * H, din)),   # gate rows: i, f, g, o
                "whh": _normal(next(keys), (4 * H, H)),
                "bih": _normal(next(keys), (4 * H,), 0.01),
                "bhh": _normal(next(keys), (4 * H,), 0.01),
            })
        p["lstm"].append(layer_p)
    # Heads
    p["fc1_w"] = _normal(next(keys), (32, 2 * H * n_hours))
    p["fc1_b"] = _normal(next(keys), (32,), 0.01)
    p["fc2_w"] = _normal(next(keys), (output_dim, 32))
    p["fc2_b"] = _normal(next(keys), (output_dim,), 0.01)
    return p


def prepare_params(p):
    """One-time repack of PyTorch-layout weights into kernel layout."""

    def pack_ih(w_f, w_b, H):
        # (4H, Din) each -> (Din, 8H) with columns [i_f,i_b,f_f,f_b,g_f,g_b,o_f,o_b]
        cols = []
        for g in range(4):
            cols.append(w_f[g * H:(g + 1) * H, :].T)
            cols.append(w_b[g * H:(g + 1) * H, :].T)
        return jnp.concatenate(cols, axis=1)

    def pack_hh(w_f, w_b, H):
        # (4H, H) each -> (2H, 8H); zero cross-direction blocks.
        z = jnp.zeros((H, H), jnp.float32)
        blocks = []
        for g in range(4):
            top = jnp.concatenate([w_f[g * H:(g + 1) * H, :].T, z], axis=1)
            bot = jnp.concatenate([z, w_b[g * H:(g + 1) * H, :].T], axis=1)
            blocks.append(jnp.concatenate([top, bot], axis=0))
        return jnp.concatenate(blocks, axis=1)

    def pack_bias(fwd, bwd, H):
        bf = fwd["bih"] + fwd["bhh"]
        bb = bwd["bih"] + bwd["bhh"]
        parts = []
        for g in range(4):
            parts.append(bf[g * H:(g + 1) * H])
            parts.append(bb[g * H:(g + 1) * H])
        return jnp.concatenate(parts).reshape(1, -1)

    pp = {
        "wqkv": p["in_proj_w"].T, "bqkv": p["in_proj_b"].reshape(1, -1),
        "wo": p["out_proj_w"].T, "bo": p["out_proj_b"].reshape(1, -1),
        "w1": p["ffn1_w"].T, "b1": p["ffn1_b"].reshape(1, -1),
        "w2": p["ffn2_w"].T, "b2": p["ffn2_b"].reshape(1, -1),
        "ln1_w": p["ln1_w"].reshape(1, -1), "ln1_b": p["ln1_b"].reshape(1, -1),
        "ln2_w": p["ln2_w"].reshape(1, -1), "ln2_b": p["ln2_b"].reshape(1, -1),
        "fc1_wt": p["fc1_w"].T, "fc1_b": p["fc1_b"].reshape(1, -1),
        "fc2_wt": p["fc2_w"].T, "fc2_b": p["fc2_b"].reshape(1, -1),
        "lstm": [],
    }
    for fwd, bwd in p["lstm"]:
        H = fwd["whh"].shape[1]
        pp["lstm"].append({
            "wih": pack_ih(fwd["wih"], bwd["wih"], H),
            "whh": pack_hh(fwd["whh"], bwd["whh"], H),
            "b": pack_bias(fwd, bwd, H),
        })
    return pp


# ----------------------------------------------------------------------------
# Jitted forward (one fused pallas_call, no intermediate HBM round-trip)
# ----------------------------------------------------------------------------

@functools.partial(jax.jit, static_argnames=("num_heads",))
def transformer_bilstm_forward(pp, x, *, num_heads):
    B, S, E = x.shape
    return fused_forward(pp, x.reshape(B * S, E), B, S, E, num_heads)


# ----------------------------------------------------------------------------
# Main
# ----------------------------------------------------------------------------

if __name__ == "__main__":
    n_hours = 3          # sequence length fixed by the module (fc1 input size)
    n_lstm_layers = 2
    input_dim = 16
    hidden_dim = 32
    output_dim = 1
    num_heads = 4
    ff_dim = 32
    batch = 2

    key = jax.random.PRNGKey(0)
    kp, kx = jax.random.split(key)
    params = init_params(kp, input_dim, hidden_dim, output_dim, num_heads,
                         ff_dim, n_lstm_layers, n_hours)
    prepared = prepare_params(params)        # one-time weight transposes/packing
    x = jax.random.normal(kx, (batch, n_hours, input_dim), dtype=jnp.float32)

    out = transformer_bilstm_forward(prepared, x, num_heads=num_heads)
    out = jax.block_until_ready(out)
    assert out.shape == (batch, output_dim), out.shape
    assert bool(jnp.all(jnp.isfinite(out)))
    print("KERNEL_OK")
</pallas_src>

<mosaic_0001>
module attributes {stable_mosaic.version = 11 : i64} {
  func.func @_fused_kernel(%arg0: i32, %arg1: memref<6x16xf32, #tpu.memory_space<vmem>>, %arg2: memref<16x48xf32, #tpu.memory_space<vmem>>, %arg3: memref<1x48xf32, #tpu.memory_space<vmem>>, %arg4: memref<16x16xf32, #tpu.memory_space<vmem>>, %arg5: memref<1x16xf32, #tpu.memory_space<vmem>>, %arg6: memref<1x16xf32, #tpu.memory_space<vmem>>, %arg7: memref<1x16xf32, #tpu.memory_space<vmem>>, %arg8: memref<1x16xf32, #tpu.memory_space<vmem>>, %arg9: memref<1x16xf32, #tpu.memory_space<vmem>>, %arg10: memref<16x32xf32, #tpu.memory_space<vmem>>, %arg11: memref<1x32xf32, #tpu.memory_space<vmem>>, %arg12: memref<32x16xf32, #tpu.memory_space<vmem>>, %arg13: memref<1x16xf32, #tpu.memory_space<vmem>>, %arg14: memref<16x256xf32, #tpu.memory_space<vmem>>, %arg15: memref<64x256xf32, #tpu.memory_space<vmem>>, %arg16: memref<1x256xf32, #tpu.memory_space<vmem>>, %arg17: memref<64x256xf32, #tpu.memory_space<vmem>>, %arg18: memref<64x256xf32, #tpu.memory_space<vmem>>, %arg19: memref<1x256xf32, #tpu.memory_space<vmem>>, %arg20: memref<192x32xf32, #tpu.memory_space<vmem>>, %arg21: memref<1x32xf32, #tpu.memory_space<vmem>>, %arg22: memref<32x1xf32, #tpu.memory_space<vmem>>, %arg23: memref<1x1xf32, #tpu.memory_space<vmem>>, %arg24: memref<2x1xf32, #tpu.memory_space<vmem>>) attributes {dimension_semantics = [#tpu.dimension_semantics<arbitrary>], iteration_bounds = array<i64: 1>, scalar_prefetch = 0 : i64, scratch_operands = 0 : i64, tpu.core_type = #tpu.core_type<tc>, window_params = [{pipeline_mode = #tpu.pipeline_mode<synchronous>, transform_indices = @transform_0, window_bounds = array<i64: 6, 16>}, {pipeline_mode = #tpu.pipeline_mode<synchronous>, transform_indices = @transform_1, window_bounds = array<i64: 16, 48>}, {pipeline_mode = #tpu.pipeline_mode<synchronous>, transform_indices = @transform_2, window_bounds = array<i64: 1, 48>}, {pipeline_mode = #tpu.pipeline_mode<synchronous>, transform_indices = @transform_3, window_bounds = array<i64: 16, 16>}, {pipeline_mode = #tpu.pipeline_mode<synchronous>, transform_indices = @transform_4, window_bounds = array<i64: 1, 16>}, {pipeline_mode = #tpu.pipeline_mode<synchronous>, transform_indices = @transform_5, window_bounds = array<i64: 1, 16>}, {pipeline_mode = #tpu.pipeline_mode<synchronous>, transform_indices = @transform_6, window_bounds = array<i64: 1, 16>}, {pipeline_mode = #tpu.pipeline_mode<synchronous>, transform_indices = @transform_7, window_bounds = array<i64: 1, 16>}, {pipeline_mode = #tpu.pipeline_mode<synchronous>, transform_indices = @transform_8, window_bounds = array<i64: 1, 16>}, {pipeline_mode = #tpu.pipeline_mode<synchronous>, transform_indices = @transform_9, window_bounds = array<i64: 16, 32>}, {pipeline_mode = #tpu.pipeline_mode<synchronous>, transform_indices = @transform_10, window_bounds = array<i64: 1, 32>}, {pipeline_mode = #tpu.pipeline_mode<synchronous>, transform_indices = @transform_11, window_bounds = array<i64: 32, 16>}, {pipeline_mode = #tpu.pipeline_mode<synchronous>, transform_indices = @transform_12, window_bounds = array<i64: 1, 16>}, {pipeline_mode = #tpu.pipeline_mode<synchronous>, transform_indices = @transform_13, window_bounds = array<i64: 16, 256>}, {pipeline_mode = #tpu.pipeline_mode<synchronous>, transform_indices = @transform_14, window_bounds = array<i64: 64, 256>}, {pipeline_mode = #tpu.pipeline_mode<synchronous>, transform_indices = @transform_15, window_bounds = array<i64: 1, 256>}, {pipeline_mode = #tpu.pipeline_mode<synchronous>, transform_indices = @transform_16, window_bounds = array<i64: 64, 256>}, {pipeline_mode = #tpu.pipeline_mode<synchronous>, transform_indices = @transform_17, window_bounds = array<i64: 64, 256>}, {pipeline_mode = #tpu.pipeline_mode<synchronous>, transform_indices = @transform_18, window_bounds = array<i64: 1, 256>}, {pipeline_mode = #tpu.pipeline_mode<synchronous>, transform_indices = @transform_19, window_bounds = array<i64: 192, 32>}, {pipeline_mode = #tpu.pipeline_mode<synchronous>, transform_indices = @transform_20, window_bounds = array<i64: 1, 32>}, {pipeline_mode = #tpu.pipeline_mode<synchronous>, transform_indices = @transform_21, window_bounds = array<i64: 32, 1>}, {pipeline_mode = #tpu.pipeline_mode<synchronous>, transform_indices = @transform_22, window_bounds = array<i64: 1, 1>}, {pipeline_mode = #tpu.pipeline_mode<synchronous>, transform_indices = @transform_23, window_bounds = array<i64: 2, 1>}]} {
    %c0 = arith.constant 0 : index
    %c0_0 = arith.constant 0 : index
    %0 = vector.load %arg1[%c0, %c0_0] : memref<6x16xf32, #tpu.memory_space<vmem>>, vector<6x16xf32>
    %c0_1 = arith.constant 0 : index
    %c0_2 = arith.constant 0 : index
    %1 = vector.load %arg2[%c0_1, %c0_2] : memref<16x48xf32, #tpu.memory_space<vmem>>, vector<16x48xf32>
    %cst = arith.constant dense<0.000000e+00> : vector<6x48xf32>
    %2 = tpu.matmul %0, %1, %cst {dimension_numbers = #tpu.dot_dimension_numbers<[1], [0], [0], [1], [0, 0, 1, 1], [], []>} : vector<6x16xf32>, vector<16x48xf32>, vector<6x48xf32> -> vector<6x48xf32>
    %c0_3 = arith.constant 0 : index
    %c0_4 = arith.constant 0 : index
    %3 = vector.load %arg3[%c0_3, %c0_4] : memref<1x48xf32, #tpu.memory_space<vmem>>, vector<1x48xf32>
    %4 = vector.broadcast %3 : vector<1x48xf32> to vector<6x48xf32>
    %5 = arith.addf %2, %4 : vector<6x48xf32>
    %6 = vector.extract_strided_slice %5 {offsets = [0, 0], sizes = [6, 16], strides = [1, 1]} : vector<6x48xf32> to vector<6x16xf32>
    %7 = vector.extract_strided_slice %5 {offsets = [0, 16], sizes = [6, 16], strides = [1, 1]} : vector<6x48xf32> to vector<6x16xf32>
    %8 = vector.extract_strided_slice %5 {offsets = [0, 32], sizes = [6, 16], strides = [1, 1]} : vector<6x48xf32> to vector<6x16xf32>
    %9 = vector.extract_strided_slice %6 {offsets = [0, 0], sizes = [3, 4], strides = [1, 1]} : vector<6x16xf32> to vector<3x4xf32>
    %10 = vector.extract_strided_slice %7 {offsets = [0, 0], sizes = [3, 4], strides = [1, 1]} : vector<6x16xf32> to vector<3x4xf32>
    %11 = vector.extract_strided_slice %8 {offsets = [0, 0], sizes = [3, 4], strides = [1, 1]} : vector<6x16xf32> to vector<3x4xf32>
    %cst_5 = arith.constant dense<0.000000e+00> : vector<3x3xf32>
    %12 = tpu.matmul %9, %10, %cst_5 {dimension_numbers = #tpu.dot_dimension_numbers<[1], [1], [0], [0], [0, 0, 1, 0], [], []>} : vector<3x4xf32>, vector<3x4xf32>, vector<3x3xf32> -> vector<3x3xf32>
    %cst_6 = arith.constant 5.000000e-01 : f32
    %13 = vector.broadcast %cst_6 : f32 to vector<3x3xf32>
    %14 = arith.mulf %12, %13 : vector<3x3xf32>
    %cst_7 = arith.constant dense<0xFF800000> : vector<3xf32>
    %15 = vector.multi_reduction <maximumf>, %14, %cst_7 [1] : vector<3x3xf32> to vector<3xf32>
    %16 = vector.shape_cast %15 : vector<3xf32> to vector<3x1xf32>
    %17 = vector.broadcast %16 : vector<3x1xf32> to vector<3x3xf32>
    %18 = arith.subf %14, %17 : vector<3x3xf32>
    %19 = math.exp %18 : vector<3x3xf32>
    %cst_8 = arith.constant dense<0.000000e+00> : vector<3xf32>
    %20 = vector.multi_reduction <add>, %19, %cst_8 [1] : vector<3x3xf32> to vector<3xf32>
    %21 = vector.shape_cast %20 : vector<3xf32> to vector<3x1xf32>
    %22 = tpu.reciprocal %21 {approx = true} : vector<3x1xf32> -> vector<3x1xf32>
    %23 = vector.broadcast %22 : vector<3x1xf32> to vector<3x3xf32>
    %24 = arith.mulf %19, %23 : vector<3x3xf32>
    %cst_9 = arith.constant dense<0.000000e+00> : vector<3x4xf32>
    %25 = tpu.matmul %24, %11, %cst_9 {dimension_numbers = #tpu.dot_dimension_numbers<[1], [0], [0], [1], [0, 0, 1, 1], [], []>} : vector<3x3xf32>, vector<3x4xf32>, vector<3x4xf32> -> vector<3x4xf32>
    %26 = vector.extract_strided_slice %6 {offsets = [0, 4], sizes = [3, 4], strides = [1, 1]} : vector<6x16xf32> to vector<3x4xf32>
    %27 = vector.extract_strided_slice %7 {offsets = [0, 4], sizes = [3, 4], strides = [1, 1]} : vector<6x16xf32> to vector<3x4xf32>
    %28 = vector.extract_strided_slice %8 {offsets = [0, 4], sizes = [3, 4], strides = [1, 1]} : vector<6x16xf32> to vector<3x4xf32>
    %cst_10 = arith.constant dense<0.000000e+00> : vector<3x3xf32>
    %29 = tpu.matmul %26, %27, %cst_10 {dimension_numbers = #tpu.dot_dimension_numbers<[1], [1], [0], [0], [0, 0, 1, 0], [], []>} : vector<3x4xf32>, vector<3x4xf32>, vector<3x3xf32> -> vector<3x3xf32>
    %cst_11 = arith.constant 5.000000e-01 : f32
    %30 = vector.broadcast %cst_11 : f32 to vector<3x3xf32>
    %31 = arith.mulf %29, %30 : vector<3x3xf32>
    %cst_12 = arith.constant dense<0xFF800000> : vector<3xf32>
    %32 = vector.multi_reduction <maximumf>, %31, %cst_12 [1] : vector<3x3xf32> to vector<3xf32>
    %33 = vector.shape_cast %32 : vector<3xf32> to vector<3x1xf32>
    %34 = vector.broadcast %33 : vector<3x1xf32> to vector<3x3xf32>
    %35 = arith.subf %31, %34 : vector<3x3xf32>
    %36 = math.exp %35 : vector<3x3xf32>
    %cst_13 = arith.constant dense<0.000000e+00> : vector<3xf32>
    %37 = vector.multi_reduction <add>, %36, %cst_13 [1] : vector<3x3xf32> to vector<3xf32>
    %38 = vector.shape_cast %37 : vector<3xf32> to vector<3x1xf32>
    %39 = tpu.reciprocal %38 {approx = true} : vector<3x1xf32> -> vector<3x1xf32>
    %40 = vector.broadcast %39 : vector<3x1xf32> to vector<3x3xf32>
    %41 = arith.mulf %36, %40 : vector<3x3xf32>
    %cst_14 = arith.constant dense<0.000000e+00> : vector<3x4xf32>
    %42 = tpu.matmul %41, %28, %cst_14 {dimension_numbers = #tpu.dot_dimension_numbers<[1], [0], [0], [1], [0, 0, 1, 1], [], []>} : vector<3x3xf32>, vector<3x4xf32>, vector<3x4xf32> -> vector<3x4xf32>
    %43 = vector.extract_strided_slice %6 {offsets = [0, 8], sizes = [3, 4], strides = [1, 1]} : vector<6x16xf32> to vector<3x4xf32>
    %44 = vector.extract_strided_slice %7 {offsets = [0, 8], sizes = [3, 4], strides = [1, 1]} : vector<6x16xf32> to vector<3x4xf32>
    %45 = vector.extract_strided_slice %8 {offsets = [0, 8], sizes = [3, 4], strides = [1, 1]} : vector<6x16xf32> to vector<3x4xf32>
    %cst_15 = arith.constant dense<0.000000e+00> : vector<3x3xf32>
    %46 = tpu.matmul %43, %44, %cst_15 {dimension_numbers = #tpu.dot_dimension_numbers<[1], [1], [0], [0], [0, 0, 1, 0], [], []>} : vector<3x4xf32>, vector<3x4xf32>, vector<3x3xf32> -> vector<3x3xf32>
    %cst_16 = arith.constant 5.000000e-01 : f32
    %47 = vector.broadcast %cst_16 : f32 to vector<3x3xf32>
    %48 = arith.mulf %46, %47 : vector<3x3xf32>
    %cst_17 = arith.constant dense<0xFF800000> : vector<3xf32>
    %49 = vector.multi_reduction <maximumf>, %48, %cst_17 [1] : vector<3x3xf32> to vector<3xf32>
    %50 = vector.shape_cast %49 : vector<3xf32> to vector<3x1xf32>
    %51 = vector.broadcast %50 : vector<3x1xf32> to vector<3x3xf32>
    %52 = arith.subf %48, %51 : vector<3x3xf32>
    %53 = math.exp %52 : vector<3x3xf32>
    %cst_18 = arith.constant dense<0.000000e+00> : vector<3xf32>
    %54 = vector.multi_reduction <add>, %53, %cst_18 [1] : vector<3x3xf32> to vector<3xf32>
    %55 = vector.shape_cast %54 : vector<3xf32> to vector<3x1xf32>
    %56 = tpu.reciprocal %55 {approx = true} : vector<3x1xf32> -> vector<3x1xf32>
    %57 = vector.broadcast %56 : vector<3x1xf32> to vector<3x3xf32>
    %58 = arith.mulf %53, %57 : vector<3x3xf32>
    %cst_19 = arith.constant dense<0.000000e+00> : vector<3x4xf32>
    %59 = tpu.matmul %58, %45, %cst_19 {dimension_numbers = #tpu.dot_dimension_numbers<[1], [0], [0], [1], [0, 0, 1, 1], [], []>} : vector<3x3xf32>, vector<3x4xf32>, vector<3x4xf32> -> vector<3x4xf32>
    %60 = vector.extract_strided_slice %6 {offsets = [0, 12], sizes = [3, 4], strides = [1, 1]} : vector<6x16xf32> to vector<3x4xf32>
    %61 = vector.extract_strided_slice %7 {offsets = [0, 12], sizes = [3, 4], strides = [1, 1]} : vector<6x16xf32> to vector<3x4xf32>
    %62 = vector.extract_strided_slice %8 {offsets = [0, 12], sizes = [3, 4], strides = [1, 1]} : vector<6x16xf32> to vector<3x4xf32>
    %cst_20 = arith.constant dense<0.000000e+00> : vector<3x3xf32>
    %63 = tpu.matmul %60, %61, %cst_20 {dimension_numbers = #tpu.dot_dimension_numbers<[1], [1], [0], [0], [0, 0, 1, 0], [], []>} : vector<3x4xf32>, vector<3x4xf32>, vector<3x3xf32> -> vector<3x3xf32>
    %cst_21 = arith.constant 5.000000e-01 : f32
    %64 = vector.broadcast %cst_21 : f32 to vector<3x3xf32>
    %65 = arith.mulf %63, %64 : vector<3x3xf32>
    %cst_22 = arith.constant dense<0xFF800000> : vector<3xf32>
    %66 = vector.multi_reduction <maximumf>, %65, %cst_22 [1] : vector<3x3xf32> to vector<3xf32>
    %67 = vector.shape_cast %66 : vector<3xf32> to vector<3x1xf32>
    %68 = vector.broadcast %67 : vector<3x1xf32> to vector<3x3xf32>
    %69 = arith.subf %65, %68 : vector<3x3xf32>
    %70 = math.exp %69 : vector<3x3xf32>
    %cst_23 = arith.constant dense<0.000000e+00> : vector<3xf32>
    %71 = vector.multi_reduction <add>, %70, %cst_23 [1] : vector<3x3xf32> to vector<3xf32>
    %72 = vector.shape_cast %71 : vector<3xf32> to vector<3x1xf32>
    %73 = tpu.reciprocal %72 {approx = true} : vector<3x1xf32> -> vector<3x1xf32>
    %74 = vector.broadcast %73 : vector<3x1xf32> to vector<3x3xf32>
    %75 = arith.mulf %70, %74 : vector<3x3xf32>
    %cst_24 = arith.constant dense<0.000000e+00> : vector<3x4xf32>
    %76 = tpu.matmul %75, %62, %cst_24 {dimension_numbers = #tpu.dot_dimension_numbers<[1], [0], [0], [1], [0, 0, 1, 1], [], []>} : vector<3x3xf32>, vector<3x4xf32>, vector<3x4xf32> -> vector<3x4xf32>
    %77 = tpu.concatenate %25, %42, %59, %76 in 1 : vector<3x4xf32>, vector<3x4xf32>, vector<3x4xf32>, vector<3x4xf32> -> vector<3x16xf32>
    %78 = vector.extract_strided_slice %6 {offsets = [3, 0], sizes = [3, 4], strides = [1, 1]} : vector<6x16xf32> to vector<3x4xf32>
    %79 = vector.extract_strided_slice %7 {offsets = [3, 0], sizes = [3, 4], strides = [1, 1]} : vector<6x16xf32> to vector<3x4xf32>
    %80 = vector.extract_strided_slice %8 {offsets = [3, 0], sizes = [3, 4], strides = [1, 1]} : vector<6x16xf32> to vector<3x4xf32>
    %cst_25 = arith.constant dense<0.000000e+00> : vector<3x3xf32>
    %81 = tpu.matmul %78, %79, %cst_25 {dimension_numbers = #tpu.dot_dimension_numbers<[1], [1], [0], [0], [0, 0, 1, 0], [], []>} : vector<3x4xf32>, vector<3x4xf32>, vector<3x3xf32> -> vector<3x3xf32>
    %cst_26 = arith.constant 5.000000e-01 : f32
    %82 = vector.broadcast %cst_26 : f32 to vector<3x3xf32>
    %83 = arith.mulf %81, %82 : vector<3x3xf32>
    %cst_27 = arith.constant dense<0xFF800000> : vector<3xf32>
    %84 = vector.multi_reduction <maximumf>, %83, %cst_27 [1] : vector<3x3xf32> to vector<3xf32>
    %85 = vector.shape_cast %84 : vector<3xf32> to vector<3x1xf32>
    %86 = vector.broadcast %85 : vector<3x1xf32> to vector<3x3xf32>
    %87 = arith.subf %83, %86 : vector<3x3xf32>
    %88 = math.exp %87 : vector<3x3xf32>
    %cst_28 = arith.constant dense<0.000000e+00> : vector<3xf32>
    %89 = vector.multi_reduction <add>, %88, %cst_28 [1] : vector<3x3xf32> to vector<3xf32>
    %90 = vector.shape_cast %89 : vector<3xf32> to vector<3x1xf32>
    %91 = tpu.reciprocal %90 {approx = true} : vector<3x1xf32> -> vector<3x1xf32>
    %92 = vector.broadcast %91 : vector<3x1xf32> to vector<3x3xf32>
    %93 = arith.mulf %88, %92 : vector<3x3xf32>
    %cst_29 = arith.constant dense<0.000000e+00> : vector<3x4xf32>
    %94 = tpu.matmul %93, %80, %cst_29 {dimension_numbers = #tpu.dot_dimension_numbers<[1], [0], [0], [1], [0, 0, 1, 1], [], []>} : vector<3x3xf32>, vector<3x4xf32>, vector<3x4xf32> -> vector<3x4xf32>
    %95 = vector.extract_strided_slice %6 {offsets = [3, 4], sizes = [3, 4], strides = [1, 1]} : vector<6x16xf32> to vector<3x4xf32>
    %96 = vector.extract_strided_slice %7 {offsets = [3, 4], sizes = [3, 4], strides = [1, 1]} : vector<6x16xf32> to vector<3x4xf32>
    %97 = vector.extract_strided_slice %8 {offsets = [3, 4], sizes = [3, 4], strides = [1, 1]} : vector<6x16xf32> to vector<3x4xf32>
    %cst_30 = arith.constant dense<0.000000e+00> : vector<3x3xf32>
    %98 = tpu.matmul %95, %96, %cst_30 {dimension_numbers = #tpu.dot_dimension_numbers<[1], [1], [0], [0], [0, 0, 1, 0], [], []>} : vector<3x4xf32>, vector<3x4xf32>, vector<3x3xf32> -> vector<3x3xf32>
    %cst_31 = arith.constant 5.000000e-01 : f32
    %99 = vector.broadcast %cst_31 : f32 to vector<3x3xf32>
    %100 = arith.mulf %98, %99 : vector<3x3xf32>
    %cst_32 = arith.constant dense<0xFF800000> : vector<3xf32>
    %101 = vector.multi_reduction <maximumf>, %100, %cst_32 [1] : vector<3x3xf32> to vector<3xf32>
    %102 = vector.shape_cast %101 : vector<3xf32> to vector<3x1xf32>
    %103 = vector.broadcast %102 : vector<3x1xf32> to vector<3x3xf32>
    %104 = arith.subf %100, %103 : vector<3x3xf32>
    %105 = math.exp %104 : vector<3x3xf32>
    %cst_33 = arith.constant dense<0.000000e+00> : vector<3xf32>
    %106 = vector.multi_reduction <add>, %105, %cst_33 [1] : vector<3x3xf32> to vector<3xf32>
    %107 = vector.shape_cast %106 : vector<3xf32> to vector<3x1xf32>
    %108 = tpu.reciprocal %107 {approx = true} : vector<3x1xf32> -> vector<3x1xf32>
    %109 = vector.broadcast %108 : vector<3x1xf32> to vector<3x3xf32>
    %110 = arith.mulf %105, %109 : vector<3x3xf32>
    %cst_34 = arith.constant dense<0.000000e+00> : vector<3x4xf32>
    %111 = tpu.matmul %110, %97, %cst_34 {dimension_numbers = #tpu.dot_dimension_numbers<[1], [0], [0], [1], [0, 0, 1, 1], [], []>} : vector<3x3xf32>, vector<3x4xf32>, vector<3x4xf32> -> vector<3x4xf32>
    %112 = vector.extract_strided_slice %6 {offsets = [3, 8], sizes = [3, 4], strides = [1, 1]} : vector<6x16xf32> to vector<3x4xf32>
    %113 = vector.extract_strided_slice %7 {offsets = [3, 8], sizes = [3, 4], strides = [1, 1]} : vector<6x16xf32> to vector<3x4xf32>
    %114 = vector.extract_strided_slice %8 {offsets = [3, 8], sizes = [3, 4], strides = [1, 1]} : vector<6x16xf32> to vector<3x4xf32>
    %cst_35 = arith.constant dense<0.000000e+00> : vector<3x3xf32>
    %115 = tpu.matmul %112, %113, %cst_35 {dimension_numbers = #tpu.dot_dimension_numbers<[1], [1], [0], [0], [0, 0, 1, 0], [], []>} : vector<3x4xf32>, vector<3x4xf32>, vector<3x3xf32> -> vector<3x3xf32>
    %cst_36 = arith.constant 5.000000e-01 : f32
    %116 = vector.broadcast %cst_36 : f32 to vector<3x3xf32>
    %117 = arith.mulf %115, %116 : vector<3x3xf32>
    %cst_37 = arith.constant dense<0xFF800000> : vector<3xf32>
    %118 = vector.multi_reduction <maximumf>, %117, %cst_37 [1] : vector<3x3xf32> to vector<3xf32>
    %119 = vector.shape_cast %118 : vector<3xf32> to vector<3x1xf32>
    %120 = vector.broadcast %119 : vector<3x1xf32> to vector<3x3xf32>
    %121 = arith.subf %117, %120 : vector<3x3xf32>
    %122 = math.exp %121 : vector<3x3xf32>
    %cst_38 = arith.constant dense<0.000000e+00> : vector<3xf32>
    %123 = vector.multi_reduction <add>, %122, %cst_38 [1] : vector<3x3xf32> to vector<3xf32>
    %124 = vector.shape_cast %123 : vector<3xf32> to vector<3x1xf32>
    %125 = tpu.reciprocal %124 {approx = true} : vector<3x1xf32> -> vector<3x1xf32>
    %126 = vector.broadcast %125 : vector<3x1xf32> to vector<3x3xf32>
    %127 = arith.mulf %122, %126 : vector<3x3xf32>
    %cst_39 = arith.constant dense<0.000000e+00> : vector<3x4xf32>
    %128 = tpu.matmul %127, %114, %cst_39 {dimension_numbers = #tpu.dot_dimension_numbers<[1], [0], [0], [1], [0, 0, 1, 1], [], []>} : vector<3x3xf32>, vector<3x4xf32>, vector<3x4xf32> -> vector<3x4xf32>
    %129 = vector.extract_strided_slice %6 {offsets = [3, 12], sizes = [3, 4], strides = [1, 1]} : vector<6x16xf32> to vector<3x4xf32>
    %130 = vector.extract_strided_slice %7 {offsets = [3, 12], sizes = [3, 4], strides = [1, 1]} : vector<6x16xf32> to vector<3x4xf32>
    %131 = vector.extract_strided_slice %8 {offsets = [3, 12], sizes = [3, 4], strides = [1, 1]} : vector<6x16xf32> to vector<3x4xf32>
    %cst_40 = arith.constant dense<0.000000e+00> : vector<3x3xf32>
    %132 = tpu.matmul %129, %130, %cst_40 {dimension_numbers = #tpu.dot_dimension_numbers<[1], [1], [0], [0], [0, 0, 1, 0], [], []>} : vector<3x4xf32>, vector<3x4xf32>, vector<3x3xf32> -> vector<3x3xf32>
    %cst_41 = arith.constant 5.000000e-01 : f32
    %133 = vector.broadcast %cst_41 : f32 to vector<3x3xf32>
    %134 = arith.mulf %132, %133 : vector<3x3xf32>
    %cst_42 = arith.constant dense<0xFF800000> : vector<3xf32>
    %135 = vector.multi_reduction <maximumf>, %134, %cst_42 [1] : vector<3x3xf32> to vector<3xf32>
    %136 = vector.shape_cast %135 : vector<3xf32> to vector<3x1xf32>
    %137 = vector.broadcast %136 : vector<3x1xf32> to vector<3x3xf32>
    %138 = arith.subf %134, %137 : vector<3x3xf32>
    %139 = math.exp %138 : vector<3x3xf32>
    %cst_43 = arith.constant dense<0.000000e+00> : vector<3xf32>
    %140 = vector.multi_reduction <add>, %139, %cst_43 [1] : vector<3x3xf32> to vector<3xf32>
    %141 = vector.shape_cast %140 : vector<3xf32> to vector<3x1xf32>
    %142 = tpu.reciprocal %141 {approx = true} : vector<3x1xf32> -> vector<3x1xf32>
    %143 = vector.broadcast %142 : vector<3x1xf32> to vector<3x3xf32>
    %144 = arith.mulf %139, %143 : vector<3x3xf32>
    %cst_44 = arith.constant dense<0.000000e+00> : vector<3x4xf32>
    %145 = tpu.matmul %144, %131, %cst_44 {dimension_numbers = #tpu.dot_dimension_numbers<[1], [0], [0], [1], [0, 0, 1, 1], [], []>} : vector<3x3xf32>, vector<3x4xf32>, vector<3x4xf32> -> vector<3x4xf32>
    %146 = tpu.concatenate %94, %111, %128, %145 in 1 : vector<3x4xf32>, vector<3x4xf32>, vector<3x4xf32>, vector<3x4xf32> -> vector<3x16xf32>
    %147 = tpu.concatenate %77, %146 in 0 : vector<3x16xf32>, vector<3x16xf32> -> vector<6x16xf32>
    %c0_45 = arith.constant 0 : index
    %c0_46 = arith.constant 0 : index
    %148 = vector.load %arg4[%c0_45, %c0_46] : memref<16x16xf32, #tpu.memory_space<vmem>>, vector<16x16xf32>
    %cst_47 = arith.constant dense<0.000000e+00> : vector<6x16xf32>
    %149 = tpu.matmul %147, %148, %cst_47 {dimension_numbers = #tpu.dot_dimension_numbers<[1], [0], [0], [1], [0, 0, 1, 1], [], []>} : vector<6x16xf32>, vector<16x16xf32>, vector<6x16xf32> -> vector<6x16xf32>
    %c0_48 = arith.constant 0 : index
    %c0_49 = arith.constant 0 : index
    %150 = vector.load %arg5[%c0_48, %c0_49] : memref<1x16xf32, #tpu.memory_space<vmem>>, vector<1x16xf32>
    %151 = vector.broadcast %150 : vector<1x16xf32> to vector<6x16xf32>
    %152 = arith.addf %149, %151 : vector<6x16xf32>
    %153 = arith.addf %0, %152 : vector<6x16xf32>
    %c0_50 = arith.constant 0 : index
    %c0_51 = arith.constant 0 : index
    %154 = vector.load %arg6[%c0_50, %c0_51] : memref<1x16xf32, #tpu.memory_space<vmem>>, vector<1x16xf32>
    %c0_52 = arith.constant 0 : index
    %c0_53 = arith.constant 0 : index
    %155 = vector.load %arg7[%c0_52, %c0_53] : memref<1x16xf32, #tpu.memory_space<vmem>>, vector<1x16xf32>
    %cst_54 = arith.constant dense<0.000000e+00> : vector<6xf32>
    %156 = vector.multi_reduction <add>, %153, %cst_54 [1] : vector<6x16xf32> to vector<6xf32>
    %157 = vector.shape_cast %156 : vector<6xf32> to vector<6x1xf32>
    %cst_55 = arith.constant 1.600000e+01 : f32
    %158 = vector.broadcast %cst_55 : f32 to vector<6x1xf32>
    %159 = arith.divf %157, %158 : vector<6x1xf32>
    %160 = vector.broadcast %159 : vector<6x1xf32> to vector<6x16xf32>
    %161 = arith.subf %153, %160 : vector<6x16xf32>
    %162 = arith.mulf %161, %161 : vector<6x16xf32>
    %cst_56 = arith.constant dense<0.000000e+00> : vector<6xf32>
    %163 = vector.multi_reduction <add>, %162, %cst_56 [1] : vector<6x16xf32> to vector<6xf32>
    %164 = vector.shape_cast %163 : vector<6xf32> to vector<6x1xf32>
    %cst_57 = arith.constant 1.600000e+01 : f32
    %165 = vector.broadcast %cst_57 : f32 to vector<6x1xf32>
    %166 = arith.divf %164, %165 : vector<6x1xf32>
    %cst_58 = arith.constant 9.99999974E-6 : f32
    %167 = vector.broadcast %cst_58 : f32 to vector<6x1xf32>
    %168 = arith.addf %166, %167 : vector<6x1xf32>
    %169 = math.rsqrt %168 : vector<6x1xf32>
    %170 = vector.broadcast %169 : vector<6x1xf32> to vector<6x16xf32>
    %171 = arith.mulf %161, %170 : vector<6x16xf32>
    %172 = vector.broadcast %154 : vector<1x16xf32> to vector<6x16xf32>
    %173 = arith.mulf %171, %172 : vector<6x16xf32>
    %174 = vector.broadcast %155 : vector<1x16xf32> to vector<6x16xf32>
    %175 = arith.addf %173, %174 : vector<6x16xf32>
    %c0_59 = arith.constant 0 : index
    %c0_60 = arith.constant 0 : index
    %176 = vector.load %arg10[%c0_59, %c0_60] : memref<16x32xf32, #tpu.memory_space<vmem>>, vector<16x32xf32>
    %cst_61 = arith.constant dense<0.000000e+00> : vector<6x32xf32>
    %177 = tpu.matmul %175, %176, %cst_61 {dimension_numbers = #tpu.dot_dimension_numbers<[1], [0], [0], [1], [0, 0, 1, 1], [], []>} : vector<6x16xf32>, vector<16x32xf32>, vector<6x32xf32> -> vector<6x32xf32>
    %c0_62 = arith.constant 0 : index
    %c0_63 = arith.constant 0 : index
    %178 = vector.load %arg11[%c0_62, %c0_63] : memref<1x32xf32, #tpu.memory_space<vmem>>, vector<1x32xf32>
    %179 = vector.broadcast %178 : vector<1x32xf32> to vector<6x32xf32>
    %180 = arith.addf %177, %179 : vector<6x32xf32>
    %cst_64 = arith.constant 0.000000e+00 : f32
    %181 = vector.broadcast %cst_64 : f32 to vector<6x32xf32>
    %182 = arith.maximumf %180, %181 : vector<6x32xf32>
    %c0_65 = arith.constant 0 : index
    %c0_66 = arith.constant 0 : index
    %183 = vector.load %arg12[%c0_65, %c0_66] : memref<32x16xf32, #tpu.memory_space<vmem>>, vector<32x16xf32>
    %cst_67 = arith.constant dense<0.000000e+00> : vector<6x16xf32>
    %184 = tpu.matmul %182, %183, %cst_67 {dimension_numbers = #tpu.dot_dimension_numbers<[1], [0], [0], [1], [0, 0, 1, 1], [], []>} : vector<6x32xf32>, vector<32x16xf32>, vector<6x16xf32> -> vector<6x16xf32>
    %c0_68 = arith.constant 0 : index
    %c0_69 = arith.constant 0 : index
    %185 = vector.load %arg13[%c0_68, %c0_69] : memref<1x16xf32, #tpu.memory_space<vmem>>, vector<1x16xf32>
    %186 = vector.broadcast %185 : vector<1x16xf32> to vector<6x16xf32>
    %187 = arith.addf %184, %186 : vector<6x16xf32>
    %188 = arith.addf %175, %187 : vector<6x16xf32>
    %c0_70 = arith.constant 0 : index
    %c0_71 = arith.constant 0 : index
    %189 = vector.load %arg8[%c0_70, %c0_71] : memref<1x16xf32, #tpu.memory_space<vmem>>, vector<1x16xf32>
    %c0_72 = arith.constant 0 : index
    %c0_73 = arith.constant 0 : index
    %190 = vector.load %arg9[%c0_72, %c0_73] : memref<1x16xf32, #tpu.memory_space<vmem>>, vector<1x16xf32>
    %cst_74 = arith.constant dense<0.000000e+00> : vector<6xf32>
    %191 = vector.multi_reduction <add>, %188, %cst_74 [1] : vector<6x16xf32> to vector<6xf32>
    %192 = vector.shape_cast %191 : vector<6xf32> to vector<6x1xf32>
    %cst_75 = arith.constant 1.600000e+01 : f32
    %193 = vector.broadcast %cst_75 : f32 to vector<6x1xf32>
    %194 = arith.divf %192, %193 : vector<6x1xf32>
    %195 = vector.broadcast %194 : vector<6x1xf32> to vector<6x16xf32>
    %196 = arith.subf %188, %195 : vector<6x16xf32>
    %197 = arith.mulf %196, %196 : vector<6x16xf32>
    %cst_76 = arith.constant dense<0.000000e+00> : vector<6xf32>
    %198 = vector.multi_reduction <add>, %197, %cst_76 [1] : vector<6x16xf32> to vector<6xf32>
    %199 = vector.shape_cast %198 : vector<6xf32> to vector<6x1xf32>
    %cst_77 = arith.constant 1.600000e+01 : f32
    %200 = vector.broadcast %cst_77 : f32 to vector<6x1xf32>
    %201 = arith.divf %199, %200 : vector<6x1xf32>
    %cst_78 = arith.constant 9.99999974E-6 : f32
    %202 = vector.broadcast %cst_78 : f32 to vector<6x1xf32>
    %203 = arith.addf %201, %202 : vector<6x1xf32>
    %204 = math.rsqrt %203 : vector<6x1xf32>
    %205 = vector.broadcast %204 : vector<6x1xf32> to vector<6x16xf32>
    %206 = arith.mulf %196, %205 : vector<6x16xf32>
    %207 = vector.broadcast %189 : vector<1x16xf32> to vector<6x16xf32>
    %208 = arith.mulf %206, %207 : vector<6x16xf32>
    %209 = vector.broadcast %190 : vector<1x16xf32> to vector<6x16xf32>
    %210 = arith.addf %208, %209 : vector<6x16xf32>
    %211 = vector.extract_strided_slice %210 {offsets = [0, 0], sizes = [1, 16], strides = [1, 1]} : vector<6x16xf32> to vector<1x16xf32>
    %212 = vector.extract_strided_slice %210 {offsets = [3, 0], sizes = [1, 16], strides = [1, 1]} : vector<6x16xf32> to vector<1x16xf32>
    %213 = vector.extract_strided_slice %210 {offsets = [1, 0], sizes = [1, 16], strides = [1, 1]} : vector<6x16xf32> to vector<1x16xf32>
    %214 = vector.extract_strided_slice %210 {offsets = [4, 0], sizes = [1, 16], strides = [1, 1]} : vector<6x16xf32> to vector<1x16xf32>
    %215 = vector.extract_strided_slice %210 {offsets = [2, 0], sizes = [1, 16], strides = [1, 1]} : vector<6x16xf32> to vector<1x16xf32>
    %216 = vector.extract_strided_slice %210 {offsets = [5, 0], sizes = [1, 16], strides = [1, 1]} : vector<6x16xf32> to vector<1x16xf32>
    %217 = tpu.concatenate %211, %212, %213, %214, %215, %216 in 0 : vector<1x16xf32>, vector<1x16xf32>, vector<1x16xf32>, vector<1x16xf32>, vector<1x16xf32>, vector<1x16xf32> -> vector<6x16xf32>
    %218 = tpu.iota {dimensions = array<i32: 1>} : vector<2x256xi32>
    %c64_i32 = arith.constant 64 : i32
    %c0_i32 = arith.constant 0 : i32
    %219 = arith.cmpi eq, %c64_i32, %c0_i32 : i32
    %c1_i32 = arith.constant 1 : i32
    %220 = arith.select %219, %c1_i32, %c64_i32 : i32
    %221 = vector.broadcast %220 : i32 to vector<2x256xi32>
    %222 = arith.remsi %218, %221 : vector<2x256xi32>
    %c0_i32_79 = arith.constant 0 : i32
    %223 = vector.broadcast %c0_i32_79 : i32 to vector<2x256xi32>
    %224 = arith.cmpi ne, %222, %223 : vector<2x256xi32>
    %c0_i32_80 = arith.constant 0 : i32
    %225 = vector.broadcast %c0_i32_80 : i32 to vector<2x256xi32>
    %226 = arith.cmpi slt, %222, %225 : vector<2x256xi32>
    %c0_i32_81 = arith.constant 0 : i32
    %227 = arith.cmpi slt, %220, %c0_i32_81 : i32
    %228 = vector.broadcast %227 : i1 to vector<2x256xi1>
    %229 = vector.broadcast %228 : vector<2x256xi1> to vector<2x256xi1>
    %230 = arith.xori %226, %229 : vector<2x256xi1>
    %231 = arith.andi %230, %224 : vector<2x256xi1>
    %232 = vector.broadcast %220 : i32 to vector<2x256xi32>
    %233 = arith.addi %222, %232 : vector<2x256xi32>
    %234 = arith.select %231, %233, %222 : vector<2x256xi1>, vector<2x256xi32>
    %c32_i32 = arith.constant 32 : i32
    %235 = vector.broadcast %c32_i32 : i32 to vector<2x256xi32>
    %236 = arith.cmpi slt, %234, %235 : vector<2x256xi32>
    %237 = tpu.iota {dimensions = array<i32: 1>} : vector<2x64xi32>
    %c32_i32_82 = arith.constant 32 : i32
    %238 = vector.broadcast %c32_i32_82 : i32 to vector<2x64xi32>
    %239 = arith.cmpi slt, %237, %238 : vector<2x64xi32>
    %c0_83 = arith.constant 0 : index
    %c0_84 = arith.constant 0 : index
    %240 = vector.load %arg14[%c0_83, %c0_84] : memref<16x256xf32, #tpu.memory_space<vmem>>, vector<16x256xf32>
    %c0_85 = arith.constant 0 : index
    %c0_86 = arith.constant 0 : index
    %241 = vector.load %arg15[%c0_85, %c0_86] : memref<64x256xf32, #tpu.memory_space<vmem>>, vector<64x256xf32>
    %c0_87 = arith.constant 0 : index
    %c0_88 = arith.constant 0 : index
    %242 = vector.load %arg16[%c0_87, %c0_88] : memref<1x256xf32, #tpu.memory_space<vmem>>, vector<1x256xf32>
    %cst_89 = arith.constant dense<0.000000e+00> : vector<6x256xf32>
    %243 = tpu.matmul %217, %240, %cst_89 {dimension_numbers = #tpu.dot_dimension_numbers<[1], [0], [0], [1], [0, 0, 1, 1], [], []>} : vector<6x16xf32>, vector<16x256xf32>, vector<6x256xf32> -> vector<6x256xf32>
    %244 = vector.broadcast %242 : vector<1x256xf32> to vector<6x256xf32>
    %245 = arith.addf %243, %244 : vector<6x256xf32>
    %cst_90 = arith.constant 0.000000e+00 : f32
    %246 = vector.broadcast %cst_90 : f32 to vector<2x64xf32>
    %cst_91 = arith.constant 0.000000e+00 : f32
    %247 = vector.broadcast %cst_91 : f32 to vector<2x64xf32>
    %248 = vector.extract_strided_slice %245 {offsets = [0, 0], sizes = [2, 256], strides = [1, 1]} : vector<6x256xf32> to vector<2x256xf32>
    %249 = vector.extract_strided_slice %245 {offsets = [4, 0], sizes = [2, 256], strides = [1, 1]} : vector<6x256xf32> to vector<2x256xf32>
    %250 = arith.select %236, %248, %249 : vector<2x256xi1>, vector<2x256xf32>
    %cst_92 = arith.constant dense<0.000000e+00> : vector<2x256xf32>
    %251 = tpu.matmul %246, %241, %cst_92 {dimension_numbers = #tpu.dot_dimension_numbers<[1], [0], [0], [1], [0, 0, 1, 1], [], []>} : vector<2x64xf32>, vector<64x256xf32>, vector<2x256xf32> -> vector<2x256xf32>
    %252 = arith.addf %250, %251 : vector<2x256xf32>
    %253 = vector.extract_strided_slice %252 {offsets = [0, 0], sizes = [2, 64], strides = [1, 1]} : vector<2x256xf32> to vector<2x64xf32>
    %254 = arith.negf %253 : vector<2x64xf32>
    %255 = math.exp %254 : vector<2x64xf32>
    %cst_93 = arith.constant 1.000000e+00 : f32
    %256 = vector.broadcast %cst_93 : f32 to vector<2x64xf32>
    %257 = arith.addf %256, %255 : vector<2x64xf32>
    %258 = arith.divf %256, %257 : vector<2x64xf32>
    %259 = vector.extract_strided_slice %252 {offsets = [0, 64], sizes = [2, 64], strides = [1, 1]} : vector<2x256xf32> to vector<2x64xf32>
    %260 = arith.negf %259 : vector<2x64xf32>
    %261 = math.exp %260 : vector<2x64xf32>
    %cst_94 = arith.constant 1.000000e+00 : f32
    %262 = vector.broadcast %cst_94 : f32 to vector<2x64xf32>
    %263 = arith.addf %262, %261 : vector<2x64xf32>
    %264 = arith.divf %262, %263 : vector<2x64xf32>
    %265 = vector.extract_strided_slice %252 {offsets = [0, 128], sizes = [2, 64], strides = [1, 1]} : vector<2x256xf32> to vector<2x64xf32>
    %266 = math.tanh %265 : vector<2x64xf32>
    %267 = vector.extract_strided_slice %252 {offsets = [0, 192], sizes = [2, 64], strides = [1, 1]} : vector<2x256xf32> to vector<2x64xf32>
    %268 = arith.negf %267 : vector<2x64xf32>
    %269 = math.exp %268 : vector<2x64xf32>
    %cst_95 = arith.constant 1.000000e+00 : f32
    %270 = vector.broadcast %cst_95 : f32 to vector<2x64xf32>
    %271 = arith.addf %270, %269 : vector<2x64xf32>
    %272 = arith.divf %270, %271 : vector<2x64xf32>
    %273 = arith.mulf %264, %247 : vector<2x64xf32>
    %274 = arith.mulf %258, %266 : vector<2x64xf32>
    %275 = arith.addf %273, %274 : vector<2x64xf32>
    %276 = math.tanh %275 : vector<2x64xf32>
    %277 = arith.mulf %272, %276 : vector<2x64xf32>
    %278 = vector.extract_strided_slice %245 {offsets = [2, 0], sizes = [2, 256], strides = [1, 1]} : vector<6x256xf32> to vector<2x256xf32>
    %279 = vector.extract_strided_slice %245 {offsets = [2, 0], sizes = [2, 256], strides = [1, 1]} : vector<6x256xf32> to vector<2x256xf32>
    %280 = arith.select %236, %278, %279 : vector<2x256xi1>, vector<2x256xf32>
    %cst_96 = arith.constant dense<0.000000e+00> : vector<2x256xf32>
    %281 = tpu.matmul %277, %241, %cst_96 {dimension_numbers = #tpu.dot_dimension_numbers<[1], [0], [0], [1], [0, 0, 1, 1], [], []>} : vector<2x64xf32>, vector<64x256xf32>, vector<2x256xf32> -> vector<2x256xf32>
    %282 = arith.addf %280, %281 : vector<2x256xf32>
    %283 = vector.extract_strided_slice %282 {offsets = [0, 0], sizes = [2, 64], strides = [1, 1]} : vector<2x256xf32> to vector<2x64xf32>
    %284 = arith.negf %283 : vector<2x64xf32>
    %285 = math.exp %284 : vector<2x64xf32>
    %cst_97 = arith.constant 1.000000e+00 : f32
    %286 = vector.broadcast %cst_97 : f32 to vector<2x64xf32>
    %287 = arith.addf %286, %285 : vector<2x64xf32>
    %288 = arith.divf %286, %287 : vector<2x64xf32>
    %289 = vector.extract_strided_slice %282 {offsets = [0, 64], sizes = [2, 64], strides = [1, 1]} : vector<2x256xf32> to vector<2x64xf32>
    %290 = arith.negf %289 : vector<2x64xf32>
    %291 = math.exp %290 : vector<2x64xf32>
    %cst_98 = arith.constant 1.000000e+00 : f32
    %292 = vector.broadcast %cst_98 : f32 to vector<2x64xf32>
    %293 = arith.addf %292, %291 : vector<2x64xf32>
    %294 = arith.divf %292, %293 : vector<2x64xf32>
    %295 = vector.extract_strided_slice %282 {offsets = [0, 128], sizes = [2, 64], strides = [1, 1]} : vector<2x256xf32> to vector<2x64xf32>
    %296 = math.tanh %295 : vector<2x64xf32>
    %297 = vector.extract_strided_slice %282 {offsets = [0, 192], sizes = [2, 64], strides = [1, 1]} : vector<2x256xf32> to vector<2x64xf32>
    %298 = arith.negf %297 : vector<2x64xf32>
    %299 = math.exp %298 : vector<2x64xf32>
    %cst_99 = arith.constant 1.000000e+00 : f32
    %300 = vector.broadcast %cst_99 : f32 to vector<2x64xf32>
    %301 = arith.addf %300, %299 : vector<2x64xf32>
    %302 = arith.divf %300, %301 : vector<2x64xf32>
    %303 = arith.mulf %294, %275 : vector<2x64xf32>
    %304 = arith.mulf %288, %296 : vector<2x64xf32>
    %305 = arith.addf %303, %304 : vector<2x64xf32>
    %306 = math.tanh %305 : vector<2x64xf32>
    %307 = arith.mulf %302, %306 : vector<2x64xf32>
    %308 = vector.extract_strided_slice %245 {offsets = [4, 0], sizes = [2, 256], strides = [1, 1]} : vector<6x256xf32> to vector<2x256xf32>
    %309 = vector.extract_strided_slice %245 {offsets = [0, 0], sizes = [2, 256], strides = [1, 1]} : vector<6x256xf32> to vector<2x256xf32>
    %310 = arith.select %236, %308, %309 : vector<2x256xi1>, vector<2x256xf32>
    %cst_100 = arith.constant dense<0.000000e+00> : vector<2x256xf32>
    %311 = tpu.matmul %307, %241, %cst_100 {dimension_numbers = #tpu.dot_dimension_numbers<[1], [0], [0], [1], [0, 0, 1, 1], [], []>} : vector<2x64xf32>, vector<64x256xf32>, vector<2x256xf32> -> vector<2x256xf32>
    %312 = arith.addf %310, %311 : vector<2x256xf32>
    %313 = vector.extract_strided_slice %312 {offsets = [0, 0], sizes = [2, 64], strides = [1, 1]} : vector<2x256xf32> to vector<2x64xf32>
    %314 = arith.negf %313 : vector<2x64xf32>
    %315 = math.exp %314 : vector<2x64xf32>
    %cst_101 = arith.constant 1.000000e+00 : f32
    %316 = vector.broadcast %cst_101 : f32 to vector<2x64xf32>
    %317 = arith.addf %316, %315 : vector<2x64xf32>
    %318 = arith.divf %316, %317 : vector<2x64xf32>
    %319 = vector.extract_strided_slice %312 {offsets = [0, 64], sizes = [2, 64], strides = [1, 1]} : vector<2x256xf32> to vector<2x64xf32>
    %320 = arith.negf %319 : vector<2x64xf32>
    %321 = math.exp %320 : vector<2x64xf32>
    %cst_102 = arith.constant 1.000000e+00 : f32
    %322 = vector.broadcast %cst_102 : f32 to vector<2x64xf32>
    %323 = arith.addf %322, %321 : vector<2x64xf32>
    %324 = arith.divf %322, %323 : vector<2x64xf32>
    %325 = vector.extract_strided_slice %312 {offsets = [0, 128], sizes = [2, 64], strides = [1, 1]} : vector<2x256xf32> to vector<2x64xf32>
    %326 = math.tanh %325 : vector<2x64xf32>
    %327 = vector.extract_strided_slice %312 {offsets = [0, 192], sizes = [2, 64], strides = [1, 1]} : vector<2x256xf32> to vector<2x64xf32>
    %328 = arith.negf %327 : vector<2x64xf32>
    %329 = math.exp %328 : vector<2x64xf32>
    %cst_103 = arith.constant 1.000000e+00 : f32
    %330 = vector.broadcast %cst_103 : f32 to vector<2x64xf32>
    %331 = arith.addf %330, %329 : vector<2x64xf32>
    %332 = arith.divf %330, %331 : vector<2x64xf32>
    %333 = arith.mulf %324, %305 : vector<2x64xf32>
    %334 = arith.mulf %318, %326 : vector<2x64xf32>
    %335 = arith.addf %333, %334 : vector<2x64xf32>
    %336 = math.tanh %335 : vector<2x64xf32>
    %337 = arith.mulf %332, %336 : vector<2x64xf32>
    %338 = arith.select %239, %277, %337 : vector<2x64xi1>, vector<2x64xf32>
    %339 = arith.select %239, %307, %307 : vector<2x64xi1>, vector<2x64xf32>
    %340 = arith.select %239, %337, %277 : vector<2x64xi1>, vector<2x64xf32>
    %341 = tpu.concatenate %338, %339, %340 in 0 : vector<2x64xf32>, vector<2x64xf32>, vector<2x64xf32> -> vector<6x64xf32>
    %c0_104 = arith.constant 0 : index
    %c0_105 = arith.constant 0 : index
    %342 = vector.load %arg17[%c0_104, %c0_105] : memref<64x256xf32, #tpu.memory_space<vmem>>, vector<64x256xf32>
    %c0_106 = arith.constant 0 : index
    %c0_107 = arith.constant 0 : index
    %343 = vector.load %arg18[%c0_106, %c0_107] : memref<64x256xf32, #tpu.memory_space<vmem>>, vector<64x256xf32>
    %c0_108 = arith.constant 0 : index
    %c0_109 = arith.constant 0 : index
    %344 = vector.load %arg19[%c0_108, %c0_109] : memref<1x256xf32, #tpu.memory_space<vmem>>, vector<1x256xf32>
    %cst_110 = arith.constant dense<0.000000e+00> : vector<6x256xf32>
    %345 = tpu.matmul %341, %342, %cst_110 {dimension_numbers = #tpu.dot_dimension_numbers<[1], [0], [0], [1], [0, 0, 1, 1], [], []>} : vector<6x64xf32>, vector<64x256xf32>, vector<6x256xf32> -> vector<6x256xf32>
    %346 = vector.broadcast %344 : vector<1x256xf32> to vector<6x256xf32>
    %347 = arith.addf %345, %346 : vector<6x256xf32>
    %cst_111 = arith.constant 0.000000e+00 : f32
    %348 = vector.broadcast %cst_111 : f32 to vector<2x64xf32>
    %cst_112 = arith.constant 0.000000e+00 : f32
    %349 = vector.broadcast %cst_112 : f32 to vector<2x64xf32>
    %350 = vector.extract_strided_slice %347 {offsets = [0, 0], sizes = [2, 256], strides = [1, 1]} : vector<6x256xf32> to vector<2x256xf32>
    %351 = vector.extract_strided_slice %347 {offsets = [4, 0], sizes = [2, 256], strides = [1, 1]} : vector<6x256xf32> to vector<2x256xf32>
    %352 = arith.select %236, %350, %351 : vector<2x256xi1>, vector<2x256xf32>
    %cst_113 = arith.constant dense<0.000000e+00> : vector<2x256xf32>
    %353 = tpu.matmul %348, %343, %cst_113 {dimension_numbers = #tpu.dot_dimension_numbers<[1], [0], [0], [1], [0, 0, 1, 1], [], []>} : vector<2x64xf32>, vector<64x256xf32>, vector<2x256xf32> -> vector<2x256xf32>
    %354 = arith.addf %352, %353 : vector<2x256xf32>
    %355 = vector.extract_strided_slice %354 {offsets = [0, 0], sizes = [2, 64], strides = [1, 1]} : vector<2x256xf32> to vector<2x64xf32>
    %356 = arith.negf %355 : vector<2x64xf32>
    %357 = math.exp %356 : vector<2x64xf32>
    %cst_114 = arith.constant 1.000000e+00 : f32
    %358 = vector.broadcast %cst_114 : f32 to vector<2x64xf32>
    %359 = arith.addf %358, %357 : vector<2x64xf32>
    %360 = arith.divf %358, %359 : vector<2x64xf32>
    %361 = vector.extract_strided_slice %354 {offsets = [0, 64], sizes = [2, 64], strides = [1, 1]} : vector<2x256xf32> to vector<2x64xf32>
    %362 = arith.negf %361 : vector<2x64xf32>
    %363 = math.exp %362 : vector<2x64xf32>
    %cst_115 = arith.constant 1.000000e+00 : f32
    %364 = vector.broadcast %cst_115 : f32 to vector<2x64xf32>
    %365 = arith.addf %364, %363 : vector<2x64xf32>
    %366 = arith.divf %364, %365 : vector<2x64xf32>
    %367 = vector.extract_strided_slice %354 {offsets = [0, 128], sizes = [2, 64], strides = [1, 1]} : vector<2x256xf32> to vector<2x64xf32>
    %368 = math.tanh %367 : vector<2x64xf32>
    %369 = vector.extract_strided_slice %354 {offsets = [0, 192], sizes = [2, 64], strides = [1, 1]} : vector<2x256xf32> to vector<2x64xf32>
    %370 = arith.negf %369 : vector<2x64xf32>
    %371 = math.exp %370 : vector<2x64xf32>
    %cst_116 = arith.constant 1.000000e+00 : f32
    %372 = vector.broadcast %cst_116 : f32 to vector<2x64xf32>
    %373 = arith.addf %372, %371 : vector<2x64xf32>
    %374 = arith.divf %372, %373 : vector<2x64xf32>
    %375 = arith.mulf %366, %349 : vector<2x64xf32>
    %376 = arith.mulf %360, %368 : vector<2x64xf32>
    %377 = arith.addf %375, %376 : vector<2x64xf32>
    %378 = math.tanh %377 : vector<2x64xf32>
    %379 = arith.mulf %374, %378 : vector<2x64xf32>
    %380 = vector.extract_strided_slice %347 {offsets = [2, 0], sizes = [2, 256], strides = [1, 1]} : vector<6x256xf32> to vector<2x256xf32>
    %381 = vector.extract_strided_slice %347 {offsets = [2, 0], sizes = [2, 256], strides = [1, 1]} : vector<6x256xf32> to vector<2x256xf32>
    %382 = arith.select %236, %380, %381 : vector<2x256xi1>, vector<2x256xf32>
    %cst_117 = arith.constant dense<0.000000e+00> : vector<2x256xf32>
    %383 = tpu.matmul %379, %343, %cst_117 {dimension_numbers = #tpu.dot_dimension_numbers<[1], [0], [0], [1], [0, 0, 1, 1], [], []>} : vector<2x64xf32>, vector<64x256xf32>, vector<2x256xf32> -> vector<2x256xf32>
    %384 = arith.addf %382, %383 : vector<2x256xf32>
    %385 = vector.extract_strided_slice %384 {offsets = [0, 0], sizes = [2, 64], strides = [1, 1]} : vector<2x256xf32> to vector<2x64xf32>
    %386 = arith.negf %385 : vector<2x64xf32>
    %387 = math.exp %386 : vector<2x64xf32>
    %cst_118 = arith.constant 1.000000e+00 : f32
    %388 = vector.broadcast %cst_118 : f32 to vector<2x64xf32>
    %389 = arith.addf %388, %387 : vector<2x64xf32>
    %390 = arith.divf %388, %389 : vector<2x64xf32>
    %391 = vector.extract_strided_slice %384 {offsets = [0, 64], sizes = [2, 64], strides = [1, 1]} : vector<2x256xf32> to vector<2x64xf32>
    %392 = arith.negf %391 : vector<2x64xf32>
    %393 = math.exp %392 : vector<2x64xf32>
    %cst_119 = arith.constant 1.000000e+00 : f32
    %394 = vector.broadcast %cst_119 : f32 to vector<2x64xf32>
    %395 = arith.addf %394, %393 : vector<2x64xf32>
    %396 = arith.divf %394, %395 : vector<2x64xf32>
    %397 = vector.extract_strided_slice %384 {offsets = [0, 128], sizes = [2, 64], strides = [1, 1]} : vector<2x256xf32> to vector<2x64xf32>
    %398 = math.tanh %397 : vector<2x64xf32>
    %399 = vector.extract_strided_slice %384 {offsets = [0, 192], sizes = [2, 64], strides = [1, 1]} : vector<2x256xf32> to vector<2x64xf32>
    %400 = arith.negf %399 : vector<2x64xf32>
    %401 = math.exp %400 : vector<2x64xf32>
    %cst_120 = arith.constant 1.000000e+00 : f32
    %402 = vector.broadcast %cst_120 : f32 to vector<2x64xf32>
    %403 = arith.addf %402, %401 : vector<2x64xf32>
    %404 = arith.divf %402, %403 : vector<2x64xf32>
    %405 = arith.mulf %396, %377 : vector<2x64xf32>
    %406 = arith.mulf %390, %398 : vector<2x64xf32>
    %407 = arith.addf %405, %406 : vector<2x64xf32>
    %408 = math.tanh %407 : vector<2x64xf32>
    %409 = arith.mulf %404, %408 : vector<2x64xf32>
    %410 = vector.extract_strided_slice %347 {offsets = [4, 0], sizes = [2, 256], strides = [1, 1]} : vector<6x256xf32> to vector<2x256xf32>
    %411 = vector.extract_strided_slice %347 {offsets = [0, 0], sizes = [2, 256], strides = [1, 1]} : vector<6x256xf32> to vector<2x256xf32>
    %412 = arith.select %236, %410, %411 : vector<2x256xi1>, vector<2x256xf32>
    %cst_121 = arith.constant dense<0.000000e+00> : vector<2x256xf32>
    %413 = tpu.matmul %409, %343, %cst_121 {dimension_numbers = #tpu.dot_dimension_numbers<[1], [0], [0], [1], [0, 0, 1, 1], [], []>} : vector<2x64xf32>, vector<64x256xf32>, vector<2x256xf32> -> vector<2x256xf32>
    %414 = arith.addf %412, %413 : vector<2x256xf32>
    %415 = vector.extract_strided_slice %414 {offsets = [0, 0], sizes = [2, 64], strides = [1, 1]} : vector<2x256xf32> to vector<2x64xf32>
    %416 = arith.negf %415 : vector<2x64xf32>
    %417 = math.exp %416 : vector<2x64xf32>
    %cst_122 = arith.constant 1.000000e+00 : f32
    %418 = vector.broadcast %cst_122 : f32 to vector<2x64xf32>
    %419 = arith.addf %418, %417 : vector<2x64xf32>
    %420 = arith.divf %418, %419 : vector<2x64xf32>
    %421 = vector.extract_strided_slice %414 {offsets = [0, 64], sizes = [2, 64], strides = [1, 1]} : vector<2x256xf32> to vector<2x64xf32>
    %422 = arith.negf %421 : vector<2x64xf32>
    %423 = math.exp %422 : vector<2x64xf32>
    %cst_123 = arith.constant 1.000000e+00 : f32
    %424 = vector.broadcast %cst_123 : f32 to vector<2x64xf32>
    %425 = arith.addf %424, %423 : vector<2x64xf32>
    %426 = arith.divf %424, %425 : vector<2x64xf32>
    %427 = vector.extract_strided_slice %414 {offsets = [0, 128], sizes = [2, 64], strides = [1, 1]} : vector<2x256xf32> to vector<2x64xf32>
    %428 = math.tanh %427 : vector<2x64xf32>
    %429 = vector.extract_strided_slice %414 {offsets = [0, 192], sizes = [2, 64], strides = [1, 1]} : vector<2x256xf32> to vector<2x64xf32>
    %430 = arith.negf %429 : vector<2x64xf32>
    %431 = math.exp %430 : vector<2x64xf32>
    %cst_124 = arith.constant 1.000000e+00 : f32
    %432 = vector.broadcast %cst_124 : f32 to vector<2x64xf32>
    %433 = arith.addf %432, %431 : vector<2x64xf32>
    %434 = arith.divf %432, %433 : vector<2x64xf32>
    %435 = arith.mulf %426, %407 : vector<2x64xf32>
    %436 = arith.mulf %420, %428 : vector<2x64xf32>
    %437 = arith.addf %435, %436 : vector<2x64xf32>
    %438 = math.tanh %437 : vector<2x64xf32>
    %439 = arith.mulf %434, %438 : vector<2x64xf32>
    %440 = arith.select %239, %379, %439 : vector<2x64xi1>, vector<2x64xf32>
    %441 = arith.select %239, %409, %409 : vector<2x64xi1>, vector<2x64xf32>
    %442 = arith.select %239, %439, %379 : vector<2x64xi1>, vector<2x64xf32>
    %443 = tpu.concatenate %440, %441, %442 in 1 : vector<2x64xf32>, vector<2x64xf32>, vector<2x64xf32> -> vector<2x192xf32>
    %c0_125 = arith.constant 0 : index
    %c0_126 = arith.constant 0 : index
    %444 = vector.load %arg20[%c0_125, %c0_126] : memref<192x32xf32, #tpu.memory_space<vmem>>, vector<192x32xf32>
    %cst_127 = arith.constant dense<0.000000e+00> : vector<2x32xf32>
    %445 = tpu.matmul %443, %444, %cst_127 {dimension_numbers = #tpu.dot_dimension_numbers<[1], [0], [0], [1], [0, 0, 1, 1], [], []>} : vector<2x192xf32>, vector<192x32xf32>, vector<2x32xf32> -> vector<2x32xf32>
    %c0_128 = arith.constant 0 : index
    %c0_129 = arith.constant 0 : index
    %446 = vector.load %arg21[%c0_128, %c0_129] : memref<1x32xf32, #tpu.memory_space<vmem>>, vector<1x32xf32>
    %447 = vector.broadcast %446 : vector<1x32xf32> to vector<2x32xf32>
    %448 = arith.addf %445, %447 : vector<2x32xf32>
    %c0_130 = arith.constant 0 : index
    %c0_131 = arith.constant 0 : index
    %449 = vector.load %arg22[%c0_130, %c0_131] : memref<32x1xf32, #tpu.memory_space<vmem>>, vector<32x1xf32>
    %cst_132 = arith.constant dense<0.000000e+00> : vector<2x1xf32>
    %450 = tpu.matmul %448, %449, %cst_132 {dimension_numbers = #tpu.dot_dimension_numbers<[1], [0], [0], [1], [0, 0, 1, 1], [], []>} : vector<2x32xf32>, vector<32x1xf32>, vector<2x1xf32> -> vector<2x1xf32>
    %c0_133 = arith.constant 0 : index
    %c0_134 = arith.constant 0 : index
    %451 = vector.load %arg23[%c0_133, %c0_134] : memref<1x1xf32, #tpu.memory_space<vmem>>, vector<1x1xf32>
    %452 = vector.broadcast %451 : vector<1x1xf32> to vector<2x1xf32>
    %453 = arith.addf %450, %452 : vector<2x1xf32>
    %c0_135 = arith.constant 0 : index
    %c0_136 = arith.constant 0 : index
    %454 = vector.load %arg24[%c0_135, %c0_136] : memref<2x1xf32, #tpu.memory_space<vmem>>, vector<2x1xf32>
    tpu.vector_store %arg24[%c0_135, %c0_136], %453 {strides = array<i32>} : memref<2x1xf32, #tpu.memory_space<vmem>>, vector<2x1xf32>,
    return
  }
  func.func @transform_0(%arg0: i32) -> (i32, i32) {
    %c0_i32 = arith.constant 0 : i32
    %c0_i32_0 = arith.constant 0 : i32
    %c0_i32_1 = arith.constant 0 : i32
    return %c0_i32, %c0_i32_0 : i32, i32
  }
  func.func @transform_1(%arg0: i32) -> (i32, i32) {
    %c0_i32 = arith.constant 0 : i32
    %c0_i32_0 = arith.constant 0 : i32
    %c0_i32_1 = arith.constant 0 : i32
    return %c0_i32, %c0_i32_0 : i32, i32
  }
  func.func @transform_2(%arg0: i32) -> (i32, i32) {
    %c0_i32 = arith.constant 0 : i32
    %c0_i32_0 = arith.constant 0 : i32
    %c0_i32_1 = arith.constant 0 : i32
    return %c0_i32, %c0_i32_0 : i32, i32
  }
  func.func @transform_3(%arg0: i32) -> (i32, i32) {
    %c0_i32 = arith.constant 0 : i32
    %c0_i32_0 = arith.constant 0 : i32
    %c0_i32_1 = arith.constant 0 : i32
    return %c0_i32, %c0_i32_0 : i32, i32
  }
  func.func @transform_4(%arg0: i32) -> (i32, i32) {
    %c0_i32 = arith.constant 0 : i32
    %c0_i32_0 = arith.constant 0 : i32
    %c0_i32_1 = arith.constant 0 : i32
    return %c0_i32, %c0_i32_0 : i32, i32
  }
  func.func @transform_5(%arg0: i32) -> (i32, i32) {
    %c0_i32 = arith.constant 0 : i32
    %c0_i32_0 = arith.constant 0 : i32
    %c0_i32_1 = arith.constant 0 : i32
    return %c0_i32, %c0_i32_0 : i32, i32
  }
  func.func @transform_6(%arg0: i32) -> (i32, i32) {
    %c0_i32 = arith.constant 0 : i32
    %c0_i32_0 = arith.constant 0 : i32
    %c0_i32_1 = arith.constant 0 : i32
    return %c0_i32, %c0_i32_0 : i32, i32
  }
  func.func @transform_7(%arg0: i32) -> (i32, i32) {
    %c0_i32 = arith.constant 0 : i32
    %c0_i32_0 = arith.constant 0 : i32
    %c0_i32_1 = arith.constant 0 : i32
    return %c0_i32, %c0_i32_0 : i32, i32
  }
  func.func @transform_8(%arg0: i32) -> (i32, i32) {
    %c0_i32 = arith.constant 0 : i32
    %c0_i32_0 = arith.constant 0 : i32
    %c0_i32_1 = arith.constant 0 : i32
    return %c0_i32, %c0_i32_0 : i32, i32
  }
  func.func @transform_9(%arg0: i32) -> (i32, i32) {
    %c0_i32 = arith.constant 0 : i32
    %c0_i32_0 = arith.constant 0 : i32
    %c0_i32_1 = arith.constant 0 : i32
    return %c0_i32, %c0_i32_0 : i32, i32
  }
  func.func @transform_10(%arg0: i32) -> (i32, i32) {
    %c0_i32 = arith.constant 0 : i32
    %c0_i32_0 = arith.constant 0 : i32
    %c0_i32_1 = arith.constant 0 : i32
    return %c0_i32, %c0_i32_0 : i32, i32
  }
  func.func @transform_11(%arg0: i32) -> (i32, i32) {
    %c0_i32 = arith.constant 0 : i32
    %c0_i32_0 = arith.constant 0 : i32
    %c0_i32_1 = arith.constant 0 : i32
    return %c0_i32, %c0_i32_0 : i32, i32
  }
  func.func @transform_12(%arg0: i32) -> (i32, i32) {
    %c0_i32 = arith.constant 0 : i32
    %c0_i32_0 = arith.constant 0 : i32
    %c0_i32_1 = arith.constant 0 : i32
    return %c0_i32, %c0_i32_0 : i32, i32
  }
  func.func @transform_13(%arg0: i32) -> (i32, i32) {
    %c0_i32 = arith.constant 0 : i32
    %c0_i32_0 = arith.constant 0 : i32
    %c0_i32_1 = arith.constant 0 : i32
    return %c0_i32, %c0_i32_0 : i32, i32
  }
  func.func @transform_14(%arg0: i32) -> (i32, i32) {
    %c0_i32 = arith.constant 0 : i32
    %c0_i32_0 = arith.constant 0 : i32
    %c0_i32_1 = arith.constant 0 : i32
    return %c0_i32, %c0_i32_0 : i32, i32
  }
  func.func @transform_15(%arg0: i32) -> (i32, i32) {
    %c0_i32 = arith.constant 0 : i32
    %c0_i32_0 = arith.constant 0 : i32
    %c0_i32_1 = arith.constant 0 : i32
    return %c0_i32, %c0_i32_0 : i32, i32
  }
  func.func @transform_16(%arg0: i32) -> (i32, i32) {
    %c0_i32 = arith.constant 0 : i32
    %c0_i32_0 = arith.constant 0 : i32
    %c0_i32_1 = arith.constant 0 : i32
    return %c0_i32, %c0_i32_0 : i32, i32
  }
  func.func @transform_17(%arg0: i32) -> (i32, i32) {
    %c0_i32 = arith.constant 0 : i32
    %c0_i32_0 = arith.constant 0 : i32
    %c0_i32_1 = arith.constant 0 : i32
    return %c0_i32, %c0_i32_0 : i32, i32
  }
  func.func @transform_18(%arg0: i32) -> (i32, i32) {
    %c0_i32 = arith.constant 0 : i32
    %c0_i32_0 = arith.constant 0 : i32
    %c0_i32_1 = arith.constant 0 : i32
    return %c0_i32, %c0_i32_0 : i32, i32
  }
  func.func @transform_19(%arg0: i32) -> (i32, i32) {
    %c0_i32 = arith.constant 0 : i32
    %c0_i32_0 = arith.constant 0 : i32
    %c0_i32_1 = arith.constant 0 : i32
    return %c0_i32, %c0_i32_0 : i32, i32
  }
  func.func @transform_20(%arg0: i32) -> (i32, i32) {
    %c0_i32 = arith.constant 0 : i32
    %c0_i32_0 = arith.constant 0 : i32
    %c0_i32_1 = arith.constant 0 : i32
    return %c0_i32, %c0_i32_0 : i32, i32
  }
  func.func @transform_21(%arg0: i32) -> (i32, i32) {
    %c0_i32 = arith.constant 0 : i32
    %c0_i32_0 = arith.constant 0 : i32
    %c0_i32_1 = arith.constant 0 : i32
    return %c0_i32, %c0_i32_0 : i32, i32
  }
  func.func @transform_22(%arg0: i32) -> (i32, i32) {
    %c0_i32 = arith.constant 0 : i32
    %c0_i32_0 = arith.constant 0 : i32
    %c0_i32_1 = arith.constant 0 : i32
    return %c0_i32, %c0_i32_0 : i32, i32
  }
  func.func @transform_23(%arg0: i32) -> (i32, i32) {
    %c0_i32 = arith.constant 0 : i32
    %c0_i32_0 = arith.constant 0 : i32
    %c0_i32_1 = arith.constant 0 : i32
    return %c0_i32, %c0_i32_0 : i32, i32
  }
}

</mosaic_0001>

<llo_original>
// kernel: transformer_bilstm_forward.1
$region0: #{transformer_bilstm_forward.1}
  #allocation0 [shape = 'u32[]', space=smem, size = 0x4, offset = 0x4, fixed_abs, tag = 'smem constant byte address 0x4 - core index']
  #allocation1 [shape = 'u32[72,128]{1,0:T(1,128)}', space=vmem, size = 0x9000, scoped, tag = 'internal scratch']
  #allocation2 [shape = 'f32[1,1]{1,0:T(1,128)S(1)}', space=vmem, size = 0x200, scoped, tag = 'scoped memory for transformer_bilstm_forward.1']
  %s0 = inlined_call_operand.vmem [shape: f32[6,16], index: 0, kind: input, shape index: {}]
  %s1 = inlined_call_operand.vmem [shape: f32[16,48], index: 1, kind: input, shape index: {}]
  %s2 = inlined_call_operand.vmem [shape: f32[1,48], index: 2, kind: input, shape index: {}]
  %s3 = inlined_call_operand.hbm [shape: f32[16,16], index: 3, kind: input, shape index: {}]
  %s4 = inlined_call_operand.hbm [shape: f32[1,16], index: 4, kind: input, shape index: {}]
  %s5 = inlined_call_operand.hbm [shape: f32[1,16], index: 5, kind: input, shape index: {}]
  %s6 = inlined_call_operand.hbm [shape: f32[1,16], index: 6, kind: input, shape index: {}]
  %s7 = inlined_call_operand.hbm [shape: f32[1,16], index: 7, kind: input, shape index: {}]
  %s8 = inlined_call_operand.hbm [shape: f32[1,16], index: 8, kind: input, shape index: {}]
  %s9 = inlined_call_operand.hbm [shape: f32[16,32], index: 9, kind: input, shape index: {}]
  %s10 = inlined_call_operand.hbm [shape: f32[1,32], index: 10, kind: input, shape index: {}]
  %s11 = inlined_call_operand.vmem [shape: f32[32,16], index: 11, kind: input, shape index: {}]
  %s12 = inlined_call_operand.hbm [shape: f32[1,16], index: 12, kind: input, shape index: {}]
  %s13 = inlined_call_operand.vmem [shape: f32[16,256], index: 13, kind: input, shape index: {}]
  %s14 = inlined_call_operand.vmem [shape: f32[64,256], index: 14, kind: input, shape index: {}]
  %s15 = inlined_call_operand.hbm [shape: f32[1,256], index: 15, kind: input, shape index: {}]
  %s16 = inlined_call_operand.vmem [shape: f32[64,256], index: 16, kind: input, shape index: {}]
  %s17 = inlined_call_operand.hbm [shape: f32[64,256], index: 17, kind: input, shape index: {}]
  %s18 = inlined_call_operand.hbm [shape: f32[1,256], index: 18, kind: input, shape index: {}]
  %s19 = inlined_call_operand.vmem [shape: f32[192,32], index: 19, kind: input, shape index: {}]
  %s20 = inlined_call_operand.hbm [shape: f32[1,32], index: 20, kind: input, shape index: {}]
  %s21 = inlined_call_operand.vmem [shape: f32[32,1], index: 21, kind: input, shape index: {}]
  %s22 = inlined_call_operand.<no memory space> [shape: f32[1,1], index: 22, kind: input, shape index: {}]
  %s23 = inlined_call_operand.vmem [shape: f32[2,1], index: 23, kind: output, shape index: {}]
  %s24 = sld [smem:[#allocation0]]
  $region154: #{transformer_bilstm_forward.1} parent=0
    _
  %s26 = ssub.s32 1, %s24
  %s27 = scalar_select 0, %s26, %s24
  %v28 = vstv %s22
  %29 = vst [vmem:[#allocation2] sm:$0x1] %v28
  $region1: #{transformer_bilstm_forward.1} parent=0
    #allocation3 [shape = 'u8[8192]{0}', space=vmem, size = 0x2000, scoped, tag = 'input window, operand 3, single buffered']
    #allocation4 [shape = 's32[1]{0}', space=sflag, size = 0x4, scoped, tag = 'scoped memory for transformer_bilstm_forward.1']
    #allocation5 [shape = 'u8[512]{0}', space=vmem, size = 0x400, scoped, tag = 'input window, operand 4, single buffered']
    #allocation6 [shape = 's32[1]{0}', space=sflag, size = 0x4, scoped, tag = 'scoped memory for transformer_bilstm_forward.1']
    #allocation7 [shape = 'u8[512]{0}', space=vmem, size = 0x400, scoped, tag = 'input window, operand 5, single buffered']
    #allocation8 [shape = 'u8[512]{0}', space=vmem, size = 0x400, scoped, tag = 'input window, operand 6, single buffered']
    #allocation9 [shape = 's32[1]{0}', space=sflag, size = 0x4, scoped, tag = 'scoped memory for transformer_bilstm_forward.1']
    #allocation10 [shape = 'u8[512]{0}', space=vmem, size = 0x400, scoped, tag = 'input window, operand 7, single buffered']
    #allocation11 [shape = 'u8[512]{0}', space=vmem, size = 0x400, scoped, tag = 'input window, operand 8, single buffered']
    #allocation12 [shape = 's32[1]{0}', space=sflag, size = 0x4, scoped, tag = 'scoped memory for transformer_bilstm_forward.1']
    #allocation13 [shape = 'u8[8192]{0}', space=vmem, size = 0x2000, scoped, tag = 'input window, operand 9, single buffered']
    #allocation14 [shape = 'u8[512]{0}', space=vmem, size = 0x400, scoped, tag = 'input window, operand 10, single buffered']
    #allocation15 [shape = 's32[1]{0}', space=sflag, size = 0x4, scoped, tag = 'scoped memory for transformer_bilstm_forward.1']
    #allocation16 [shape = 'u8[512]{0}', space=vmem, size = 0x400, scoped, tag = 'input window, operand 12, single buffered']
    #allocation17 [shape = 'u8[1024]{0}', space=vmem, size = 0x400, scoped, tag = 'input window, operand 15, single buffered']
    #allocation18 [shape = 's32[1]{0}', space=sflag, size = 0x4, scoped, tag = 'scoped memory for transformer_bilstm_forward.1']
    #allocation19 [shape = 'u8[65536]{0}', space=vmem, size = 0x10000, scoped, tag = 'input window, operand 17, single buffered']
    #allocation20 [shape = 'u8[1024]{0}', space=vmem, size = 0x400, scoped, tag = 'input window, operand 18, single buffered']
    #allocation21 [shape = 's32[1]{0}', space=sflag, size = 0x4, scoped, tag = 'scoped memory for transformer_bilstm_forward.1']
    #allocation22 [shape = 'u8[512]{0}', space=vmem, size = 0x400, scoped, tag = 'input window, operand 20, single buffered']
    %30 = vsyncpa [#allocation4], 0
    %31 = vsyncpa [#allocation6], 0
    %32 = vsyncpa [#allocation9], 0
    %33 = vsyncpa [#allocation12], 0
    %34 = vsyncpa [#allocation15], 0
    %35 = vsyncpa [#allocation18], 0
    %36 = vsyncpa [#allocation21], 0
    // Predicated region
    $region2: #{transformer_bilstm_forward.1} parent=1 // pred_check
      _
    $region3: #{transformer_bilstm_forward.1} parent=1 // pred_check_branch
      %38 = sbr.rel (0) target = $region5
    $region4: #{transformer_bilstm_forward.1} parent=1 // pred_region
      _
    $region5: #{transformer_bilstm_forward.1} parent=1 // pred_fallthru
      _
    // Predicated region
    $region6: #{transformer_bilstm_forward.1} parent=1 // pred_check
      _
    $region7: #{transformer_bilstm_forward.1} parent=1 // pred_check_branch
      %40 = sbr.rel (0) target = $region9
    $region8: #{transformer_bilstm_forward.1} parent=1 // pred_region
      _
    $region9: #{transformer_bilstm_forward.1} parent=1 // pred_fallthru
      _
    // Predicated region
    $region10: #{transformer_bilstm_forward.1} parent=1 // pred_check
      _
    $region11: #{transformer_bilstm_forward.1} parent=1 // pred_check_branch
      %42 = sbr.rel (0) target = $region13
    $region12: #{transformer_bilstm_forward.1} parent=1 // pred_region
      _
    $region13: #{transformer_bilstm_forward.1} parent=1 // pred_fallthru
      _
    // Predicated region
    $region14: #{transformer_bilstm_forward.1} parent=1 // pred_check
      _
    $region15: #{transformer_bilstm_forward.1} parent=1 // pred_check_branch
      %44 = sbr.rel (0) target = $region17
    $region16: #{transformer_bilstm_forward.1} parent=1 // pred_region
      %46 = vsyncadd [#allocation4], 0
      %s47 = sshll.u32 %s3, 4
      %s48 = int_to_ptr.hbm [resolvable:$true] %s47
      %s49 = sshll.u32 [#allocation3], 4
      %s50 = int_to_ptr.vmem [resolvable:$true] %s49
      %55 = dma.hbm_to_vmem [thread:$0]  %s48, 256, %s50, [#allocation4], 128, 128, 8
    $region17: #{transformer_bilstm_forward.1} parent=1 // pred_fallthru
      _
    // Predicated region
    $region18: #{transformer_bilstm_forward.1} parent=1 // pred_check
      _
    $region19: #{transformer_bilstm_forward.1} parent=1 // pred_check_branch
      %57 = sbr.rel (0) target = $region21
    $region20: #{transformer_bilstm_forward.1} parent=1 // pred_region
      %59 = vsyncadd [#allocation6], 0
      %s61 = sshll.u32 %s4, 4
      %s62 = int_to_ptr.hbm [resolvable:$true] %s61
      %s63 = sshll.u32 [#allocation5], 4
      %s64 = int_to_ptr.vmem [resolvable:$true] %s63
      %66 = dma.hbm_to_vmem [thread:$0]  %s62, 16, %s64, [#allocation6]
    $region21: #{transformer_bilstm_forward.1} parent=1 // pred_fallthru
      _
    // Predicated region
    $region22: #{transformer_bilstm_forward.1} parent=1 // pred_check
      _
    $region23: #{transformer_bilstm_forward.1} parent=1 // pred_check_branch
      %68 = sbr.rel (0) target = $region25
    $region24: #{transformer_bilstm_forward.1} parent=1 // pred_region
      %70 = vsyncadd [#allocation6], 0
      %s72 = sshll.u32 %s5, 4
      %s73 = int_to_ptr.hbm [resolvable:$true] %s72
      %s74 = sshll.u32 [#allocation7], 4
      %s75 = int_to_ptr.vmem [resolvable:$true] %s74
      %77 = dma.hbm_to_vmem [thread:$0]  %s73, 16, %s75, [#allocation6]
    $region25: #{transformer_bilstm_forward.1} parent=1 // pred_fallthru
      _
    // Predicated region
    $region26: #{transformer_bilstm_forward.1} parent=1 // pred_check
      _
    $region27: #{transformer_bilstm_forward.1} parent=1 // pred_check_branch
      %79 = sbr.rel (0) target = $region29
    $region28: #{transformer_bilstm_forward.1} parent=1 // pred_region
      %81 = vsyncadd [#allocation9], 0
      %s83 = sshll.u32 %s6, 4
      %s84 = int_to_ptr.hbm [resolvable:$true] %s83
      %s85 = sshll.u32 [#allocation8], 4
      %s86 = int_to_ptr.vmem [resolvable:$true] %s85
      %88 = dma.hbm_to_vmem [thread:$0]  %s84, 16, %s86, [#allocation9]
    $region29: #{transformer_bilstm_forward.1} parent=1 // pred_fallthru
      _
    // Predicated region
    $region30: #{transformer_bilstm_forward.1} parent=1 // pred_check
      _
    $region31: #{transformer_bilstm_forward.1} parent=1 // pred_check_branch
      %90 = sbr.rel (0) target = $region33
    $region32: #{transformer_bilstm_forward.1} parent=1 // pred_region
      %92 = vsyncadd [#allocation9], 0
      %s94 = sshll.u32 %s7, 4
      %s95 = int_to_ptr.hbm [resolvable:$true] %s94
      %s96 = sshll.u32 [#allocation10], 4
      %s97 = int_to_ptr.vmem [resolvable:$true] %s96
      %99 = dma.hbm_to_vmem [thread:$0]  %s95, 16, %s97, [#allocation9]
    $region33: #{transformer_bilstm_forward.1} parent=1 // pred_fallthru
      _
    // Predicated region
    $region34: #{transformer_bilstm_forward.1} parent=1 // pred_check
      _
    $region35: #{transformer_bilstm_forward.1} parent=1 // pred_check_branch
      %101 = sbr.rel (0) target = $region37
    $region36: #{transformer_bilstm_forward.1} parent=1 // pred_region
      %103 = vsyncadd [#allocation12], 0
      %s105 = sshll.u32 %s8, 4
      %s106 = int_to_ptr.hbm [resolvable:$true] %s105
      %s107 = sshll.u32 [#allocation11], 4
      %s108 = int_to_ptr.vmem [resolvable:$true] %s107
      %110 = dma.hbm_to_vmem [thread:$0]  %s106, 16, %s108, [#allocation12]
    $region37: #{transformer_bilstm_forward.1} parent=1 // pred_fallthru
      _
    // Predicated region
    $region38: #{transformer_bilstm_forward.1} parent=1 // pred_check
      _
    $region39: #{transformer_bilstm_forward.1} parent=1 // pred_check_branch
      %112 = sbr.rel (0) target = $region41
    $region40: #{transformer_bilstm_forward.1} parent=1 // pred_region
      %114 = vsyncadd [#allocation12], 0
      %s115 = sshll.u32 %s9, 4
      %s116 = int_to_ptr.hbm [resolvable:$true] %s115
      %s117 = sshll.u32 [#allocation13], 4
      %s118 = int_to_ptr.vmem [resolvable:$true] %s117
      %123 = dma.hbm_to_vmem [thread:$0]  %s116, 256, %s118, [#allocation12], 128, 128, 8
    $region41: #{transformer_bilstm_forward.1} parent=1 // pred_fallthru
      _
    // Predicated region
    $region42: #{transformer_bilstm_forward.1} parent=1 // pred_check
      _
    $region43: #{transformer_bilstm_forward.1} parent=1 // pred_check_branch
      %125 = sbr.rel (0) target = $region45
    $region44: #{transformer_bilstm_forward.1} parent=1 // pred_region
      %127 = vsyncadd [#allocation15], 0
      %s129 = sshll.u32 %s10, 4
      %s130 = int_to_ptr.hbm [resolvable:$true] %s129
      %s131 = sshll.u32 [#allocation14], 4
      %s132 = int_to_ptr.vmem [resolvable:$true] %s131
      %134 = dma.hbm_to_vmem [thread:$0]  %s130, 16, %s132, [#allocation15]
    $region45: #{transformer_bilstm_forward.1} parent=1 // pred_fallthru
      _
    // Predicated region
    $region46: #{transformer_bilstm_forward.1} parent=1 // pred_check
      _
    $region47: #{transformer_bilstm_forward.1} parent=1 // pred_check_branch
      %136 = sbr.rel (0) target = $region49
    $region48: #{transformer_bilstm_forward.1} parent=1 // pred_region
      _
    $region49: #{transformer_bilstm_forward.1} parent=1 // pred_fallthru
      _
    // Predicated region
    $region50: #{transformer_bilstm_forward.1} parent=1 // pred_check
      _
    $region51: #{transformer_bilstm_forward.1} parent=1 // pred_check_branch
      %138 = sbr.rel (0) target = $region53
    $region52: #{transformer_bilstm_forward.1} parent=1 // pred_region
      %140 = vsyncadd [#allocation15], 0
      %s142 = sshll.u32 %s12, 4
      %s143 = int_to_ptr.hbm [resolvable:$true] %s142
      %s144 = sshll.u32 [#allocation16], 4
      %s145 = int_to_ptr.vmem [resolvable:$true] %s144
      %147 = dma.hbm_to_vmem [thread:$0]  %s143, 16, %s145, [#allocation15]
    $region53: #{transformer_bilstm_forward.1} parent=1 // pred_fallthru
      _
    // Predicated region
    $region54: #{transformer_bilstm_forward.1} parent=1 // pred_check
      _
    $region55: #{transformer_bilstm_forward.1} parent=1 // pred_check_branch
      %149 = sbr.rel (0) target = $region57
    $region56: #{transformer_bilstm_forward.1} parent=1 // pred_region
      _
    $region57: #{transformer_bilstm_forward.1} parent=1 // pred_fallthru
      _
    // Predicated region
    $region58: #{transformer_bilstm_forward.1} parent=1 // pred_check
      _
    $region59: #{transformer_bilstm_forward.1} parent=1 // pred_check_branch
      %151 = sbr.rel (0) target = $region61
    $region60: #{transformer_bilstm_forward.1} parent=1 // pred_region
      _
    $region61: #{transformer_bilstm_forward.1} parent=1 // pred_fallthru
      _
    // Predicated region
    $region62: #{transformer_bilstm_forward.1} parent=1 // pred_check
      _
    $region63: #{transformer_bilstm_forward.1} parent=1 // pred_check_branch
      %153 = sbr.rel (0) target = $region65
    $region64: #{transformer_bilstm_forward.1} parent=1 // pred_region
      %155 = vsyncadd [#allocation18], 0
      %s157 = sshll.u32 %s15, 4
      %s158 = int_to_ptr.hbm [resolvable:$true] %s157
      %s159 = sshll.u32 [#allocation17], 4
      %s160 = int_to_ptr.vmem [resolvable:$true] %s159
      %162 = dma.hbm_to_vmem [thread:$0]  %s158, 32, %s160, [#allocation18]
    $region65: #{transformer_bilstm_forward.1} parent=1 // pred_fallthru
      _
    // Predicated region
    $region66: #{transformer_bilstm_forward.1} parent=1 // pred_check
      _
    $region67: #{transformer_bilstm_forward.1} parent=1 // pred_check_branch
      %164 = sbr.rel (0) target = $region69
    $region68: #{transformer_bilstm_forward.1} parent=1 // pred_region
      _
    $region69: #{transformer_bilstm_forward.1} parent=1 // pred_fallthru
      _
    // Predicated region
    $region70: #{transformer_bilstm_forward.1} parent=1 // pred_check
      _
    $region71: #{transformer_bilstm_forward.1} parent=1 // pred_check_branch
      %166 = sbr.rel (0) target = $region73
    $region72: #{transformer_bilstm_forward.1} parent=1 // pred_region
      %168 = vsyncadd [#allocation18], 0
      %s169 = sshll.u32 %s17, 4
      %s170 = int_to_ptr.hbm [resolvable:$true] %s169
      %s171 = sshll.u32 [#allocation19], 4
      %s172 = int_to_ptr.vmem [resolvable:$true] %s171
      %177 = dma.hbm_to_vmem [thread:$0]  %s170, 2048, %s172, [#allocation18], 256, 256, 16
    $region73: #{transformer_bilstm_forward.1} parent=1 // pred_fallthru
      _
    // Predicated region
    $region74: #{transformer_bilstm_forward.1} parent=1 // pred_check
      _
    $region75: #{transformer_bilstm_forward.1} parent=1 // pred_check_branch
      %179 = sbr.rel (0) target = $region77
    $region76: #{transformer_bilstm_forward.1} parent=1 // pred_region
      %181 = vsyncadd [#allocation21], 0
      %s183 = sshll.u32 %s18, 4
      %s184 = int_to_ptr.hbm [resolvable:$true] %s183
      %s185 = sshll.u32 [#allocation20], 4
      %s186 = int_to_ptr.vmem [resolvable:$true] %s185
      %188 = dma.hbm_to_vmem [thread:$0]  %s184, 32, %s186, [#allocation21]
    $region77: #{transformer_bilstm_forward.1} parent=1 // pred_fallthru
      _
    // Predicated region
    $region78: #{transformer_bilstm_forward.1} parent=1 // pred_check
      _
    $region79: #{transformer_bilstm_forward.1} parent=1 // pred_check_branch
      %190 = sbr.rel (0) target = $region81
    $region80: #{transformer_bilstm_forward.1} parent=1 // pred_region
      _
    $region81: #{transformer_bilstm_forward.1} parent=1 // pred_fallthru
      _
    // Predicated region
    $region82: #{transformer_bilstm_forward.1} parent=1 // pred_check
      _
    $region83: #{transformer_bilstm_forward.1} parent=1 // pred_check_branch
      %192 = sbr.rel (0) target = $region85
    $region84: #{transformer_bilstm_forward.1} parent=1 // pred_region
      %194 = vsyncadd [#allocation21], 0
      %s196 = sshll.u32 %s20, 4
      %s197 = int_to_ptr.hbm [resolvable:$true] %s196
      %s198 = sshll.u32 [#allocation22], 4
      %s199 = int_to_ptr.vmem [resolvable:$true] %s198
      %201 = dma.hbm_to_vmem [thread:$0]  %s197, 16, %s199, [#allocation21]
    $region85: #{transformer_bilstm_forward.1} parent=1 // pred_fallthru
      _
    // Predicated region
    $region86: #{transformer_bilstm_forward.1} parent=1 // pred_check
      _
    $region87: #{transformer_bilstm_forward.1} parent=1 // pred_check_branch
      %203 = sbr.rel (0) target = $region89
    $region88: #{transformer_bilstm_forward.1} parent=1 // pred_region
      _
    $region89: #{transformer_bilstm_forward.1} parent=1 // pred_fallthru
      _
    // Predicated region
    $region90: #{transformer_bilstm_forward.1} parent=1 // pred_check
      _
    $region91: #{transformer_bilstm_forward.1} parent=1 // pred_check_branch
      %205 = sbr.rel (0) target = $region93
    $region92: #{transformer_bilstm_forward.1} parent=1 // pred_region
      _
    $region93: #{transformer_bilstm_forward.1} parent=1 // pred_fallthru
      _
    // Predicated region
    $region94: #{transformer_bilstm_forward.1} parent=1 // pred_check
      _
    $region95: #{transformer_bilstm_forward.1} parent=1 // pred_check_branch
      %207 = sbr.rel (0) target = $region97
    $region96: #{transformer_bilstm_forward.1} parent=1 // pred_region
      %209 = dma.done [#allocation4], 256
    $region97: #{transformer_bilstm_forward.1} parent=1 // pred_fallthru
      _
    // Predicated region
    $region98: #{transformer_bilstm_forward.1} parent=1 // pred_check
      _
    $region99: #{transformer_bilstm_forward.1} parent=1 // pred_check_branch
      %211 = sbr.rel (0) target = $region101
    $region100: #{transformer_bilstm_forward.1} parent=1 // pred_region
      %213 = dma.done [#allocation6], 16
    $region101: #{transformer_bilstm_forward.1} parent=1 // pred_fallthru
      _
    // Predicated region
    $region102: #{transformer_bilstm_forward.1} parent=1 // pred_check
      _
    $region103: #{transformer_bilstm_forward.1} parent=1 // pred_check_branch
      %215 = sbr.rel (0) target = $region105
    $region104: #{transformer_bilstm_forward.1} parent=1 // pred_region
      %217 = dma.done [#allocation6], 16
    $region105: #{transformer_bilstm_forward.1} parent=1 // pred_fallthru
      _
    // Predicated region
    $region106: #{transformer_bilstm_forward.1} parent=1 // pred_check
      _
    $region107: #{transformer_bilstm_forward.1} parent=1 // pred_check_branch
      %219 = sbr.rel (0) target = $region109
    $region108: #{transformer_bilstm_forward.1} parent=1 // pred_region
      %221 = dma.done [#allocation9], 16
    $region109: #{transformer_bilstm_forward.1} parent=1 // pred_fallthru
      _
    // Predicated region
    $region110: #{transformer_bilstm_forward.1} parent=1 // pred_check
      _
    $region111: #{transformer_bilstm_forward.1} parent=1 // pred_check_branch
      %223 = sbr.rel (0) target = $region113
    $region112: #{transformer_bilstm_forward.1} parent=1 // pred_region
      %225 = dma.done [#allocation9], 16
    $region113: #{transformer_bilstm_forward.1} parent=1 // pred_fallthru
      _
    // Predicated region
    $region114: #{transformer_bilstm_forward.1} parent=1 // pred_check
      _
    $region115: #{transformer_bilstm_forward.1} parent=1 // pred_check_branch
      %227 = sbr.rel (0) target = $region117
    $region116: #{transformer_bilstm_forward.1} parent=1 // pred_region
      %229 = dma.done [#allocation12], 16
    $region117: #{transformer_bilstm_forward.1} parent=1 // pred_fallthru
      _
    // Predicated region
    $region118: #{transformer_bilstm_forward.1} parent=1 // pred_check
      _
    $region119: #{transformer_bilstm_forward.1} parent=1 // pred_check_branch
      %231 = sbr.rel (0) target = $region121
    $region120: #{transformer_bilstm_forward.1} parent=1 // pred_region
      %233 = dma.done [#allocation12], 256
    $region121: #{transformer_bilstm_forward.1} parent=1 // pred_fallthru
      _
    // Predicated region
    $region122: #{transformer_bilstm_forward.1} parent=1 // pred_check
      _
    $region123: #{transformer_bilstm_forward.1} parent=1 // pred_check_branch
      %235 = sbr.rel (0) target = $region125
    $region124: #{transformer_bilstm_forward.1} parent=1 // pred_region
      %237 = dma.done [#allocation15], 16
    $region125: #{transformer_bilstm_forward.1} parent=1 // pred_fallthru
      _
    // Predicated region
    $region126: #{transformer_bilstm_forward.1} parent=1 // pred_check
      _
    $region127: #{transformer_bilstm_forward.1} parent=1 // pred_check_branch
      %239 = sbr.rel (0) target = $region129
    $region128: #{transformer_bilstm_forward.1} parent=1 // pred_region
      %241 = dma.done [#allocation15], 16
    $region129: #{transformer_bilstm_forward.1} parent=1 // pred_fallthru
      _
    // Predicated region
    $region130: #{transformer_bilstm_forward.1} parent=1 // pred_check
      _
    $region131: #{transformer_bilstm_forward.1} parent=1 // pred_check_branch
      %243 = sbr.rel (0) target = $region133
    $region132: #{transformer_bilstm_forward.1} parent=1 // pred_region
      %245 = dma.done [#allocation18], 32
    $region133: #{transformer_bilstm_forward.1} parent=1 // pred_fallthru
      _
    // Predicated region
    $region134: #{transformer_bilstm_forward.1} parent=1 // pred_check
      _
    $region135: #{transformer_bilstm_forward.1} parent=1 // pred_check_branch
      %247 = sbr.rel (0) target = $region137
    $region136: #{transformer_bilstm_forward.1} parent=1 // pred_region
      %249 = dma.done [#allocation18], 2048
    $region137: #{transformer_bilstm_forward.1} parent=1 // pred_fallthru
      _
    // Predicated region
    $region138: #{transformer_bilstm_forward.1} parent=1 // pred_check
      _
    $region139: #{transformer_bilstm_forward.1} parent=1 // pred_check_branch
      %251 = sbr.rel (0) target = $region141
    $region140: #{transformer_bilstm_forward.1} parent=1 // pred_region
      %253 = dma.done [#allocation21], 32
    $region141: #{transformer_bilstm_forward.1} parent=1 // pred_fallthru
      _
    // Predicated region
    $region142: #{transformer_bilstm_forward.1} parent=1 // pred_check
      _
    $region143: #{transformer_bilstm_forward.1} parent=1 // pred_check_branch
      %255 = sbr.rel (0) target = $region145
    $region144: #{transformer_bilstm_forward.1} parent=1 // pred_region
      %257 = dma.done [#allocation21], 16
    $region145: #{transformer_bilstm_forward.1} parent=1 // pred_fallthru
      _
    %v258 = vld [vmem:[%s0] sm:$0x3f]
    %v259 = vld [vmem:[%s1] sm:$0xff]
    %v260 = vld [vmem:[%s1 + $0x8] sm:$0xff]
    %v261 = vld [vmem:[%s2] sm:$0x1]
    %v263 = vperm.slane %v261, 0
    %vm265 = vcmask 130048
    %v267 = vsel %vm265, %v258, 0
    %269 = vmatpush.msra.mxu0 0.0
    %270 = vmatpush.msra.mxu0 0.0
    %271 = vmatpush.msra.mxu0 0.0
    %272 = vmatpush.msra.mxu0 0.0
    %273 = vmatpush.msra.mxu0 0.0
    %274 = vmatpush.msra.mxu0 0.0
    %275 = vmatpush.msra.mxu0 0.0
    %276 = vmatpush.msra.mxu0 0.0
    %277 = vmatpush.msra.mxu0 0.0
    %278 = vmatpush.msra.mxu0 0.0
    %279 = vmatpush.msra.mxu0 0.0
    %280 = vmatpush.msra.mxu0 0.0
    %281 = vmatpush.msra.mxu0 0.0
    %282 = vmatpush.msra.mxu0 0.0
    %283 = vmatpush.msra.mxu0 %v260
    %284 = vmatpush.msra.mxu0 %v259
    %285 = vmatmul.f32.gmra.mxu0 %v267
    %v286 = vpop.f32.mrf.mxu0
    %v287 = vadd.f32 %v263, %v286
    %288 = vdwg.mxu0
    %290 = vrot.lane.b32.xlu0 %v287, 112
    %v291 = vpop.permute.xlu0 %290
    %vm292 = vcmask 31744
    %v293 = vsel %vm292, %v287, 0
    %v295 = vsel %vm292, %v291, 0
    %297 = vmatpush.xpose.msra.mxu0 0.0
    %298 = vmatpush.xpose.msra.mxu0 0.0
    %299 = vmatpush.xpose.msra.mxu0 0.0
    %300 = vmatpush.xpose.msra.mxu0 0.0
    %301 = vmatpush.xpose.msra.mxu0 0.0
    %302 = vmatpush.xpose.msra.mxu0 0.0
    %303 = vmatpush.xpose.msra.mxu0 0.0
    %304 = vmatpush.xpose.msra.mxu0 0.0
    %305 = vmatpush.xpose.msra.mxu0 0.0
    %306 = vmatpush.xpose.msra.mxu0 0.0
    %307 = vmatpush.xpose.msra.mxu0 0.0
    %308 = vmatpush.xpose.msra.mxu0 0.0
    %309 = vmatpush.xpose.msra.mxu0 0.0
    %310 = vmatpush.xpose.msra.mxu0 0.0
    %311 = vmatpush.xpose.msra.mxu0 0.0
    %312 = vmatpush.xpose.msra.mxu0 %v295
    %313 = vmatmul.f32.gmra.mxu0 %v293
    %v314 = vpop.f32.mrf.mxu0
    %v315 = vadd.f32 0.0, %v314
    %316 = vdwg.mxu0
    %v317 = vmul.f32 %v315, 0.5
    %vm318 = vcmask 18432
    %v319 = vsel %vm318, %v317, -inf
    %320 = vmax.xlane.f32.xlu0 %v319
    %v321 = vpop.xlane.xlu0 %320
    %v322 = vsub.f32 %v317, %v321
    %v323 = vmul.f32 %v322, 1.442695
    %v324 = vpow.pop %v323
    %v325 = vsel %vm318, %v324, 0.0
    %326 = vadd.xlane.f32.xlu0 %v325
    %v327 = vpop.xlane.xlu0 %326
    %v328 = vrcp.pop %v327
    %v329 = vmul.f32 %v324, %v328
    %330 = vrot.lane.b32.xlu0 %v287, 96
    %v331 = vpop.permute.xlu0 %330
    %vm332 = vcmask 23552
    %v334 = vsel %vm332, %v329, 0
    %vm336 = vcmask 1042432
    %v337 = vsel %vm336, %v331, 0
    %339 = vmatpush.msra.mxu0 0.0
    %340 = vmatpush.msra.mxu0 0.0
    %341 = vmatpush.msra.mxu0 0.0
    %342 = vmatpush.msra.mxu0 0.0
    %343 = vmatpush.msra.mxu0 0.0
    %344 = vmatpush.msra.mxu0 0.0
    %345 = vmatpush.msra.mxu0 0.0
    %346 = vmatpush.msra.mxu0 0.0
    %347 = vmatpush.msra.mxu0 0.0
    %348 = vmatpush.msra.mxu0 0.0
    %349 = vmatpush.msra.mxu0 0.0
    %350 = vmatpush.msra.mxu0 0.0
    %351 = vmatpush.msra.mxu0 0.0
    %352 = vmatpush.msra.mxu0 0.0
    %353 = vmatpush.msra.mxu0 0.0
    %354 = vmatpush.msra.mxu0 %v337
    %355 = vmatmul.f32.gmra.mxu0 %v334
    %v356 = vpop.f32.mrf.mxu0
    %v357 = vadd.f32 0.0, %v356
    %358 = vdwg.mxu0
    %359 = vrot.lane.b32.xlu0 %v287, 124
    %v360 = vpop.permute.xlu0 %359
    %361 = vrot.lane.b32.xlu0 %v287, 108
    %v362 = vpop.permute.xlu0 %361
    %v363 = vsel %vm292, %v360, 0
    %v365 = vsel %vm292, %v362, 0
    %367 = vmatpush.xpose.msra.mxu0 0.0
    %368 = vmatpush.xpose.msra.mxu0 0.0
    %369 = vmatpush.xpose.msra.mxu0 0.0
    %370 = vmatpush.xpose.msra.mxu0 0.0
    %371 = vmatpush.xpose.msra.mxu0 0.0
    %372 = vmatpush.xpose.msra.mxu0 0.0
    %373 = vmatpush.xpose.msra.mxu0 0.0
    %374 = vmatpush.xpose.msra.mxu0 0.0
    %375 = vmatpush.xpose.msra.mxu0 0.0
    %376 = vmatpush.xpose.msra.mxu0 0.0
    %377 = vmatpush.xpose.msra.mxu0 0.0
    %378 = vmatpush.xpose.msra.mxu0 0.0
    %379 = vmatpush.xpose.msra.mxu0 0.0
    %380 = vmatpush.xpose.msra.mxu0 0.0
    %381 = vmatpush.xpose.msra.mxu0 0.0
    %382 = vmatpush.xpose.msra.mxu0 %v365
    %383 = vmatmul.f32.gmra.mxu0 %v363
    %v384 = vpop.f32.mrf.mxu0
    %v385 = vadd.f32 0.0, %v384
    %386 = vdwg.mxu0
    %v387 = vmul.f32 %v385, 0.5
    %v388 = vsel %vm318, %v387, -inf
    %389 = vmax.xlane.f32.xlu0 %v388
    %v390 = vpop.xlane.xlu0 %389
    %v391 = vsub.f32 %v387, %v390
    %v392 = vmul.f32 %v391, 1.442695
    %v393 = vpow.pop %v392
    %v394 = vsel %vm318, %v393, 0.0
    %395 = vadd.xlane.f32.xlu0 %v394
    %v396 = vpop.xlane.xlu0 %395
    %v397 = vrcp.pop %v396
    %v398 = vmul.f32 %v393, %v397
    %399 = vrot.lane.b32.xlu0 %v287, 92
    %v400 = vpop.permute.xlu0 %399
    %v402 = vsel %vm332, %v398, 0
    %v404 = vsel %vm336, %v400, 0
    %406 = vmatpush.msra.mxu0 0.0
    %407 = vmatpush.msra.mxu0 0.0
    %408 = vmatpush.msra.mxu0 0.0
    %409 = vmatpush.msra.mxu0 0.0
    %410 = vmatpush.msra.mxu0 0.0
    %411 = vmatpush.msra.mxu0 0.0
    %412 = vmatpush.msra.mxu0 0.0
    %413 = vmatpush.msra.mxu0 0.0
    %414 = vmatpush.msra.mxu0 0.0
    %415 = vmatpush.msra.mxu0 0.0
    %416 = vmatpush.msra.mxu0 0.0
    %417 = vmatpush.msra.mxu0 0.0
    %418 = vmatpush.msra.mxu0 0.0
    %419 = vmatpush.msra.mxu0 0.0
    %420 = vmatpush.msra.mxu0 0.0
    %421 = vmatpush.msra.mxu0 %v404
    %422 = vmatmul.f32.gmra.mxu0 %v402
    %v423 = vpop.f32.mrf.mxu0
    %v424 = vadd.f32 0.0, %v423
    %425 = vdwg.mxu0
    %426 = vrot.lane.b32.xlu0 %v287, 120
    %v427 = vpop.permute.xlu0 %426
    %428 = vrot.lane.b32.xlu0 %v287, 104
    %v429 = vpop.permute.xlu0 %428
    %v430 = vsel %vm292, %v427, 0
    %v432 = vsel %vm292, %v429, 0
    %434 = vmatpush.xpose.msra.mxu0 0.0
    %435 = vmatpush.xpose.msra.mxu0 0.0
    %436 = vmatpush.xpose.msra.mxu0 0.0
    %437 = vmatpush.xpose.msra.mxu0 0.0
    %438 = vmatpush.xpose.msra.mxu0 0.0
    %439 = vmatpush.xpose.msra.mxu0 0.0
    %440 = vmatpush.xpose.msra.mxu0 0.0
    %441 = vmatpush.xpose.msra.mxu0 0.0
    %442 = vmatpush.xpose.msra.mxu0 0.0
    %443 = vmatpush.xpose.msra.mxu0 0.0
    %444 = vmatpush.xpose.msra.mxu0 0.0
    %445 = vmatpush.xpose.msra.mxu0 0.0
    %446 = vmatpush.xpose.msra.mxu0 0.0
    %447 = vmatpush.xpose.msra.mxu0 0.0
    %448 = vmatpush.xpose.msra.mxu0 0.0
    %449 = vmatpush.xpose.msra.mxu0 %v432
    %450 = vmatmul.f32.gmra.mxu0 %v430
    %v451 = vpop.f32.mrf.mxu0
    %v452 = vadd.f32 0.0, %v451
    %453 = vdwg.mxu0
    %v454 = vmul.f32 %v452, 0.5
    %v455 = vsel %vm318, %v454, -inf
    %456 = vmax.xlane.f32.xlu0 %v455
    %v457 = vpop.xlane.xlu0 %456
    %v458 = vsub.f32 %v454, %v457
    %v459 = vmul.f32 %v458, 1.442695
    %v460 = vpow.pop %v459
    %v461 = vsel %vm318, %v460, 0.0
    %462 = vadd.xlane.f32.xlu0 %v461
    %v463 = vpop.xlane.xlu0 %462
    %v464 = vrcp.pop %v463
    %v465 = vmul.f32 %v460, %v464
    %466 = vrot.lane.b32.xlu0 %v287, 88
    %v467 = vpop.permute.xlu0 %466
    %v469 = vsel %vm332, %v465, 0
    %v471 = vsel %vm336, %v467, 0
    %473 = vmatpush.msra.mxu0 0.0
    %474 = vmatpush.msra.mxu0 0.0
    %475 = vmatpush.msra.mxu0 0.0
    %476 = vmatpush.msra.mxu0 0.0
    %477 = vmatpush.msra.mxu0 0.0
    %478 = vmatpush.msra.mxu0 0.0
    %479 = vmatpush.msra.mxu0 0.0
    %480 = vmatpush.msra.mxu0 0.0
    %481 = vmatpush.msra.mxu0 0.0
    %482 = vmatpush.msra.mxu0 0.0
    %483 = vmatpush.msra.mxu0 0.0
    %484 = vmatpush.msra.mxu0 0.0
    %485 = vmatpush.msra.mxu0 0.0
    %486 = vmatpush.msra.mxu0 0.0
    %487 = vmatpush.msra.mxu0 0.0
    %488 = vmatpush.msra.mxu0 %v471
    %489 = vmatmul.f32.gmra.mxu0 %v469
    %v490 = vpop.f32.mrf.mxu0
    %v491 = vadd.f32 0.0, %v490
    %492 = vdwg.mxu0
    %493 = vrot.lane.b32.xlu0 %v287, 116
    %v494 = vpop.permute.xlu0 %493
    %495 = vrot.lane.b32.xlu0 %v287, 100
    %v496 = vpop.permute.xlu0 %495
    %v497 = vsel %vm292, %v494, 0
    %v499 = vsel %vm292, %v496, 0
    %501 = vmatpush.xpose.msra.mxu0 0.0
    %502 = vmatpush.xpose.msra.mxu0 0.0
    %503 = vmatpush.xpose.msra.mxu0 0.0
    %504 = vmatpush.xpose.msra.mxu0 0.0
    %505 = vmatpush.xpose.msra.mxu0 0.0
    %506 = vmatpush.xpose.msra.mxu0 0.0
    %507 = vmatpush.xpose.msra.mxu0 0.0
    %508 = vmatpush.xpose.msra.mxu0 0.0
    %509 = vmatpush.xpose.msra.mxu0 0.0
    %510 = vmatpush.xpose.msra.mxu0 0.0
    %511 = vmatpush.xpose.msra.mxu0 0.0
    %512 = vmatpush.xpose.msra.mxu0 0.0
    %513 = vmatpush.xpose.msra.mxu0 0.0
    %514 = vmatpush.xpose.msra.mxu0 0.0
    %515 = vmatpush.xpose.msra.mxu0 0.0
    %516 = vmatpush.xpose.msra.mxu0 %v499
    %517 = vmatmul.f32.gmra.mxu0 %v497
    %v518 = vpop.f32.mrf.mxu0
    %v519 = vadd.f32 0.0, %v518
    %520 = vdwg.mxu0
    %v521 = vmul.f32 %v519, 0.5
    %v522 = vsel %vm318, %v521, -inf
    %523 = vmax.xlane.f32.xlu0 %v522
    %v524 = vpop.xlane.xlu0 %523
    %v525 = vsub.f32 %v521, %v524
    %v526 = vmul.f32 %v525, 1.442695
    %v527 = vpow.pop %v526
    %v528 = vsel %vm318, %v527, 0.0
    %529 = vadd.xlane.f32.xlu0 %v528
    %v530 = vpop.xlane.xlu0 %529
    %v531 = vrcp.pop %v530
    %v532 = vmul.f32 %v527, %v531
    %533 = vrot.lane.b32.xlu0 %v287, 84
    %v534 = vpop.permute.xlu0 %533
    %v536 = vsel %vm332, %v532, 0
    %v538 = vsel %vm336, %v534, 0
    %540 = vmatpush.msra.mxu0 0.0
    %541 = vmatpush.msra.mxu0 0.0
    %542 = vmatpush.msra.mxu0 0.0
    %543 = vmatpush.msra.mxu0 0.0
    %544 = vmatpush.msra.mxu0 0.0
    %545 = vmatpush.msra.mxu0 0.0
    %546 = vmatpush.msra.mxu0 0.0
    %547 = vmatpush.msra.mxu0 0.0
    %548 = vmatpush.msra.mxu0 0.0
    %549 = vmatpush.msra.mxu0 0.0
    %550 = vmatpush.msra.mxu0 0.0
    %551 = vmatpush.msra.mxu0 0.0
    %552 = vmatpush.msra.mxu0 0.0
    %553 = vmatpush.msra.mxu0 0.0
    %554 = vmatpush.msra.mxu0 0.0
    %555 = vmatpush.msra.mxu0 %v538
    %556 = vmatmul.f32.gmra.mxu0 %v536
    %v557 = vpop.f32.mrf.mxu0
    %v558 = vadd.f32 0.0, %v557
    %559 = vdwg.mxu0
    %561 = vrot.lane.b32.xlu0 %v424, 4
    %v562 = vpop.permute.xlu0 %561
    %565 = vrot.lane.b32.xlu0 %v491, 8
    %v566 = vpop.permute.xlu0 %565
    %569 = vrot.lane.b32.xlu0 %v558, 12
    %v570 = vpop.permute.xlu0 %569
    %v572 = vsel %vm292, %v357, %v562
    %vm573 = vcmask 64512
    %v574 = vsel %vm573, %v572, %v566
    %vm575 = vcmask 97280
    %v576 = vsel %vm575, %v574, %v570
    %v577 = vrot.slane %v287, 3
    %578 = vrot.lane.b32.xlu0 %v577, 112
    %v579 = vpop.permute.xlu0 %578
    %v580 = vsel %vm292, %v577, 0
    %v582 = vsel %vm292, %v579, 0
    %584 = vmatpush.xpose.msra.mxu0 0.0
    %585 = vmatpush.xpose.msra.mxu0 0.0
    %586 = vmatpush.xpose.msra.mxu0 0.0
    %587 = vmatpush.xpose.msra.mxu0 0.0
    %588 = vmatpush.xpose.msra.mxu0 0.0
    %589 = vmatpush.xpose.msra.mxu0 0.0
    %590 = vmatpush.xpose.msra.mxu0 0.0
    %591 = vmatpush.xpose.msra.mxu0 0.0
    %592 = vmatpush.xpose.msra.mxu0 0.0
    %593 = vmatpush.xpose.msra.mxu0 0.0
    %594 = vmatpush.xpose.msra.mxu0 0.0
    %595 = vmatpush.xpose.msra.mxu0 0.0
    %596 = vmatpush.xpose.msra.mxu0 0.0
    %597 = vmatpush.xpose.msra.mxu0 0.0
    %598 = vmatpush.xpose.msra.mxu0 0.0
    %599 = vmatpush.xpose.msra.mxu0 %v582
    %600 = vmatmul.f32.gmra.mxu0 %v580
    %v601 = vpop.f32.mrf.mxu0
    %v602 = vadd.f32 0.0, %v601
    %603 = vdwg.mxu0
    %v604 = vmul.f32 %v602, 0.5
    %v605 = vsel %vm318, %v604, -inf
    %606 = vmax.xlane.f32.xlu0 %v605
    %v607 = vpop.xlane.xlu0 %606
    %v608 = vsub.f32 %v604, %v607
    %v609 = vmul.f32 %v608, 1.442695
    %v610 = vpow.pop %v609
    %v611 = vsel %vm318, %v610, 0.0
    %612 = vadd.xlane.f32.xlu0 %v611
    %v613 = vpop.xlane.xlu0 %612
    %v614 = vrcp.pop %v613
    %v615 = vmul.f32 %v610, %v614
    %616 = vrot.lane.b32.xlu0 %v577, 96
    %v617 = vpop.permute.xlu0 %616
    %v619 = vsel %vm332, %v615, 0
    %v621 = vsel %vm336, %v617, 0
    %623 = vmatpush.msra.mxu0 0.0
    %624 = vmatpush.msra.mxu0 0.0
    %625 = vmatpush.msra.mxu0 0.0
    %626 = vmatpush.msra.mxu0 0.0
    %627 = vmatpush.msra.mxu0 0.0
    %628 = vmatpush.msra.mxu0 0.0
    %629 = vmatpush.msra.mxu0 0.0
    %630 = vmatpush.msra.mxu0 0.0
    %631 = vmatpush.msra.mxu0 0.0
    %632 = vmatpush.msra.mxu0 0.0
    %633 = vmatpush.msra.mxu0 0.0
    %634 = vmatpush.msra.mxu0 0.0
    %635 = vmatpush.msra.mxu0 0.0
    %636 = vmatpush.msra.mxu0 0.0
    %637 = vmatpush.msra.mxu0 0.0
    %638 = vmatpush.msra.mxu0 %v621
    %639 = vmatmul.f32.gmra.mxu0 %v619
    %v640 = vpop.f32.mrf.mxu0
    %v641 = vadd.f32 0.0, %v640
    %642 = vdwg.mxu0
    %643 = vrot.lane.b32.xlu0 %v577, 124
    %v644 = vpop.permute.xlu0 %643
    %645 = vrot.lane.b32.xlu0 %v577, 108
    %v646 = vpop.permute.xlu0 %645
    %v647 = vsel %vm292, %v644, 0
    %v649 = vsel %vm292, %v646, 0
    %651 = vmatpush.xpose.msra.mxu0 0.0
    %652 = vmatpush.xpose.msra.mxu0 0.0
    %653 = vmatpush.xpose.msra.mxu0 0.0
    %654 = vmatpush.xpose.msra.mxu0 0.0
    %655 = vmatpush.xpose.msra.mxu0 0.0
    %656 = vmatpush.xpose.msra.mxu0 0.0
    %657 = vmatpush.xpose.msra.mxu0 0.0
    %658 = vmatpush.xpose.msra.mxu0 0.0
    %659 = vmatpush.xpose.msra.mxu0 0.0
    %660 = vmatpush.xpose.msra.mxu0 0.0
    %661 = vmatpush.xpose.msra.mxu0 0.0
    %662 = vmatpush.xpose.msra.mxu0 0.0
    %663 = vmatpush.xpose.msra.mxu0 0.0
    %664 = vmatpush.xpose.msra.mxu0 0.0
    %665 = vmatpush.xpose.msra.mxu0 0.0
    %666 = vmatpush.xpose.msra.mxu0 %v649
    %667 = vmatmul.f32.gmra.mxu0 %v647
    %v668 = vpop.f32.mrf.mxu0
    %v669 = vadd.f32 0.0, %v668
    %670 = vdwg.mxu0
    %v671 = vmul.f32 %v669, 0.5
    %v672 = vsel %vm318, %v671, -inf
    %673 = vmax.xlane.f32.xlu0 %v672
    %v674 = vpop.xlane.xlu0 %673
    %v675 = vsub.f32 %v671, %v674
    %v676 = vmul.f32 %v675, 1.442695
    %v677 = vpow.pop %v676
    %v678 = vsel %vm318, %v677, 0.0
    %679 = vadd.xlane.f32.xlu0 %v678
    %v680 = vpop.xlane.xlu0 %679
    %v681 = vrcp.pop %v680
    %v682 = vmul.f32 %v677, %v681
    %683 = vrot.lane.b32.xlu0 %v577, 92
    %v684 = vpop.permute.xlu0 %683
    %v686 = vsel %vm332, %v682, 0
    %v688 = vsel %vm336, %v684, 0
    %690 = vmatpush.msra.mxu0 0.0
    %691 = vmatpush.msra.mxu0 0.0
    %692 = vmatpush.msra.mxu0 0.0
    %693 = vmatpush.msra.mxu0 0.0
    %694 = vmatpush.msra.mxu0 0.0
    %695 = vmatpush.msra.mxu0 0.0
    %696 = vmatpush.msra.mxu0 0.0
    %697 = vmatpush.msra.mxu0 0.0
    %698 = vmatpush.msra.mxu0 0.0
    %699 = vmatpush.msra.mxu0 0.0
    %700 = vmatpush.msra.mxu0 0.0
    %701 = vmatpush.msra.mxu0 0.0
    %702 = vmatpush.msra.mxu0 0.0
    %703 = vmatpush.msra.mxu0 0.0
    %704 = vmatpush.msra.mxu0 0.0
    %705 = vmatpush.msra.mxu0 %v688
    %706 = vmatmul.f32.gmra.mxu0 %v686
    %v707 = vpop.f32.mrf.mxu0
    %v708 = vadd.f32 0.0, %v707
    %709 = vdwg.mxu0
    %710 = vrot.lane.b32.xlu0 %v577, 120
    %v711 = vpop.permute.xlu0 %710
    %712 = vrot.lane.b32.xlu0 %v577, 104
    %v713 = vpop.permute.xlu0 %712
    %v714 = vsel %vm292, %v711, 0
    %v716 = vsel %vm292, %v713, 0
    %718 = vmatpush.xpose.msra.mxu0 0.0
    %719 = vmatpush.xpose.msra.mxu0 0.0
    %720 = vmatpush.xpose.msra.mxu0 0.0
    %721 = vmatpush.xpose.msra.mxu0 0.0
    %722 = vmatpush.xpose.msra.mxu0 0.0
    %723 = vmatpush.xpose.msra.mxu0 0.0
    %724 = vmatpush.xpose.msra.mxu0 0.0
    %725 = vmatpush.xpose.msra.mxu0 0.0
    %726 = vmatpush.xpose.msra.mxu0 0.0
    %727 = vmatpush.xpose.msra.mxu0 0.0
    %728 = vmatpush.xpose.msra.mxu0 0.0
    %729 = vmatpush.xpose.msra.mxu0 0.0
    %730 = vmatpush.xpose.msra.mxu0 0.0
    %731 = vmatpush.xpose.msra.mxu0 0.0
    %732 = vmatpush.xpose.msra.mxu0 0.0
    %733 = vmatpush.xpose.msra.mxu0 %v716
    %734 = vmatmul.f32.gmra.mxu0 %v714
    %v735 = vpop.f32.mrf.mxu0
    %v736 = vadd.f32 0.0, %v735
    %737 = vdwg.mxu0
    %v738 = vmul.f32 %v736, 0.5
    %v739 = vsel %vm318, %v738, -inf
    %740 = vmax.xlane.f32.xlu0 %v739
    %v741 = vpop.xlane.xlu0 %740
    %v742 = vsub.f32 %v738, %v741
    %v743 = vmul.f32 %v742, 1.442695
    %v744 = vpow.pop %v743
    %v745 = vsel %vm318, %v744, 0.0
    %746 = vadd.xlane.f32.xlu0 %v745
    %v747 = vpop.xlane.xlu0 %746
    %v748 = vrcp.pop %v747
    %v749 = vmul.f32 %v744, %v748
    %750 = vrot.lane.b32.xlu0 %v577, 88
    %v751 = vpop.permute.xlu0 %750
    %v753 = vsel %vm332, %v749, 0
    %v755 = vsel %vm336, %v751, 0
    %757 = vmatpush.msra.mxu0 0.0
    %758 = vmatpush.msra.mxu0 0.0
    %759 = vmatpush.msra.mxu0 0.0
    %760 = vmatpush.msra.mxu0 0.0
    %761 = vmatpush.msra.mxu0 0.0
    %762 = vmatpush.msra.mxu0 0.0
    %763 = vmatpush.msra.mxu0 0.0
    %764 = vmatpush.msra.mxu0 0.0
    %765 = vmatpush.msra.mxu0 0.0
    %766 = vmatpush.msra.mxu0 0.0
    %767 = vmatpush.msra.mxu0 0.0
    %768 = vmatpush.msra.mxu0 0.0
    %769 = vmatpush.msra.mxu0 0.0
    %770 = vmatpush.msra.mxu0 0.0
    %771 = vmatpush.msra.mxu0 0.0
    %772 = vmatpush.msra.mxu0 %v755
    %773 = vmatmul.f32.gmra.mxu0 %v753
    %v774 = vpop.f32.mrf.mxu0
    %v775 = vadd.f32 0.0, %v774
    %776 = vdwg.mxu0
    %777 = vrot.lane.b32.xlu0 %v577, 116
    %v778 = vpop.permute.xlu0 %777
    %779 = vrot.lane.b32.xlu0 %v577, 100
    %v780 = vpop.permute.xlu0 %779
    %v781 = vsel %vm292, %v778, 0
    %v783 = vsel %vm292, %v780, 0
    %785 = vmatpush.xpose.msra.mxu0 0.0
    %786 = vmatpush.xpose.msra.mxu0 0.0
    %787 = vmatpush.xpose.msra.mxu0 0.0
    %788 = vmatpush.xpose.msra.mxu0 0.0
    %789 = vmatpush.xpose.msra.mxu0 0.0
    %790 = vmatpush.xpose.msra.mxu0 0.0
    %791 = vmatpush.xpose.msra.mxu0 0.0
    %792 = vmatpush.xpose.msra.mxu0 0.0
    %793 = vmatpush.xpose.msra.mxu0 0.0
    %794 = vmatpush.xpose.msra.mxu0 0.0
    %795 = vmatpush.xpose.msra.mxu0 0.0
    %796 = vmatpush.xpose.msra.mxu0 0.0
    %797 = vmatpush.xpose.msra.mxu0 0.0
    %798 = vmatpush.xpose.msra.mxu0 0.0
    %799 = vmatpush.xpose.msra.mxu0 0.0
    %800 = vmatpush.xpose.msra.mxu0 %v783
    %801 = vmatmul.f32.gmra.mxu0 %v781
    %v802 = vpop.f32.mrf.mxu0
    %v803 = vadd.f32 0.0, %v802
    %804 = vdwg.mxu0
    %v805 = vmul.f32 %v803, 0.5
    %v806 = vsel %vm318, %v805, -inf
    %807 = vmax.xlane.f32.xlu0 %v806
    %v808 = vpop.xlane.xlu0 %807
    %v809 = vsub.f32 %v805, %v808
    %v810 = vmul.f32 %v809, 1.442695
    %v811 = vpow.pop %v810
    %v812 = vsel %vm318, %v811, 0.0
    %813 = vadd.xlane.f32.xlu0 %v812
    %v814 = vpop.xlane.xlu0 %813
    %v815 = vrcp.pop %v814
    %v816 = vmul.f32 %v811, %v815
    %817 = vrot.lane.b32.xlu0 %v577, 84
    %v818 = vpop.permute.xlu0 %817
    %v820 = vsel %vm332, %v816, 0
    %v822 = vsel %vm336, %v818, 0
    %824 = vmatpush.msra.mxu0 0.0
    %825 = vmatpush.msra.mxu0 0.0
    %826 = vmatpush.msra.mxu0 0.0
    %827 = vmatpush.msra.mxu0 0.0
    %828 = vmatpush.msra.mxu0 0.0
    %829 = vmatpush.msra.mxu0 0.0
    %830 = vmatpush.msra.mxu0 0.0
    %831 = vmatpush.msra.mxu0 0.0
    %832 = vmatpush.msra.mxu0 0.0
    %833 = vmatpush.msra.mxu0 0.0
    %834 = vmatpush.msra.mxu0 0.0
    %835 = vmatpush.msra.mxu0 0.0
    %836 = vmatpush.msra.mxu0 0.0
    %837 = vmatpush.msra.mxu0 0.0
    %838 = vmatpush.msra.mxu0 0.0
    %839 = vmatpush.msra.mxu0 %v822
    %840 = vmatmul.f32.gmra.mxu0 %v820
    %v841 = vpop.f32.mrf.mxu0
    %v842 = vadd.f32 0.0, %v841
    %843 = vdwg.mxu0
    %845 = vrot.lane.b32.xlu0 %v708, 4
    %v846 = vpop.permute.xlu0 %845
    %849 = vrot.lane.b32.xlu0 %v775, 8
    %v850 = vpop.permute.xlu0 %849
    %853 = vrot.lane.b32.xlu0 %v842, 12
    %v854 = vpop.permute.xlu0 %853
    %v856 = vsel %vm292, %v641, %v846
    %v857 = vsel %vm573, %v856, %v850
    %v858 = vsel %vm575, %v857, %v854
    %v860 = vrot.slane %v858, 5
    %v862 = vsel %vm336, %v576, %v860
    %v863 = vld [vmem:[#allocation3] sm:$0xff]
    %v864 = vld [vmem:[#allocation3 + $0x8] sm:$0xff]
    %v865 = vld [vmem:[#allocation5] sm:$0x1]
    %v867 = vperm.slane %v865, 0
    %v870 = vsel %vm265, %v862, 0
    %872 = vmatpush.msra.mxu0 0.0
    %873 = vmatpush.msra.mxu0 0.0
    %874 = vmatpush.msra.mxu0 0.0
    %875 = vmatpush.msra.mxu0 0.0
    %876 = vmatpush.msra.mxu0 0.0
    %877 = vmatpush.msra.mxu0 0.0
    %878 = vmatpush.msra.mxu0 0.0
    %879 = vmatpush.msra.mxu0 0.0
    %880 = vmatpush.msra.mxu0 0.0
    %881 = vmatpush.msra.mxu0 0.0
    %882 = vmatpush.msra.mxu0 0.0
    %883 = vmatpush.msra.mxu0 0.0
    %884 = vmatpush.msra.mxu0 0.0
    %885 = vmatpush.msra.mxu0 0.0
    %886 = vmatpush.msra.mxu0 %v864
    %887 = vmatpush.msra.mxu0 %v863
    %888 = vmatmul.f32.gmra.mxu0 %v870
    %v889 = vpop.f32.mrf.mxu0
    %v890 = vadd.f32 %v867, %v889
    %891 = vdwg.mxu0
    %v892 = vadd.f32 %v258, %v890
    %v893 = vld [vmem:[#allocation7] sm:$0x1]
    %v894 = vld [vmem:[#allocation8] sm:$0x1]
    %vm895 = vcmask 128000
    %v896 = vsel %vm895, %v892, 0.0
    %897 = vadd.xlane.f32.xlu0 %v896
    %v898 = vpop.xlane.xlu0 %897
    %v899 = vrcp.pop 16.0
    %v900 = vmul.f32 16.0, %v899
    %v901 = vsub.f32 1.0, %v900
    %v902 = vmul.f32 %v899, %v901
    %v903 = vadd.f32 %v899, %v902
    %vm904 = vweird.f32 %v899
    %v905 = vsel %vm904, %v899, %v903
    %v906 = vmul.f32 %v898, %v905
    %v907 = vsub.f32 %v892, %v906
    %v908 = vmul.f32 %v907, %v907
    %v909 = vsel %vm895, %v908, 0.0
    %910 = vadd.xlane.f32.xlu0 %v909
    %v911 = vpop.xlane.xlu0 %910
    %v912 = vmul.f32 %v911, %v905
    %v913 = vadd.f32 %v912, 1e-05
    %v914 = vrsqrt.pop %v913
    %v915 = vmul.f32 %v914, %v913
    %v916 = vmul.f32 %v915, %v914
    %v917 = vmul.f32 0.5, %v916
    %v918 = vsub.f32 1.5, %v917
    %v919 = vmul.f32 %v914, %v918
    %vm920 = vweird.f32 %v913
    %vm921 = vweird.f32 %v914
    %vm922 = vmor %vm920, %vm921
    %v923 = vsel %vm922, %v914, %v919
    %v924 = vmul.f32 %v907, %v923
    %v926 = vperm.slane %v893, 0
    %v928 = vmul.f32 %v924, %v926
    %v930 = vperm.slane %v894, 0
    %v932 = vadd.f32 %v928, %v930
    %v933 = vld [vmem:[#allocation13] sm:$0xff]
    %v934 = vld [vmem:[#allocation13 + $0x8] sm:$0xff]
    %v935 = vld [vmem:[#allocation14] sm:$0x1]
    %v937 = vperm.slane %v935, 0
    %v940 = vsel %vm265, %v932, 0
    %942 = vmatpush.msra.mxu0 0.0
    %943 = vmatpush.msra.mxu0 0.0
    %944 = vmatpush.msra.mxu0 0.0
    %945 = vmatpush.msra.mxu0 0.0
    %946 = vmatpush.msra.mxu0 0.0
    %947 = vmatpush.msra.mxu0 0.0
    %948 = vmatpush.msra.mxu0 0.0
    %949 = vmatpush.msra.mxu0 0.0
    %950 = vmatpush.msra.mxu0 0.0
    %951 = vmatpush.msra.mxu0 0.0
    %952 = vmatpush.msra.mxu0 0.0
    %953 = vmatpush.msra.mxu0 0.0
    %954 = vmatpush.msra.mxu0 0.0
    %955 = vmatpush.msra.mxu0 0.0
    %956 = vmatpush.msra.mxu0 %v934
    %957 = vmatpush.msra.mxu0 %v933
    %958 = vmatmul.f32.gmra.mxu0 %v940
    %v959 = vpop.f32.mrf.mxu0
    %v960 = vadd.f32 %v937, %v959
    %961 = vdwg.mxu0
    %v962 = vmax.f32 %v960, 0.0
    %v963 = vld [vmem:[%s11] sm:$0xff]
    %v964 = vld [vmem:[%s11 + $0x8] sm:$0xff]
    %v965 = vld [vmem:[%s11 + $0x10] sm:$0xff]
    %v966 = vld [vmem:[%s11 + $0x18] sm:$0xff]
    %v967 = vld [vmem:[#allocation16] sm:$0x1]
    %v969 = vperm.slane %v967, 0
    %vm971 = vcmask 261120
    %v973 = vsel %vm971, %v962, 0
    %975 = vmatpush.msra.mxu0 0.0
    %976 = vmatpush.msra.mxu0 0.0
    %977 = vmatpush.msra.mxu0 0.0
    %978 = vmatpush.msra.mxu0 0.0
    %979 = vmatpush.msra.mxu0 0.0
    %980 = vmatpush.msra.mxu0 0.0
    %981 = vmatpush.msra.mxu0 0.0
    %982 = vmatpush.msra.mxu0 0.0
    %983 = vmatpush.msra.mxu0 0.0
    %984 = vmatpush.msra.mxu0 0.0
    %985 = vmatpush.msra.mxu0 0.0
    %986 = vmatpush.msra.mxu0 0.0
    %987 = vmatpush.msra.mxu0 %v966
    %988 = vmatpush.msra.mxu0 %v965
    %989 = vmatpush.msra.mxu0 %v964
    %990 = vmatpush.msra.mxu0 %v963
    %991 = vmatmul.f32.gmra.mxu0 %v973
    %v992 = vpop.f32.mrf.mxu0
    %v993 = vadd.f32 %v969, %v992
    %994 = vdwg.mxu0
    %v995 = vadd.f32 %v932, %v993
    %v996 = vld [vmem:[#allocation10] sm:$0x1]
    %v997 = vld [vmem:[#allocation11] sm:$0x1]
    %v998 = vsel %vm895, %v995, 0.0
    %999 = vadd.xlane.f32.xlu0 %v998
    %v1000 = vpop.xlane.xlu0 %999
    %v1001 = vmul.f32 %v1000, %v905
    %v1002 = vsub.f32 %v995, %v1001
    %v1003 = vmul.f32 %v1002, %v1002
    %v1004 = vsel %vm895, %v1003, 0.0
    %1005 = vadd.xlane.f32.xlu0 %v1004
    %v1006 = vpop.xlane.xlu0 %1005
    %v1007 = vmul.f32 %v1006, %v905
    %v1008 = vadd.f32 %v1007, 1e-05
    %v1009 = vrsqrt.pop %v1008
    %v1010 = vmul.f32 %v1009, %v1008
    %v1011 = vmul.f32 %v1010, %v1009
    %v1012 = vmul.f32 0.5, %v1011
    %v1013 = vsub.f32 1.5, %v1012
    %v1014 = vmul.f32 %v1009, %v1013
    %vm1015 = vweird.f32 %v1008
    %vm1016 = vweird.f32 %v1009
    %vm1017 = vmor %vm1015, %vm1016
    %v1018 = vsel %vm1017, %v1009, %v1014
    %v1019 = vmul.f32 %v1002, %v1018
    %v1021 = vperm.slane %v996, 0
    %v1023 = vmul.f32 %v1019, %v1021
    %v1025 = vperm.slane %v997, 0
    %v1027 = vadd.f32 %v1023, %v1025
    %v1029 = vrot.slane %v1027, 2
    %v1031 = vrot.slane %v1027, 7
    %v1033 = vrot.slane %v1027, 1
    %v1035 = vrot.slane %v1027, 6
    %vm1037 = vcmask 1040384
    %v1038 = vsel %vm1037, %v1027, %v1029
    %vm1039 = vcmask 1041408
    %v1040 = vsel %vm1039, %v1038, %v1031
    %v1041 = vsel %vm336, %v1040, %v1033
    %vm1042 = vcmask 1043456
    %v1043 = vsel %vm1042, %v1041, %v1035
    %vm1044 = vcmask 1044480
    %v1045 = vsel %vm1044, %v1043, %v1027
    %v1046 = vlaneseq
    %v1047 = vand.u32 %v1046, 127
    %v1048 = vadd.s32 %v1047, 128
    %vm1049 = vcmp.lt.s32.totalorder %v1047, 0
    %v1050 = vsub.s32 0, %v1047
    %v1051 = vsel %vm1049, %v1050, %v1047
    %v1052 = vshrl.u32 %v1051, 6
    %v1053 = vand.u32 %v1051, 63
    %v1054 = vsub.s32 0, %v1053
    %v1055 = vsel %vm1049, %v1054, %v1053
    %vm1056 = vcmp.lt.s32.totalorder %v1048, 0
    %v1057 = vsub.s32 0, %v1048
    %v1058 = vsel %vm1056, %v1057, %v1048
    %v1059 = vshrl.u32 %v1058, 6
    %v1060 = vand.u32 %v1058, 63
    %v1061 = vsub.s32 0, %v1060
    %v1062 = vsel %vm1056, %v1061, %v1060
    %vm1063 = vcmp.ne.s32.totalorder %v1055, 0
    %vm1064 = vcmp.ne.s32.totalorder %v1062, 0
    %vm1065 = vcmp.lt.s32.totalorder %v1055, 0
    %vm1066 = vcmp.lt.s32.totalorder %v1062, 0
    %vm1067 = vmand %vm1065, %vm1063
    %vm1068 = vmand %vm1066, %vm1064
    %v1069 = vadd.s32 %v1055, 64
    %v1070 = vadd.s32 %v1062, 64
    %v1071 = vsel %vm1067, %v1069, %v1055
    %v1072 = vsel %vm1068, %v1070, %v1062
    %vm1073 = vcmp.lt.s32.totalorder %v1071, 32
    %vm1074 = vcmp.lt.s32.totalorder %v1072, 32
    %vm1075 = vcmp.lt.s32.totalorder %v1047, 32
    %v1076 = vld [vmem:[%s13] sm:$0xff]
    %v1077 = vld [vmem:[%s13 + $0x8] sm:$0xff]
    %v1078 = vld [vmem:[%s13 + $0x10] sm:$0xff]
    %v1079 = vld [vmem:[%s13 + $0x18] sm:$0xff]
    %v1080 = vld [vmem:[%s14] sm:$0xff]
    %v1081 = vld [vmem:[%s14 + $0x8] sm:$0xff]
    %v1082 = vld [vmem:[%s14 + $0x10] sm:$0xff]
    %v1083 = vld [vmem:[%s14 + $0x18] sm:$0xff]
    %v1084 = vld [vmem:[%s14 + $0x20] sm:$0xff]
    %v1085 = vld [vmem:[%s14 + $0x28] sm:$0xff]
    %v1086 = vld [vmem:[%s14 + $0x30] sm:$0xff]
    %v1087 = vld [vmem:[%s14 + $0x38] sm:$0xff]
    %v1088 = vld [vmem:[%s14 + $0x40] sm:$0xff]
    %v1089 = vld [vmem:[%s14 + $0x48] sm:$0xff]
    %v1090 = vld [vmem:[%s14 + $0x50] sm:$0xff]
    %v1091 = vld [vmem:[%s14 + $0x58] sm:$0xff]
    %v1092 = vld [vmem:[%s14 + $0x60] sm:$0xff]
    %v1093 = vld [vmem:[%s14 + $0x68] sm:$0xff]
    %v1094 = vld [vmem:[%s14 + $0x70] sm:$0xff]
    %v1095 = vld [vmem:[%s14 + $0x78] sm:$0xff]
    %v1096 = vld [vmem:[#allocation17] sm:$0x3]
    %v1098 = vperm.slane %v1096, 0
    %v1099 = vperm.slane %v1096, 1
    %v1103 = vsel %vm265, %v1045, 0
    %1105 = vmatpush.msra.mxu0 0.0
    %1106 = vmatpush.msra.mxu0 0.0
    %1107 = vmatpush.msra.mxu0 0.0
    %1108 = vmatpush.msra.mxu0 0.0
    %1109 = vmatpush.msra.mxu0 0.0
    %1110 = vmatpush.msra.mxu0 0.0
    %1111 = vmatpush.msra.mxu0 0.0
    %1112 = vmatpush.msra.mxu0 0.0
    %1113 = vmatpush.msra.mxu0 0.0
    %1114 = vmatpush.msra.mxu0 0.0
    %1115 = vmatpush.msra.mxu0 0.0
    %1116 = vmatpush.msra.mxu0 0.0
    %1117 = vmatpush.msra.mxu0 0.0
    %1118 = vmatpush.msra.mxu0 0.0
    %1119 = vmatpush.msra.mxu0 %v1078
    %1120 = vmatpush.msra.mxu0 %v1076
    %1121 = vmatmul.f32.gmra.mxu0 %v1103
    %v1122 = vpop.f32.mrf.mxu0
    %v1123 = vadd.f32 %v1098, %v1122
    %1124 = vdwg.mxu0
    %1125 = vmatpush.msra.mxu0 0.0
    %1126 = vmatpush.msra.mxu0 0.0
    %1127 = vmatpush.msra.mxu0 0.0
    %1128 = vmatpush.msra.mxu0 0.0
    %1129 = vmatpush.msra.mxu0 0.0
    %1130 = vmatpush.msra.mxu0 0.0
    %1131 = vmatpush.msra.mxu0 0.0
    %1132 = vmatpush.msra.mxu0 0.0
    %1133 = vmatpush.msra.mxu0 0.0
    %1134 = vmatpush.msra.mxu0 0.0
    %1135 = vmatpush.msra.mxu0 0.0
    %1136 = vmatpush.msra.mxu0 0.0
    %1137 = vmatpush.msra.mxu0 0.0
    %1138 = vmatpush.msra.mxu0 0.0
    %1139 = vmatpush.msra.mxu0 %v1079
    %1140 = vmatpush.msra.mxu0 %v1077
    %1141 = vmatmul.f32.gmra.mxu0 %v1103
    %v1142 = vpop.f32.mrf.mxu0
    %v1143 = vadd.f32 %v1099, %v1142
    %1144 = vdwg.mxu0
    %v1147 = vrot.slane %v1123, 4
    %v1148 = vrot.slane %v1143, 4
    %v1151 = vsel %vm1073, %v1123, %v1147
    %v1152 = vsel %vm1074, %v1143, %v1148
    %vm1153 = vcmask 523264
    %v1155 = vsel %vm1153, 0.0, 0
    %1157 = vmatpush.msra.mxu0 0.0
    %1158 = vmatpush.msra.mxu0 0.0
    %1159 = vmatpush.msra.mxu0 0.0
    %1160 = vmatpush.msra.mxu0 0.0
    %1161 = vmatpush.msra.mxu0 0.0
    %1162 = vmatpush.msra.mxu0 0.0
    %1163 = vmatpush.msra.mxu0 0.0
    %1164 = vmatpush.msra.mxu0 0.0
    %1165 = vmatpush.msra.mxu0 %v1094
    %1166 = vmatpush.msra.mxu0 %v1092
    %1167 = vmatpush.msra.mxu0 %v1090
    %1168 = vmatpush.msra.mxu0 %v1088
    %1169 = vmatpush.msra.mxu0 %v1086
    %1170 = vmatpush.msra.mxu0 %v1084
    %1171 = vmatpush.msra.mxu0 %v1082
    %1172 = vmatpush.msra.mxu0 %v1080
    %1173 = vmatmul.f32.gmra.mxu0 %v1155
    %v1174 = vpop.f32.mrf.mxu0
    %v1175 = vadd.f32 0.0, %v1174
    %1176 = vdwg.mxu0
    %1177 = vmatpush.msra.mxu0 0.0
    %1178 = vmatpush.msra.mxu0 0.0
    %1179 = vmatpush.msra.mxu0 0.0
    %1180 = vmatpush.msra.mxu0 0.0
    %1181 = vmatpush.msra.mxu0 0.0
    %1182 = vmatpush.msra.mxu0 0.0
    %1183 = vmatpush.msra.mxu0 0.0
    %1184 = vmatpush.msra.mxu0 0.0
    %1185 = vmatpush.msra.mxu0 %v1095
    %1186 = vmatpush.msra.mxu0 %v1093
    %1187 = vmatpush.msra.mxu0 %v1091
    %1188 = vmatpush.msra.mxu0 %v1089
    %1189 = vmatpush.msra.mxu0 %v1087
    %1190 = vmatpush.msra.mxu0 %v1085
    %1191 = vmatpush.msra.mxu0 %v1083
    %1192 = vmatpush.msra.mxu0 %v1081
    %1193 = vmatmul.f32.gmra.mxu0 %v1155
    %v1194 = vpop.f32.mrf.mxu0
    %v1195 = vadd.f32 0.0, %v1194
    %1196 = vdwg.mxu0
    %v1197 = vadd.f32 %v1151, %v1175
    %v1198 = vadd.f32 %v1152, %v1195
    %v1199 = vxor.u32 %v1197, 2147483648
    %v1200 = vmul.f32 %v1199, 1.442695
    %v1201 = vpow.pop %v1200
    %v1202 = vadd.f32 %v1201, 1.0
    %v1203 = vrcp.pop %v1202
    %v1204 = vmul.f32 %v1202, %v1203
    %v1205 = vsub.f32 1.0, %v1204
    %v1206 = vmul.f32 %v1203, %v1205
    %v1207 = vadd.f32 %v1203, %v1206
    %vm1208 = vweird.f32 %v1202
    %vm1209 = vweird.f32 %v1203
    %vm1210 = vmor %vm1208, %vm1209
    %v1211 = vsel %vm1210, %v1203, %v1207
    %v1212 = vand.u32 2147483647, %v1202
    %vm1213 = vcmp.eq.f32.partialorder %v1212, 8.507059e+37
    %v1214 = vand.u32 %v1202, 2147483648
    %v1215 = vor.u32 1.1754944e-38, %v1214
    %v1216 = vsel %vm1213, %v1215, %v1211
    %v1217 = vmul.f32 1.0, %v1216
    %v1218 = vtanh.pop %v1198
    %v1219 = vxor.u32 %v1198, 2147483648
    %v1220 = vmul.f32 %v1219, 1.442695
    %v1221 = vpow.pop %v1220
    %v1222 = vadd.f32 %v1221, 1.0
    %v1223 = vrcp.pop %v1222
    %v1224 = vmul.f32 %v1222, %v1223
    %v1225 = vsub.f32 1.0, %v1224
    %v1226 = vmul.f32 %v1223, %v1225
    %v1227 = vadd.f32 %v1223, %v1226
    %vm1228 = vweird.f32 %v1222
    %vm1229 = vweird.f32 %v1223
    %vm1230 = vmor %vm1228, %vm1229
    %v1231 = vsel %vm1230, %v1223, %v1227
    %v1232 = vand.u32 2147483647, %v1222
    %vm1233 = vcmp.eq.f32.partialorder %v1232, 8.507059e+37
    %v1234 = vand.u32 %v1222, 2147483648
    %v1235 = vor.u32 1.1754944e-38, %v1234
    %v1236 = vsel %vm1233, %v1235, %v1231
    %v1237 = vmul.f32 1.0, %v1236
    %v1238 = vmul.f32 %v1217, 0.0
    %v1239 = vmul.f32 %v1217, %v1218
    %1241 = vrot.lane.b32.xlu0 %v1239, 64
    %v1242 = vpop.permute.xlu0 %1241
    %v1244 = vadd.f32 %v1238, %v1242
    %v1245 = vtanh.pop %v1244
    %v1246 = vmul.f32 %v1237, %v1245
    %1248 = vrot.lane.b32.xlu0 %v1246, 64
    %v1249 = vpop.permute.xlu0 %1248
    %v1250 = vsel %vm1153, %v1249, 0
    %1252 = vmatpush.msra.mxu0 0.0
    %1253 = vmatpush.msra.mxu0 0.0
    %1254 = vmatpush.msra.mxu0 0.0
    %1255 = vmatpush.msra.mxu0 0.0
    %1256 = vmatpush.msra.mxu0 0.0
    %1257 = vmatpush.msra.mxu0 0.0
    %1258 = vmatpush.msra.mxu0 0.0
    %1259 = vmatpush.msra.mxu0 0.0
    %1260 = vmatpush.msra.mxu0 %v1094
    %1261 = vmatpush.msra.mxu0 %v1092
    %1262 = vmatpush.msra.mxu0 %v1090
    %1263 = vmatpush.msra.mxu0 %v1088
    %1264 = vmatpush.msra.mxu0 %v1086
    %1265 = vmatpush.msra.mxu0 %v1084
    %1266 = vmatpush.msra.mxu0 %v1082
    %1267 = vmatpush.msra.mxu0 %v1080
    %1268 = vmatmul.f32.gmra.mxu0 %v1250
    %v1269 = vpop.f32.mrf.mxu0
    %v1270 = vadd.f32 0.0, %v1269
    %1271 = vdwg.mxu0
    %1272 = vmatpush.msra.mxu0 0.0
    %1273 = vmatpush.msra.mxu0 0.0
    %1274 = vmatpush.msra.mxu0 0.0
    %1275 = vmatpush.msra.mxu0 0.0
    %1276 = vmatpush.msra.mxu0 0.0
    %1277 = vmatpush.msra.mxu0 0.0
    %1278 = vmatpush.msra.mxu0 0.0
    %1279 = vmatpush.msra.mxu0 0.0
    %1280 = vmatpush.msra.mxu0 %v1095
    %1281 = vmatpush.msra.mxu0 %v1093
    %1282 = vmatpush.msra.mxu0 %v1091
    %1283 = vmatpush.msra.mxu0 %v1089
    %1284 = vmatpush.msra.mxu0 %v1087
    %1285 = vmatpush.msra.mxu0 %v1085
    %1286 = vmatpush.msra.mxu0 %v1083
    %1287 = vmatpush.msra.mxu0 %v1081
    %1288 = vmatmul.f32.gmra.mxu0 %v1250
    %v1289 = vpop.f32.mrf.mxu0
    %v1290 = vadd.f32 0.0, %v1289
    %1291 = vdwg.mxu0
    %v1294 = vrot.slane %v1270, 6
    %v1295 = vrot.slane %v1290, 6
    %v1298 = vadd.f32 %v1123, %v1294
    %v1299 = vadd.f32 %v1143, %v1295
    %v1300 = vxor.u32 %v1298, 2147483648
    %v1301 = vmul.f32 %v1300, 1.442695
    %v1302 = vpow.pop %v1301
    %v1303 = vadd.f32 %v1302, 1.0
    %v1304 = vrcp.pop %v1303
    %v1305 = vmul.f32 %v1303, %v1304
    %v1306 = vsub.f32 1.0, %v1305
    %v1307 = vmul.f32 %v1304, %v1306
    %v1308 = vadd.f32 %v1304, %v1307
    %vm1309 = vweird.f32 %v1303
    %vm1310 = vweird.f32 %v1304
    %vm1311 = vmor %vm1309, %vm1310
    %v1312 = vsel %vm1311, %v1304, %v1308
    %v1313 = vand.u32 2147483647, %v1303
    %vm1314 = vcmp.eq.f32.partialorder %v1313, 8.507059e+37
    %v1315 = vand.u32 %v1303, 2147483648
    %v1316 = vor.u32 1.1754944e-38, %v1315
    %v1317 = vsel %vm1314, %v1316, %v1312
    %v1318 = vmul.f32 1.0, %v1317
    %v1319 = vtanh.pop %v1299
    %v1320 = vxor.u32 %v1299, 2147483648
    %v1321 = vmul.f32 %v1320, 1.442695
    %v1322 = vpow.pop %v1321
    %v1323 = vadd.f32 %v1322, 1.0
    %v1324 = vrcp.pop %v1323
    %v1325 = vmul.f32 %v1323, %v1324
    %v1326 = vsub.f32 1.0, %v1325
    %v1327 = vmul.f32 %v1324, %v1326
    %v1328 = vadd.f32 %v1324, %v1327
    %vm1329 = vweird.f32 %v1323
    %vm1330 = vweird.f32 %v1324
    %vm1331 = vmor %vm1329, %vm1330
    %v1332 = vsel %vm1331, %v1324, %v1328
    %v1333 = vand.u32 2147483647, %v1323
    %vm1334 = vcmp.eq.f32.partialorder %v1333, 8.507059e+37
    %v1335 = vand.u32 %v1323, 2147483648
    %v1336 = vor.u32 1.1754944e-38, %v1335
    %v1337 = vsel %vm1334, %v1336, %v1332
    %v1338 = vmul.f32 1.0, %v1337
    %v1340 = vrot.slane %v1244, 6
    %v1342 = vmul.f32 %v1318, %v1340
    %v1343 = vmul.f32 %v1318, %v1319
    %1345 = vrot.lane.b32.xlu0 %v1343, 64
    %v1346 = vpop.permute.xlu0 %1345
    %v1348 = vadd.f32 %v1342, %v1346
    %v1349 = vtanh.pop %v1348
    %v1350 = vmul.f32 %v1338, %v1349
    %v1352 = vrot.slane %v1350, 2
    %1353 = vrot.lane.b32.xlu0 %v1352, 64
    %v1354 = vpop.permute.xlu0 %1353
    %v1355 = vsel %vm1153, %v1354, 0
    %1357 = vmatpush.msra.mxu0 0.0
    %1358 = vmatpush.msra.mxu0 0.0
    %1359 = vmatpush.msra.mxu0 0.0
    %1360 = vmatpush.msra.mxu0 0.0
    %1361 = vmatpush.msra.mxu0 0.0
    %1362 = vmatpush.msra.mxu0 0.0
    %1363 = vmatpush.msra.mxu0 0.0
    %1364 = vmatpush.msra.mxu0 0.0
    %1365 = vmatpush.msra.mxu0 %v1094
    %1366 = vmatpush.msra.mxu0 %v1092
    %1367 = vmatpush.msra.mxu0 %v1090
    %1368 = vmatpush.msra.mxu0 %v1088
    %1369 = vmatpush.msra.mxu0 %v1086
    %1370 = vmatpush.msra.mxu0 %v1084
    %1371 = vmatpush.msra.mxu0 %v1082
    %1372 = vmatpush.msra.mxu0 %v1080
    %1373 = vmatmul.f32.gmra.mxu0 %v1355
    %v1374 = vpop.f32.mrf.mxu0
    %v1375 = vadd.f32 0.0, %v1374
    %1376 = vdwg.mxu0
    %1377 = vmatpush.msra.mxu0 0.0
    %1378 = vmatpush.msra.mxu0 0.0
    %1379 = vmatpush.msra.mxu0 0.0
    %1380 = vmatpush.msra.mxu0 0.0
    %1381 = vmatpush.msra.mxu0 0.0
    %1382 = vmatpush.msra.mxu0 0.0
    %1383 = vmatpush.msra.mxu0 0.0
    %1384 = vmatpush.msra.mxu0 0.0
    %1385 = vmatpush.msra.mxu0 %v1095
    %1386 = vmatpush.msra.mxu0 %v1093
    %1387 = vmatpush.msra.mxu0 %v1091
    %1388 = vmatpush.msra.mxu0 %v1089
    %1389 = vmatpush.msra.mxu0 %v1087
    %1390 = vmatpush.msra.mxu0 %v1085
    %1391 = vmatpush.msra.mxu0 %v1083
    %1392 = vmatpush.msra.mxu0 %v1081
    %1393 = vmatmul.f32.gmra.mxu0 %v1355
    %v1394 = vpop.f32.mrf.mxu0
    %v1395 = vadd.f32 0.0, %v1394
    %1396 = vdwg.mxu0
    %v1399 = vrot.slane %v1375, 4
    %v1400 = vrot.slane %v1395, 4
    %v1403 = vadd.f32 %v1151, %v1399
    %v1404 = vadd.f32 %v1152, %v1400
    %v1405 = vxor.u32 %v1403, 2147483648
    %v1406 = vmul.f32 %v1405, 1.442695
    %v1407 = vpow.pop %v1406
    %v1408 = vadd.f32 %v1407, 1.0
    %v1409 = vrcp.pop %v1408
    %v1410 = vmul.f32 %v1408, %v1409
    %v1411 = vsub.f32 1.0, %v1410
    %v1412 = vmul.f32 %v1409, %v1411
    %v1413 = vadd.f32 %v1409, %v1412
    %vm1414 = vweird.f32 %v1408
    %vm1415 = vweird.f32 %v1409
    %vm1416 = vmor %vm1414, %vm1415
    %v1417 = vsel %vm1416, %v1409, %v1413
    %v1418 = vand.u32 2147483647, %v1408
    %vm1419 = vcmp.eq.f32.partialorder %v1418, 8.507059e+37
    %v1420 = vand.u32 %v1408, 2147483648
    %v1421 = vor.u32 1.1754944e-38, %v1420
    %v1422 = vsel %vm1419, %v1421, %v1417
    %v1423 = vmul.f32 1.0, %v1422
    %v1424 = vtanh.pop %v1404
    %v1425 = vxor.u32 %v1404, 2147483648
    %v1426 = vmul.f32 %v1425, 1.442695
    %v1427 = vpow.pop %v1426
    %v1428 = vadd.f32 %v1427, 1.0
    %v1429 = vrcp.pop %v1428
    %v1430 = vmul.f32 %v1428, %v1429
    %v1431 = vsub.f32 1.0, %v1430
    %v1432 = vmul.f32 %v1429, %v1431
    %v1433 = vadd.f32 %v1429, %v1432
    %vm1434 = vweird.f32 %v1428
    %vm1435 = vweird.f32 %v1429
    %vm1436 = vmor %vm1434, %vm1435
    %v1437 = vsel %vm1436, %v1429, %v1433
    %v1438 = vand.u32 2147483647, %v1428
    %vm1439 = vcmp.eq.f32.partialorder %v1438, 8.507059e+37
    %v1440 = vand.u32 %v1428, 2147483648
    %v1441 = vor.u32 1.1754944e-38, %v1440
    %v1442 = vsel %vm1439, %v1441, %v1437
    %v1443 = vmul.f32 1.0, %v1442
    %v1445 = vrot.slane %v1348, 6
    %v1447 = vmul.f32 %v1423, %v1445
    %v1448 = vmul.f32 %v1423, %v1424
    %1450 = vrot.lane.b32.xlu0 %v1448, 64
    %v1451 = vpop.permute.xlu0 %1450
    %v1453 = vadd.f32 %v1447, %v1451
    %v1454 = vtanh.pop %v1453
    %v1455 = vmul.f32 %v1443, %v1454
    %v1458 = vrot.slane %v1455, 4
    %1459 = vrot.lane.b32.xlu0 %v1458, 64
    %v1460 = vpop.permute.xlu0 %1459
    %v1462 = vsel %vm1075, %v1249, %v1460
    %v1463 = vsel %vm1075, %v1460, %v1249
    %1464 = vrot.lane.b32.xlu0 %v1350, 64
    %v1465 = vpop.permute.xlu0 %1464
    %v1468 = vrot.slane %v1463, 4
    %v1470 = vsel %vm1039, %v1462, %v1465
    %v1471 = vsel %vm1042, %v1470, %v1468
    %v1472 = vld [vmem:[%s16] sm:$0xff]
    %v1473 = vld [vmem:[%s16 + $0x8] sm:$0xff]
    %v1474 = vld [vmem:[%s16 + $0x10] sm:$0xff]
    %v1475 = vld [vmem:[%s16 + $0x18] sm:$0xff]
    %v1476 = vld [vmem:[%s16 + $0x20] sm:$0xff]
    %v1477 = vld [vmem:[%s16 + $0x28] sm:$0xff]
    %v1478 = vld [vmem:[%s16 + $0x30] sm:$0xff]
    %v1479 = vld [vmem:[%s16 + $0x38] sm:$0xff]
    %v1480 = vld [vmem:[%s16 + $0x40] sm:$0xff]
    %v1481 = vld [vmem:[%s16 + $0x48] sm:$0xff]
    %v1482 = vld [vmem:[%s16 + $0x50] sm:$0xff]
    %v1483 = vld [vmem:[%s16 + $0x58] sm:$0xff]
    %v1484 = vld [vmem:[%s16 + $0x60] sm:$0xff]
    %v1485 = vld [vmem:[%s16 + $0x68] sm:$0xff]
    %v1486 = vld [vmem:[%s16 + $0x70] sm:$0xff]
    %v1487 = vld [vmem:[%s16 + $0x78] sm:$0xff]
    %v1488 = vld [vmem:[#allocation19] sm:$0xff]
    %v1489 = vld [vmem:[#allocation19 + $0x8] sm:$0xff]
    %v1490 = vld [vmem:[#allocation19 + $0x10] sm:$0xff]
    %v1491 = vld [vmem:[#allocation19 + $0x18] sm:$0xff]
    %v1492 = vld [vmem:[#allocation19 + $0x20] sm:$0xff]
    %v1493 = vld [vmem:[#allocation19 + $0x28] sm:$0xff]
    %v1494 = vld [vmem:[#allocation19 + $0x30] sm:$0xff]
    %v1495 = vld [vmem:[#allocation19 + $0x38] sm:$0xff]
    %v1496 = vld [vmem:[#allocation19 + $0x40] sm:$0xff]
    %v1497 = vld [vmem:[#allocation19 + $0x48] sm:$0xff]
    %v1498 = vld [vmem:[#allocation19 + $0x50] sm:$0xff]
    %v1499 = vld [vmem:[#allocation19 + $0x58] sm:$0xff]
    %v1500 = vld [vmem:[#allocation19 + $0x60] sm:$0xff]
    %v1501 = vld [vmem:[#allocation19 + $0x68] sm:$0xff]
    %v1502 = vld [vmem:[#allocation19 + $0x70] sm:$0xff]
    %v1503 = vld [vmem:[#allocation19 + $0x78] sm:$0xff]
    %v1504 = vld [vmem:[#allocation20] sm:$0x3]
    %v1506 = vperm.slane %v1504, 0
    %v1507 = vperm.slane %v1504, 1
    %v1511 = vsel %vm1153, %v1471, 0
    %1513 = vmatpush.msra.mxu0 0.0
    %1514 = vmatpush.msra.mxu0 0.0
    %1515 = vmatpush.msra.mxu0 0.0
    %1516 = vmatpush.msra.mxu0 0.0
    %1517 = vmatpush.msra.mxu0 0.0
    %1518 = vmatpush.msra.mxu0 0.0
    %1519 = vmatpush.msra.mxu0 0.0
    %1520 = vmatpush.msra.mxu0 0.0
    %1521 = vmatpush.msra.mxu0 %v1486
    %1522 = vmatpush.msra.mxu0 %v1484
    %1523 = vmatpush.msra.mxu0 %v1482
    %1524 = vmatpush.msra.mxu0 %v1480
    %1525 = vmatpush.msra.mxu0 %v1478
    %1526 = vmatpush.msra.mxu0 %v1476
    %1527 = vmatpush.msra.mxu0 %v1474
    %1528 = vmatpush.msra.mxu0 %v1472
    %1529 = vmatmul.f32.gmra.mxu0 %v1511
    %v1530 = vpop.f32.mrf.mxu0
    %v1531 = vadd.f32 %v1506, %v1530
    %1532 = vdwg.mxu0
    %1533 = vmatpush.msra.mxu0 0.0
    %1534 = vmatpush.msra.mxu0 0.0
    %1535 = vmatpush.msra.mxu0 0.0
    %1536 = vmatpush.msra.mxu0 0.0
    %1537 = vmatpush.msra.mxu0 0.0
    %1538 = vmatpush.msra.mxu0 0.0
    %1539 = vmatpush.msra.mxu0 0.0
    %1540 = vmatpush.msra.mxu0 0.0
    %1541 = vmatpush.msra.mxu0 %v1487
    %1542 = vmatpush.msra.mxu0 %v1485
    %1543 = vmatpush.msra.mxu0 %v1483
    %1544 = vmatpush.msra.mxu0 %v1481
    %1545 = vmatpush.msra.mxu0 %v1479
    %1546 = vmatpush.msra.mxu0 %v1477
    %1547 = vmatpush.msra.mxu0 %v1475
    %1548 = vmatpush.msra.mxu0 %v1473
    %1549 = vmatmul.f32.gmra.mxu0 %v1511
    %v1550 = vpop.f32.mrf.mxu0
    %v1551 = vadd.f32 %v1507, %v1550
    %1552 = vdwg.mxu0
    %v1555 = vrot.slane %v1531, 4
    %v1556 = vrot.slane %v1551, 4
    %v1559 = vsel %vm1073, %v1531, %v1555
    %v1560 = vsel %vm1074, %v1551, %v1556
    %1561 = vmatpush.msra.mxu0 0.0
    %1562 = vmatpush.msra.mxu0 0.0
    %1563 = vmatpush.msra.mxu0 0.0
    %1564 = vmatpush.msra.mxu0 0.0
    %1565 = vmatpush.msra.mxu0 0.0
    %1566 = vmatpush.msra.mxu0 0.0
    %1567 = vmatpush.msra.mxu0 0.0
    %1568 = vmatpush.msra.mxu0 0.0
    %1569 = vmatpush.msra.mxu0 %v1502
    %1570 = vmatpush.msra.mxu0 %v1500
    %1571 = vmatpush.msra.mxu0 %v1498
    %1572 = vmatpush.msra.mxu0 %v1496
    %1573 = vmatpush.msra.mxu0 %v1494
    %1574 = vmatpush.msra.mxu0 %v1492
    %1575 = vmatpush.msra.mxu0 %v1490
    %1576 = vmatpush.msra.mxu0 %v1488
    %1577 = vmatmul.f32.gmra.mxu0 %v1155
    %v1578 = vpop.f32.mrf.mxu0
    %v1579 = vadd.f32 0.0, %v1578
    %1580 = vdwg.mxu0
    %1581 = vmatpush.msra.mxu0 0.0
    %1582 = vmatpush.msra.mxu0 0.0
    %1583 = vmatpush.msra.mxu0 0.0
    %1584 = vmatpush.msra.mxu0 0.0
    %1585 = vmatpush.msra.mxu0 0.0
    %1586 = vmatpush.msra.mxu0 0.0
    %1587 = vmatpush.msra.mxu0 0.0
    %1588 = vmatpush.msra.mxu0 0.0
    %1589 = vmatpush.msra.mxu0 %v1503
    %1590 = vmatpush.msra.mxu0 %v1501
    %1591 = vmatpush.msra.mxu0 %v1499
    %1592 = vmatpush.msra.mxu0 %v1497
    %1593 = vmatpush.msra.mxu0 %v1495
    %1594 = vmatpush.msra.mxu0 %v1493
    %1595 = vmatpush.msra.mxu0 %v1491
    %1596 = vmatpush.msra.mxu0 %v1489
    %1597 = vmatmul.f32.gmra.mxu0 %v1155
    %v1598 = vpop.f32.mrf.mxu0
    %v1599 = vadd.f32 0.0, %v1598
    %1600 = vdwg.mxu0
    %v1601 = vadd.f32 %v1559, %v1579
    %v1602 = vadd.f32 %v1560, %v1599
    %v1603 = vxor.u32 %v1601, 2147483648
    %v1604 = vmul.f32 %v1603, 1.442695
    %v1605 = vpow.pop %v1604
    %v1606 = vadd.f32 %v1605, 1.0
    %v1607 = vrcp.pop %v1606
    %v1608 = vmul.f32 %v1606, %v1607
    %v1609 = vsub.f32 1.0, %v1608
    %v1610 = vmul.f32 %v1607, %v1609
    %v1611 = vadd.f32 %v1607, %v1610
    %vm1612 = vweird.f32 %v1606
    %vm1613 = vweird.f32 %v1607
    %vm1614 = vmor %vm1612, %vm1613
    %v1615 = vsel %vm1614, %v1607, %v1611
    %v1616 = vand.u32 2147483647, %v1606
    %vm1617 = vcmp.eq.f32.partialorder %v1616, 8.507059e+37
    %v1618 = vand.u32 %v1606, 2147483648
    %v1619 = vor.u32 1.1754944e-38, %v1618
    %v1620 = vsel %vm1617, %v1619, %v1615
    %v1621 = vmul.f32 1.0, %v1620
    %v1622 = vtanh.pop %v1602
    %v1623 = vxor.u32 %v1602, 2147483648
    %v1624 = vmul.f32 %v1623, 1.442695
    %v1625 = vpow.pop %v1624
    %v1626 = vadd.f32 %v1625, 1.0
    %v1627 = vrcp.pop %v1626
    %v1628 = vmul.f32 %v1626, %v1627
    %v1629 = vsub.f32 1.0, %v1628
    %v1630 = vmul.f32 %v1627, %v1629
    %v1631 = vadd.f32 %v1627, %v1630
    %vm1632 = vweird.f32 %v1626
    %vm1633 = vweird.f32 %v1627
    %vm1634 = vmor %vm1632, %vm1633
    %v1635 = vsel %vm1634, %v1627, %v1631
    %v1636 = vand.u32 2147483647, %v1626
    %vm1637 = vcmp.eq.f32.partialorder %v1636, 8.507059e+37
    %v1638 = vand.u32 %v1626, 2147483648
    %v1639 = vor.u32 1.1754944e-38, %v1638
    %v1640 = vsel %vm1637, %v1639, %v1635
    %v1641 = vmul.f32 1.0, %v1640
    %v1642 = vmul.f32 %v1621, 0.0
    %v1643 = vmul.f32 %v1621, %v1622
    %1645 = vrot.lane.b32.xlu0 %v1643, 64
    %v1646 = vpop.permute.xlu0 %1645
    %v1648 = vadd.f32 %v1642, %v1646
    %v1649 = vtanh.pop %v1648
    %v1650 = vmul.f32 %v1641, %v1649
    %1652 = vrot.lane.b32.xlu0 %v1650, 64
    %v1653 = vpop.permute.xlu0 %1652
    %v1654 = vsel %vm1153, %v1653, 0
    %1656 = vmatpush.msra.mxu0 0.0
    %1657 = vmatpush.msra.mxu0 0.0
    %1658 = vmatpush.msra.mxu0 0.0
    %1659 = vmatpush.msra.mxu0 0.0
    %1660 = vmatpush.msra.mxu0 0.0
    %1661 = vmatpush.msra.mxu0 0.0
    %1662 = vmatpush.msra.mxu0 0.0
    %1663 = vmatpush.msra.mxu0 0.0
    %1664 = vmatpush.msra.mxu0 %v1502
    %1665 = vmatpush.msra.mxu0 %v1500
    %1666 = vmatpush.msra.mxu0 %v1498
    %1667 = vmatpush.msra.mxu0 %v1496
    %1668 = vmatpush.msra.mxu0 %v1494
    %1669 = vmatpush.msra.mxu0 %v1492
    %1670 = vmatpush.msra.mxu0 %v1490
    %1671 = vmatpush.msra.mxu0 %v1488
    %1672 = vmatmul.f32.gmra.mxu0 %v1654
    %v1673 = vpop.f32.mrf.mxu0
    %v1674 = vadd.f32 0.0, %v1673
    %1675 = vdwg.mxu0
    %1676 = vmatpush.msra.mxu0 0.0
    %1677 = vmatpush.msra.mxu0 0.0
    %1678 = vmatpush.msra.mxu0 0.0
    %1679 = vmatpush.msra.mxu0 0.0
    %1680 = vmatpush.msra.mxu0 0.0
    %1681 = vmatpush.msra.mxu0 0.0
    %1682 = vmatpush.msra.mxu0 0.0
    %1683 = vmatpush.msra.mxu0 0.0
    %1684 = vmatpush.msra.mxu0 %v1503
    %1685 = vmatpush.msra.mxu0 %v1501
    %1686 = vmatpush.msra.mxu0 %v1499
    %1687 = vmatpush.msra.mxu0 %v1497
    %1688 = vmatpush.msra.mxu0 %v1495
    %1689 = vmatpush.msra.mxu0 %v1493
    %1690 = vmatpush.msra.mxu0 %v1491
    %1691 = vmatpush.msra.mxu0 %v1489
    %1692 = vmatmul.f32.gmra.mxu0 %v1654
    %v1693 = vpop.f32.mrf.mxu0
    %v1694 = vadd.f32 0.0, %v1693
    %1695 = vdwg.mxu0
    %v1698 = vrot.slane %v1674, 6
    %v1699 = vrot.slane %v1694, 6
    %v1702 = vadd.f32 %v1531, %v1698
    %v1703 = vadd.f32 %v1551, %v1699
    %v1704 = vxor.u32 %v1702, 2147483648
    %v1705 = vmul.f32 %v1704, 1.442695
    %v1706 = vpow.pop %v1705
    %v1707 = vadd.f32 %v1706, 1.0
    %v1708 = vrcp.pop %v1707
    %v1709 = vmul.f32 %v1707, %v1708
    %v1710 = vsub.f32 1.0, %v1709
    %v1711 = vmul.f32 %v1708, %v1710
    %v1712 = vadd.f32 %v1708, %v1711
    %vm1713 = vweird.f32 %v1707
    %vm1714 = vweird.f32 %v1708
    %vm1715 = vmor %vm1713, %vm1714
    %v1716 = vsel %vm1715, %v1708, %v1712
    %v1717 = vand.u32 2147483647, %v1707
    %vm1718 = vcmp.eq.f32.partialorder %v1717, 8.507059e+37
    %v1719 = vand.u32 %v1707, 2147483648
    %v1720 = vor.u32 1.1754944e-38, %v1719
    %v1721 = vsel %vm1718, %v1720, %v1716
    %v1722 = vmul.f32 1.0, %v1721
    %v1723 = vtanh.pop %v1703
    %v1724 = vxor.u32 %v1703, 2147483648
    %v1725 = vmul.f32 %v1724, 1.442695
    %v1726 = vpow.pop %v1725
    %v1727 = vadd.f32 %v1726, 1.0
    %v1728 = vrcp.pop %v1727
    %v1729 = vmul.f32 %v1727, %v1728
    %v1730 = vsub.f32 1.0, %v1729
    %v1731 = vmul.f32 %v1728, %v1730
    %v1732 = vadd.f32 %v1728, %v1731
    %vm1733 = vweird.f32 %v1727
    %vm1734 = vweird.f32 %v1728
    %vm1735 = vmor %vm1733, %vm1734
    %v1736 = vsel %vm1735, %v1728, %v1732
    %v1737 = vand.u32 2147483647, %v1727
    %vm1738 = vcmp.eq.f32.partialorder %v1737, 8.507059e+37
    %v1739 = vand.u32 %v1727, 2147483648
    %v1740 = vor.u32 1.1754944e-38, %v1739
    %v1741 = vsel %vm1738, %v1740, %v1736
    %v1742 = vmul.f32 1.0, %v1741
    %v1744 = vrot.slane %v1648, 6
    %v1746 = vmul.f32 %v1722, %v1744
    %v1747 = vmul.f32 %v1722, %v1723
    %1749 = vrot.lane.b32.xlu0 %v1747, 64
    %v1750 = vpop.permute.xlu0 %1749
    %v1752 = vadd.f32 %v1746, %v1750
    %v1753 = vtanh.pop %v1752
    %v1754 = vmul.f32 %v1742, %v1753
    %v1756 = vrot.slane %v1754, 2
    %1757 = vrot.lane.b32.xlu0 %v1756, 64
    %v1758 = vpop.permute.xlu0 %1757
    %v1759 = vsel %vm1153, %v1758, 0
    %1761 = vmatpush.msra.mxu0 0.0
    %1762 = vmatpush.msra.mxu0 0.0
    %1763 = vmatpush.msra.mxu0 0.0
    %1764 = vmatpush.msra.mxu0 0.0
    %1765 = vmatpush.msra.mxu0 0.0
    %1766 = vmatpush.msra.mxu0 0.0
    %1767 = vmatpush.msra.mxu0 0.0
    %1768 = vmatpush.msra.mxu0 0.0
    %1769 = vmatpush.msra.mxu0 %v1502
    %1770 = vmatpush.msra.mxu0 %v1500
    %1771 = vmatpush.msra.mxu0 %v1498
    %1772 = vmatpush.msra.mxu0 %v1496
    %1773 = vmatpush.msra.mxu0 %v1494
    %1774 = vmatpush.msra.mxu0 %v1492
    %1775 = vmatpush.msra.mxu0 %v1490
    %1776 = vmatpush.msra.mxu0 %v1488
    %1777 = vmatmul.f32.gmra.mxu0 %v1759
    %v1778 = vpop.f32.mrf.mxu0
    %v1779 = vadd.f32 0.0, %v1778
    %1780 = vdwg.mxu0
    %1781 = vmatpush.msra.mxu0 0.0
    %1782 = vmatpush.msra.mxu0 0.0
    %1783 = vmatpush.msra.mxu0 0.0
    %1784 = vmatpush.msra.mxu0 0.0
    %1785 = vmatpush.msra.mxu0 0.0
    %1786 = vmatpush.msra.mxu0 0.0
    %1787 = vmatpush.msra.mxu0 0.0
    %1788 = vmatpush.msra.mxu0 0.0
    %1789 = vmatpush.msra.mxu0 %v1503
    %1790 = vmatpush.msra.mxu0 %v1501
    %1791 = vmatpush.msra.mxu0 %v1499
    %1792 = vmatpush.msra.mxu0 %v1497
    %1793 = vmatpush.msra.mxu0 %v1495
    %1794 = vmatpush.msra.mxu0 %v1493
    %1795 = vmatpush.msra.mxu0 %v1491
    %1796 = vmatpush.msra.mxu0 %v1489
    %1797 = vmatmul.f32.gmra.mxu0 %v1759
    %v1798 = vpop.f32.mrf.mxu0
    %v1799 = vadd.f32 0.0, %v1798
    %1800 = vdwg.mxu0
    %v1803 = vrot.slane %v1779, 4
    %v1804 = vrot.slane %v1799, 4
    %v1807 = vadd.f32 %v1559, %v1803
    %v1808 = vadd.f32 %v1560, %v1804
    %v1809 = vxor.u32 %v1807, 2147483648
    %v1810 = vmul.f32 %v1809, 1.442695
    %v1811 = vpow.pop %v1810
    %v1812 = vadd.f32 %v1811, 1.0
    %v1813 = vrcp.pop %v1812
    %v1814 = vmul.f32 %v1812, %v1813
    %v1815 = vsub.f32 1.0, %v1814
    %v1816 = vmul.f32 %v1813, %v1815
    %v1817 = vadd.f32 %v1813, %v1816
    %vm1818 = vweird.f32 %v1812
    %vm1819 = vweird.f32 %v1813
    %vm1820 = vmor %vm1818, %vm1819
    %v1821 = vsel %vm1820, %v1813, %v1817
    %v1822 = vand.u32 2147483647, %v1812
    %vm1823 = vcmp.eq.f32.partialorder %v1822, 8.507059e+37
    %v1824 = vand.u32 %v1812, 2147483648
    %v1825 = vor.u32 1.1754944e-38, %v1824
    %v1826 = vsel %vm1823, %v1825, %v1821
    %v1827 = vmul.f32 1.0, %v1826
    %v1828 = vtanh.pop %v1808
    %v1829 = vxor.u32 %v1808, 2147483648
    %v1830 = vmul.f32 %v1829, 1.442695
    %v1831 = vpow.pop %v1830
    %v1832 = vadd.f32 %v1831, 1.0
    %v1833 = vrcp.pop %v1832
    %v1834 = vmul.f32 %v1832, %v1833
    %v1835 = vsub.f32 1.0, %v1834
    %v1836 = vmul.f32 %v1833, %v1835
    %v1837 = vadd.f32 %v1833, %v1836
    %vm1838 = vweird.f32 %v1832
    %vm1839 = vweird.f32 %v1833
    %vm1840 = vmor %vm1838, %vm1839
    %v1841 = vsel %vm1840, %v1833, %v1837
    %v1842 = vand.u32 2147483647, %v1832
    %vm1843 = vcmp.eq.f32.partialorder %v1842, 8.507059e+37
    %v1844 = vand.u32 %v1832, 2147483648
    %v1845 = vor.u32 1.1754944e-38, %v1844
    %v1846 = vsel %vm1843, %v1845, %v1841
    %v1847 = vmul.f32 1.0, %v1846
    %v1849 = vrot.slane %v1752, 6
    %v1851 = vmul.f32 %v1827, %v1849
    %v1852 = vmul.f32 %v1827, %v1828
    %1854 = vrot.lane.b32.xlu0 %v1852, 64
    %v1855 = vpop.permute.xlu0 %1854
    %v1857 = vadd.f32 %v1851, %v1855
    %v1858 = vtanh.pop %v1857
    %v1859 = vmul.f32 %v1847, %v1858
    %v1862 = vrot.slane %v1859, 4
    %1863 = vrot.lane.b32.xlu0 %v1862, 64
    %v1864 = vpop.permute.xlu0 %1863
    %v1866 = vsel %vm1075, %v1653, %v1864
    %v1867 = vsel %vm1075, %v1864, %v1653
    %v1869 = vsel %vm1153, %v1866, %v1756
    %v1870 = vld [vmem:[%s19] sm:$0xff]
    %v1871 = vld [vmem:[%s19 + $0x8] sm:$0xff]
    %v1872 = vld [vmem:[%s19 + $0x10] sm:$0xff]
    %v1873 = vld [vmem:[%s19 + $0x18] sm:$0xff]
    %v1874 = vld [vmem:[%s19 + $0x20] sm:$0xff]
    %v1875 = vld [vmem:[%s19 + $0x28] sm:$0xff]
    %v1876 = vld [vmem:[%s19 + $0x30] sm:$0xff]
    %v1877 = vld [vmem:[%s19 + $0x38] sm:$0xff]
    %v1878 = vld [vmem:[%s19 + $0x40] sm:$0xff]
    %v1879 = vld [vmem:[%s19 + $0x48] sm:$0xff]
    %v1880 = vld [vmem:[%s19 + $0x50] sm:$0xff]
    %v1881 = vld [vmem:[%s19 + $0x58] sm:$0xff]
    %v1882 = vld [vmem:[%s19 + $0x60] sm:$0xff]
    %v1883 = vld [vmem:[%s19 + $0x68] sm:$0xff]
    %v1884 = vld [vmem:[%s19 + $0x70] sm:$0xff]
    %v1885 = vld [vmem:[%s19 + $0x78] sm:$0xff]
    %v1886 = vld [vmem:[%s19 + $0x80] sm:$0xff]
    %v1887 = vld [vmem:[%s19 + $0x88] sm:$0xff]
    %v1888 = vld [vmem:[%s19 + $0x90] sm:$0xff]
    %v1889 = vld [vmem:[%s19 + $0x98] sm:$0xff]
    %v1890 = vld [vmem:[%s19 + $0xa0] sm:$0xff]
    %v1891 = vld [vmem:[%s19 + $0xa8] sm:$0xff]
    %v1892 = vld [vmem:[%s19 + $0xb0] sm:$0xff]
    %v1893 = vld [vmem:[%s19 + $0xb8] sm:$0xff]
    %v1894 = vld [vmem:[#allocation22] sm:$0x1]
    %v1896 = vperm.slane %v1894, 0
    %v1899 = vsel %vm1153, %v1867, 0
    %1901 = vmatpush.msra.mxu0 %v1885
    %1902 = vmatpush.msra.mxu0 %v1884
    %1903 = vmatpush.msra.mxu0 %v1883
    %1904 = vmatpush.msra.mxu0 %v1882
    %1905 = vmatpush.msra.mxu0 %v1881
    %1906 = vmatpush.msra.mxu0 %v1880
    %1907 = vmatpush.msra.mxu0 %v1879
    %1908 = vmatpush.msra.mxu0 %v1878
    %1909 = vmatpush.msra.mxu0 %v1877
    %1910 = vmatpush.msra.mxu0 %v1876
    %1911 = vmatpush.msra.mxu0 %v1875
    %1912 = vmatpush.msra.mxu0 %v1874
    %1913 = vmatpush.msra.mxu0 %v1873
    %1914 = vmatpush.msra.mxu0 %v1872
    %1915 = vmatpush.msra.mxu0 %v1871
    %1916 = vmatpush.msra.mxu0 %v1870
    %1917 = vmatmul.f32.gmra.mxu0 %v1869
    %v1918 = vpop.f32.mrf.mxu0
    %v1919 = vadd.f32 %v1896, %v1918
    %1920 = vdwg.mxu0
    %1921 = vmatpush.msra.mxu0 0.0
    %1922 = vmatpush.msra.mxu0 0.0
    %1923 = vmatpush.msra.mxu0 0.0
    %1924 = vmatpush.msra.mxu0 0.0
    %1925 = vmatpush.msra.mxu0 0.0
    %1926 = vmatpush.msra.mxu0 0.0
    %1927 = vmatpush.msra.mxu0 0.0
    %1928 = vmatpush.msra.mxu0 0.0
    %1929 = vmatpush.msra.mxu0 %v1893
    %1930 = vmatpush.msra.mxu0 %v1892
    %1931 = vmatpush.msra.mxu0 %v1891
    %1932 = vmatpush.msra.mxu0 %v1890
    %1933 = vmatpush.msra.mxu0 %v1889
    %1934 = vmatpush.msra.mxu0 %v1888
    %1935 = vmatpush.msra.mxu0 %v1887
    %1936 = vmatpush.msra.mxu0 %v1886
    %1937 = vmatmul.f32.gmra.mxu0 %v1899
    %v1938 = vpop.f32.mrf.mxu0
    %v1939 = vadd.f32 %v1919, %v1938
    %1940 = vdwg.mxu0
    %v1941 = vld [vmem:[%s21] sm:$0xff]
    %v1942 = vld [vmem:[%s21 + $0x8] sm:$0xff]
    %v1943 = vld [vmem:[%s21 + $0x10] sm:$0xff]
    %v1944 = vld [vmem:[%s21 + $0x18] sm:$0xff]
    %v1945 = vld [vmem:[#allocation2] sm:$0x1]
    %v1947 = vperm.slane %v1945, 0
    %v1950 = vsel %vm971, %v1939, 0
    %1952 = vmatpush.msra.mxu0 0.0
    %1953 = vmatpush.msra.mxu0 0.0
    %1954 = vmatpush.msra.mxu0 0.0
    %1955 = vmatpush.msra.mxu0 0.0
    %1956 = vmatpush.msra.mxu0 0.0
    %1957 = vmatpush.msra.mxu0 0.0
    %1958 = vmatpush.msra.mxu0 0.0
    %1959 = vmatpush.msra.mxu0 0.0
    %1960 = vmatpush.msra.mxu0 0.0
    %1961 = vmatpush.msra.mxu0 0.0
    %1962 = vmatpush.msra.mxu0 0.0
    %1963 = vmatpush.msra.mxu0 0.0
    %1964 = vmatpush.msra.mxu0 %v1944
    %1965 = vmatpush.msra.mxu0 %v1943
    %1966 = vmatpush.msra.mxu0 %v1942
    %1967 = vmatpush.msra.mxu0 %v1941
    %1968 = vmatmul.f32.gmra.mxu0 %v1950
    %v1969 = vpop.f32.mrf.mxu0
    %v1970 = vadd.f32 %v1947, %v1969
    %1971 = vdwg.mxu0
    %vm1972 = vcmask 1024
    %1973 = vst.msk [vmem:[%s23] sm:$0x3] %vm1972, %v1970
    // Predicated region
    $region146: #{transformer_bilstm_forward.1} parent=1 // pred_check
      _
    $region147: #{transformer_bilstm_forward.1} parent=1 // pred_check_branch
      %1975 = sbr.rel (0) target = $region149
    $region148: #{transformer_bilstm_forward.1} parent=1 // pred_region
      _
    $region149: #{transformer_bilstm_forward.1} parent=1 // pred_fallthru
      _
    // Predicated region
    $region150: #{transformer_bilstm_forward.1} parent=1 // pred_check
      _
    $region151: #{transformer_bilstm_forward.1} parent=1 // pred_check_branch
      %1977 = sbr.rel (0) target = $region153
    $region152: #{transformer_bilstm_forward.1} parent=1 // pred_region
      _
    $region153: #{transformer_bilstm_forward.1} parent=1 // pred_fallthru
      _
    %1978 = vsyncpa [#allocation4], 1
    %1979 = vsyncpa [#allocation6], 1
    %1980 = vsyncpa [#allocation9], 1
    %1981 = vsyncpa [#allocation12], 1
    %1982 = vsyncpa [#allocation15], 1
    %1983 = vsyncpa [#allocation18], 1
    %1984 = vsyncpa [#allocation21], 1

</llo_original>
